<compile_context>
chip_gen: v6e
topology: v6e:2x2x1
jax: 0.10.0
libtpu: 0.0.40
codegen_flags: <defaults>
</compile_context>

<pallas_src>
import math
import functools

import jax
import jax.numpy as jnp
from jax.experimental import pallas as pl
from jax.experimental.pallas import tpu as pltpu

# ----------------------------- configuration --------------------------------
D = 16          # feature dimension (CD markers)
H = 32          # hidden width of shift/scale MLPs
L = 4           # num_coupling_layers
N = 1024        # batch size
LOG_2PI = math.log(2.0 * math.pi)


# ------------------------------ Pallas kernel -------------------------------
def density_kernel(x_ref, w1_ref, b1_ref, w2_ref, b2_ref, nll_ref,
                   *, feat_dim, num_layers):
    """Per-sample negative log-likelihood of a Real NVP flow (batch on lanes).

    x_ref:   (TB, D)          natural-layout input tile (transposed in-kernel)
    w1_ref:  (L, 2H, D/2)     fused [shift;scale] first-layer weights (flip folded in)
    b1_ref:  (L, 2H, 1)       fused first-layer biases
    w2_ref:  (L, D, 2H)       block-diagonal fused second-layer weights (flip folded in)
    b2_ref:  (L, D, 1)        fused second-layer biases
    nll_ref: (1, TB)          output: -(base_log_prob(z) + log_det_jac), lane-dense
    """
    d2 = feat_dim // 2

    # (TB, D) -> (D, TB): features on sublanes, batch on all 128 lanes. XLU transpose
    # inside the kernel removes the wrapper-side x.T HLO op + extra HBM round trip.
    xt = x_ref[...].astype(jnp.float32).T
    a = xt[:d2, :]                             # first half  (d2, TB), sublane-aligned slice
    b = xt[d2:, :]                             # second half (d2, TB)

    # Deferred log-det: accumulate s across layers, reduce once at the end.
    s_acc = jnp.zeros_like(a)

    for i in range(num_layers):                # static unrolled layer loop
        # fused shift+scale MLP: one first matmul (native MXU orientation: LHS K=d2 on
        # lanes, RHS K=d2 on sublanes), shared tanh, one block-diag second matmul.
        h = jnp.tanh(
            jnp.dot(w1_ref[i], a, preferred_element_type=jnp.float32) + b1_ref[i])
        ts = jnp.dot(w2_ref[i], h, preferred_element_type=jnp.float32) + b2_ref[i]
        t = ts[:d2, :]                          # shift output (sublane-aligned slice)
        s = ts[d2:, :]                          # scale output

        # forward coupling: z2 = (x2 - t) * exp(-s)
        z2 = (b - t) * jnp.exp(-s)
        s_acc = s_acc + s

        # flip(z) is folded into the weights; halves simply swap roles
        a, b = z2, a

    # NLL = 0.5 * sum(z^2) + 0.5 * D * log(2*pi) + sum_layers sum(s)
    # -> fold base log-prob and log-det into a single sublane (XLU) reduce.
    r = 0.5 * (a * a + b * b) + s_acc
    nll_ref[...] = jnp.sum(r, axis=0, keepdims=True) + 0.5 * feat_dim * LOG_2PI


# --------------------- parameter preprocessing (wrapper) ---------------------
def prepare_fused_params(shift_params, scale_params):
    """Fold the per-layer feature reversal into the weights and fuse shift/scale nets.

    shift/scale params: (L, D/2, H), (L, 1, H), (L, H, D/2), (L, 1, D/2)
    Returns transposed, fused, flip-folded params:
      w1: (L, 2H, D/2)   b1: (L, 2H, 1)   w2: (L, D, 2H)   b2: (L, D, 1)
    """
    shW1, shb1, shW2, shb2 = shift_params
    scW1, scb1, scW2, scb2 = scale_params
    num_layers, d2, hidden = shW1.shape
    zeros = jnp.zeros((d2, hidden), jnp.float32)

    w1_l, b1_l, w2_l, b2_l = [], [], [], []
    for i in range(num_layers):
        sW1, sb1, sW2, sb2 = shW1[i], shb1[i, 0], shW2[i], shb2[i, 0]
        cW1, cb1, cW2, cb2 = scW1[i], scb1[i, 0], scW2[i], scb2[i, 0]
        if i % 2 == 1:
            # odd layers see a reversed first half (input perm) and must emit t,s in
            # the reversed order of the stored second half (output perm).
            sW1 = sW1[::-1, :]; cW1 = cW1[::-1, :]
            sW2 = sW2[:, ::-1]; cW2 = cW2[:, ::-1]
            sb2 = sb2[::-1];    cb2 = cb2[::-1]
        w1_l.append(jnp.concatenate([sW1.T, cW1.T], axis=0))            # (2H, d2)
        b1_l.append(jnp.concatenate([sb1, cb1], axis=0)[:, None])       # (2H, 1)
        w2_l.append(jnp.block([[sW2.T, zeros], [zeros, cW2.T]]))        # (2*d2, 2H)
        b2_l.append(jnp.concatenate([sb2, cb2], axis=0)[:, None])       # (2*d2, 1)

    return (jnp.stack(w1_l).astype(jnp.float32),
            jnp.stack(b1_l).astype(jnp.float32),
            jnp.stack(w2_l).astype(jnp.float32),
            jnp.stack(b2_l).astype(jnp.float32))


# --------------------------- tile-size selection -----------------------------
def _pick_batch_tile(n, device_kind=""):
    """Generation-aware batch tile. v7x has 2 TensorCores: keep grid >= 2 (TB<=512);
    single-TC v5e/v6e: maximize TB (up to 1024) to amortize per-grid-step overhead."""
    kind = (device_kind or "").lower()
    cap = 512 if "v7" in kind else 1024
    tb, cand = 128, 128
    while cand <= min(cap, n):
        if n % cand == 0:
            tb = cand
        cand *= 2
    return tb


# ------------------------------ wrapper --------------------------------------
def density_estimation_nll(x, shift_params, scale_params, *, tb=None):
    """Returns per-sample NLL of shape (N,). (Equivalent of log_probability_outputs.)"""
    n, d = x.shape
    num_layers = shift_params[0].shape[0]
    assert n % 128 == 0, "batch must be a multiple of 128 (lane width)"

    if tb is None:
        try:
            kind = jax.devices()[0].device_kind
        except Exception:  # pragma: no cover
            kind = ""
        tb = _pick_batch_tile(n, kind)
    assert n % tb == 0 and tb % 128 == 0, "batch must tile into 128-multiple lane tiles"

    w1, b1, w2, b2 = prepare_fused_params(shift_params, scale_params)
    x = x.astype(jnp.float32)                   # natural (N, D) layout; transposed in-kernel

    def full_spec(arr):
        nd = arr.ndim
        return pl.BlockSpec(arr.shape, lambda i, _nd=nd: (0,) * _nd)

    kernel = functools.partial(density_kernel, feat_dim=d, num_layers=num_layers)

    out = pl.pallas_call(
        kernel,
        out_shape=jax.ShapeDtypeStruct((1, n), jnp.float32),
        grid=(n // tb,),
        in_specs=[
            pl.BlockSpec((tb, d), lambda i: (i, 0)),      # x: tiled over batch (sublanes in HBM)
            full_spec(w1), full_spec(b1), full_spec(w2), full_spec(b2),
        ],
        out_specs=pl.BlockSpec((1, tb), lambda i: (0, i)),  # lane-dense NLL
        compiler_params=pltpu.CompilerParams(dimension_semantics=("parallel",)),
    )(x, w1, b1, w2, b2)
    return out[0]                                # (N,)


def density_estimation_forward(x, shift_params, scale_params, loss="avg"):
    # Final mean/sum is a single tiny XLA reduce over (N,); kept outside the kernel so the
    # per-sample NLL (log_probability_outputs) stays available from the same pallas_call.
    nll = density_estimation_nll(x, shift_params, scale_params)
    if loss == "sum":
        return nll.sum()
    return nll.mean()


# --------------------------- pure-JAX reference ------------------------------
def reference_nll(x, shift_params, scale_params):
    shW1, shb1, shW2, shb2 = shift_params
    scW1, scb1, scW2, scb2 = scale_params
    num_layers = shW1.shape[0]
    d = x.shape[1]
    d2 = d // 2
    z = x
    log_det = jnp.zeros(x.shape[0], jnp.float32)

    def mlp(h, W1, b1, W2, b2):
        return jnp.tanh(h @ W1 + b1) @ W2 + b2

    for i in range(num_layers):
        x1, x2 = z[:, :d2], z[:, d2:]
        t = mlp(x1, shW1[i], shb1[i, 0], shW2[i], shb2[i, 0])
        s = mlp(x1, scW1[i], scb1[i, 0], scW2[i], scb2[i, 0])
        z2 = (x2 - t) * jnp.exp(-s)
        z = jnp.concatenate([x1, z2], axis=1)
        z = jnp.flip(z, axis=1)
        log_det = log_det - s.sum(axis=1)
    base_lp = -0.5 * jnp.sum(z * z, axis=1) - 0.5 * d * LOG_2PI
    return -(base_lp + log_det)


# --------------------------------- main ---------------------------------------
if __name__ == "__main__":
    key = jax.random.PRNGKey(0)
    keys = jax.random.split(key, 9)
    d2 = D // 2

    def init(k, shape, scale=0.1):
        return (scale * jax.random.normal(k, shape)).astype(jnp.float32)

    # stacked parameters over L coupling layers (deterministic init)
    shift_params = (
        init(keys[0], (L, d2, H)),
        init(keys[1], (L, 1, H)),
        init(keys[2], (L, H, d2)),
        init(keys[3], (L, 1, d2)),
    )
    scale_params = (
        init(keys[4], (L, d2, H)),
        init(keys[5], (L, 1, H)),
        init(keys[6], (L, H, d2)),
        init(keys[7], (L, 1, d2)),
    )

    x = jax.random.normal(keys[8], (N, D), dtype=jnp.float32)

    nll_kernel = jax.block_until_ready(
        density_estimation_nll(x, shift_params, scale_params))
    loss_avg = jax.block_until_ready(
        density_estimation_forward(x, shift_params, scale_params, loss="avg"))
    loss_sum = jax.block_until_ready(
        density_estimation_forward(x, shift_params, scale_params, loss="sum"))

    nll_ref = reference_nll(x, shift_params, scale_params)
    assert jnp.allclose(nll_kernel, nll_ref, atol=1e-4, rtol=1e-4), (nll_kernel, nll_ref)
    assert jnp.allclose(loss_avg, nll_ref.mean(), atol=1e-4, rtol=1e-4)
    assert jnp.allclose(loss_sum, nll_ref.sum(), atol=1e-2, rtol=1e-4)

    print("KERNEL_OK")
</pallas_src>

<mosaic_0001>
module attributes {stable_mosaic.version = 11 : i64} {
  func.func @density_kernel(%arg0: i32, %arg1: memref<1024x16xf32, #tpu.memory_space<vmem>>, %arg2: memref<4x64x8xf32, #tpu.memory_space<vmem>>, %arg3: memref<4x64x1xf32, #tpu.memory_space<vmem>>, %arg4: memref<4x16x64xf32, #tpu.memory_space<vmem>>, %arg5: memref<4x16x1xf32, #tpu.memory_space<vmem>>, %arg6: memref<1x1024xf32, #tpu.memory_space<vmem>>) attributes {dimension_semantics = [#tpu.dimension_semantics<parallel>], iteration_bounds = array<i64: 1>, scalar_prefetch = 0 : i64, scratch_operands = 0 : i64, tpu.core_type = #tpu.core_type<tc>, window_params = [{transform_indices = @transform_0, window_bounds = array<i64: 1024, 16>}, {pipeline_mode = #tpu.pipeline_mode<synchronous>, transform_indices = @transform_1, window_bounds = array<i64: 4, 64, 8>}, {pipeline_mode = #tpu.pipeline_mode<synchronous>, transform_indices = @transform_2, window_bounds = array<i64: 4, 64, 1>}, {pipeline_mode = #tpu.pipeline_mode<synchronous>, transform_indices = @transform_3, window_bounds = array<i64: 4, 16, 64>}, {pipeline_mode = #tpu.pipeline_mode<synchronous>, transform_indices = @transform_4, window_bounds = array<i64: 4, 16, 1>}, {transform_indices = @transform_5, window_bounds = array<i64: 1, 1024>}]} {
    %c0 = arith.constant 0 : index
    %c0_0 = arith.constant 0 : index
    %0 = vector.load %arg1[%c0, %c0_0] : memref<1024x16xf32, #tpu.memory_space<vmem>>, vector<1024x16xf32>
    %1 = tpu.transpose %0, [1, 0] : vector<1024x16xf32> -> vector<16x1024xf32>
    %2 = vector.extract_strided_slice %1 {offsets = [0, 0], sizes = [8, 1024], strides = [1, 1]} : vector<16x1024xf32> to vector<8x1024xf32>
    %3 = vector.extract_strided_slice %1 {offsets = [8, 0], sizes = [8, 1024], strides = [1, 1]} : vector<16x1024xf32> to vector<8x1024xf32>
    %cst = arith.constant 0.000000e+00 : f32
    %4 = vector.broadcast %cst : f32 to vector<8x1024xf32>
    %c0_1 = arith.constant 0 : index
    %c0_2 = arith.constant 0 : index
    %c0_3 = arith.constant 0 : index
    %5 = vector.load %arg2[%c0_1, %c0_2, %c0_3] : memref<4x64x8xf32, #tpu.memory_space<vmem>>, vector<1x64x8xf32>
    %6 = vector.shape_cast %5 : vector<1x64x8xf32> to vector<64x8xf32>
    %cst_4 = arith.constant dense<0.000000e+00> : vector<64x1024xf32>
    %7 = tpu.matmul %6, %2, %cst_4 {dimension_numbers = #tpu.dot_dimension_numbers<[1], [0], [0], [1], [0, 0, 1, 1], [], []>} : vector<64x8xf32>, vector<8x1024xf32>, vector<64x1024xf32> -> vector<64x1024xf32>
    %c0_5 = arith.constant 0 : index
    %c0_6 = arith.constant 0 : index
    %c0_7 = arith.constant 0 : index
    %8 = vector.load %arg3[%c0_5, %c0_6, %c0_7] : memref<4x64x1xf32, #tpu.memory_space<vmem>>, vector<1x64x1xf32>
    %9 = vector.shape_cast %8 : vector<1x64x1xf32> to vector<64x1xf32>
    %10 = vector.broadcast %9 : vector<64x1xf32> to vector<64x1024xf32>
    %11 = arith.addf %7, %10 : vector<64x1024xf32>
    %12 = math.tanh %11 : vector<64x1024xf32>
    %c0_8 = arith.constant 0 : index
    %c0_9 = arith.constant 0 : index
    %c0_10 = arith.constant 0 : index
    %13 = vector.load %arg4[%c0_8, %c0_9, %c0_10] : memref<4x16x64xf32, #tpu.memory_space<vmem>>, vector<1x16x64xf32>
    %14 = vector.shape_cast %13 : vector<1x16x64xf32> to vector<16x64xf32>
    %cst_11 = arith.constant dense<0.000000e+00> : vector<16x1024xf32>
    %15 = tpu.matmul %14, %12, %cst_11 {dimension_numbers = #tpu.dot_dimension_numbers<[1], [0], [0], [1], [0, 0, 1, 1], [], []>} : vector<16x64xf32>, vector<64x1024xf32>, vector<16x1024xf32> -> vector<16x1024xf32>
    %c0_12 = arith.constant 0 : index
    %c0_13 = arith.constant 0 : index
    %c0_14 = arith.constant 0 : index
    %16 = vector.load %arg5[%c0_12, %c0_13, %c0_14] : memref<4x16x1xf32, #tpu.memory_space<vmem>>, vector<1x16x1xf32>
    %17 = vector.shape_cast %16 : vector<1x16x1xf32> to vector<16x1xf32>
    %18 = vector.broadcast %17 : vector<16x1xf32> to vector<16x1024xf32>
    %19 = arith.addf %15, %18 : vector<16x1024xf32>
    %20 = vector.extract_strided_slice %19 {offsets = [0, 0], sizes = [8, 1024], strides = [1, 1]} : vector<16x1024xf32> to vector<8x1024xf32>
    %21 = vector.extract_strided_slice %19 {offsets = [8, 0], sizes = [8, 1024], strides = [1, 1]} : vector<16x1024xf32> to vector<8x1024xf32>
    %22 = arith.subf %3, %20 : vector<8x1024xf32>
    %cst_15 = arith.constant 0.000000e+00 : f32
    %23 = vector.broadcast %cst_15 : f32 to vector<8x1024xf32>
    %24 = arith.subf %23, %21 : vector<8x1024xf32>
    %25 = math.exp %24 : vector<8x1024xf32>
    %26 = arith.mulf %22, %25 : vector<8x1024xf32>
    %27 = arith.addf %4, %21 : vector<8x1024xf32>
    %c1 = arith.constant 1 : index
    %c0_16 = arith.constant 0 : index
    %c0_17 = arith.constant 0 : index
    %28 = vector.load %arg2[%c1, %c0_16, %c0_17] : memref<4x64x8xf32, #tpu.memory_space<vmem>>, vector<1x64x8xf32>
    %29 = vector.shape_cast %28 : vector<1x64x8xf32> to vector<64x8xf32>
    %cst_18 = arith.constant dense<0.000000e+00> : vector<64x1024xf32>
    %30 = tpu.matmul %29, %26, %cst_18 {dimension_numbers = #tpu.dot_dimension_numbers<[1], [0], [0], [1], [0, 0, 1, 1], [], []>} : vector<64x8xf32>, vector<8x1024xf32>, vector<64x1024xf32> -> vector<64x1024xf32>
    %c1_19 = arith.constant 1 : index
    %c0_20 = arith.constant 0 : index
    %c0_21 = arith.constant 0 : index
    %31 = vector.load %arg3[%c1_19, %c0_20, %c0_21] : memref<4x64x1xf32, #tpu.memory_space<vmem>>, vector<1x64x1xf32>
    %32 = vector.shape_cast %31 : vector<1x64x1xf32> to vector<64x1xf32>
    %33 = vector.broadcast %32 : vector<64x1xf32> to vector<64x1024xf32>
    %34 = arith.addf %30, %33 : vector<64x1024xf32>
    %35 = math.tanh %34 : vector<64x1024xf32>
    %c1_22 = arith.constant 1 : index
    %c0_23 = arith.constant 0 : index
    %c0_24 = arith.constant 0 : index
    %36 = vector.load %arg4[%c1_22, %c0_23, %c0_24] : memref<4x16x64xf32, #tpu.memory_space<vmem>>, vector<1x16x64xf32>
    %37 = vector.shape_cast %36 : vector<1x16x64xf32> to vector<16x64xf32>
    %cst_25 = arith.constant dense<0.000000e+00> : vector<16x1024xf32>
    %38 = tpu.matmul %37, %35, %cst_25 {dimension_numbers = #tpu.dot_dimension_numbers<[1], [0], [0], [1], [0, 0, 1, 1], [], []>} : vector<16x64xf32>, vector<64x1024xf32>, vector<16x1024xf32> -> vector<16x1024xf32>
    %c1_26 = arith.constant 1 : index
    %c0_27 = arith.constant 0 : index
    %c0_28 = arith.constant 0 : index
    %39 = vector.load %arg5[%c1_26, %c0_27, %c0_28] : memref<4x16x1xf32, #tpu.memory_space<vmem>>, vector<1x16x1xf32>
    %40 = vector.shape_cast %39 : vector<1x16x1xf32> to vector<16x1xf32>
    %41 = vector.broadcast %40 : vector<16x1xf32> to vector<16x1024xf32>
    %42 = arith.addf %38, %41 : vector<16x1024xf32>
    %43 = vector.extract_strided_slice %42 {offsets = [0, 0], sizes = [8, 1024], strides = [1, 1]} : vector<16x1024xf32> to vector<8x1024xf32>
    %44 = vector.extract_strided_slice %42 {offsets = [8, 0], sizes = [8, 1024], strides = [1, 1]} : vector<16x1024xf32> to vector<8x1024xf32>
    %45 = arith.subf %2, %43 : vector<8x1024xf32>
    %cst_29 = arith.constant 0.000000e+00 : f32
    %46 = vector.broadcast %cst_29 : f32 to vector<8x1024xf32>
    %47 = arith.subf %46, %44 : vector<8x1024xf32>
    %48 = math.exp %47 : vector<8x1024xf32>
    %49 = arith.mulf %45, %48 : vector<8x1024xf32>
    %50 = arith.addf %27, %44 : vector<8x1024xf32>
    %c2 = arith.constant 2 : index
    %c0_30 = arith.constant 0 : index
    %c0_31 = arith.constant 0 : index
    %51 = vector.load %arg2[%c2, %c0_30, %c0_31] : memref<4x64x8xf32, #tpu.memory_space<vmem>>, vector<1x64x8xf32>
    %52 = vector.shape_cast %51 : vector<1x64x8xf32> to vector<64x8xf32>
    %cst_32 = arith.constant dense<0.000000e+00> : vector<64x1024xf32>
    %53 = tpu.matmul %52, %49, %cst_32 {dimension_numbers = #tpu.dot_dimension_numbers<[1], [0], [0], [1], [0, 0, 1, 1], [], []>} : vector<64x8xf32>, vector<8x1024xf32>, vector<64x1024xf32> -> vector<64x1024xf32>
    %c2_33 = arith.constant 2 : index
    %c0_34 = arith.constant 0 : index
    %c0_35 = arith.constant 0 : index
    %54 = vector.load %arg3[%c2_33, %c0_34, %c0_35] : memref<4x64x1xf32, #tpu.memory_space<vmem>>, vector<1x64x1xf32>
    %55 = vector.shape_cast %54 : vector<1x64x1xf32> to vector<64x1xf32>
    %56 = vector.broadcast %55 : vector<64x1xf32> to vector<64x1024xf32>
    %57 = arith.addf %53, %56 : vector<64x1024xf32>
    %58 = math.tanh %57 : vector<64x1024xf32>
    %c2_36 = arith.constant 2 : index
    %c0_37 = arith.constant 0 : index
    %c0_38 = arith.constant 0 : index
    %59 = vector.load %arg4[%c2_36, %c0_37, %c0_38] : memref<4x16x64xf32, #tpu.memory_space<vmem>>, vector<1x16x64xf32>
    %60 = vector.shape_cast %59 : vector<1x16x64xf32> to vector<16x64xf32>
    %cst_39 = arith.constant dense<0.000000e+00> : vector<16x1024xf32>
    %61 = tpu.matmul %60, %58, %cst_39 {dimension_numbers = #tpu.dot_dimension_numbers<[1], [0], [0], [1], [0, 0, 1, 1], [], []>} : vector<16x64xf32>, vector<64x1024xf32>, vector<16x1024xf32> -> vector<16x1024xf32>
    %c2_40 = arith.constant 2 : index
    %c0_41 = arith.constant 0 : index
    %c0_42 = arith.constant 0 : index
    %62 = vector.load %arg5[%c2_40, %c0_41, %c0_42] : memref<4x16x1xf32, #tpu.memory_space<vmem>>, vector<1x16x1xf32>
    %63 = vector.shape_cast %62 : vector<1x16x1xf32> to vector<16x1xf32>
    %64 = vector.broadcast %63 : vector<16x1xf32> to vector<16x1024xf32>
    %65 = arith.addf %61, %64 : vector<16x1024xf32>
    %66 = vector.extract_strided_slice %65 {offsets = [0, 0], sizes = [8, 1024], strides = [1, 1]} : vector<16x1024xf32> to vector<8x1024xf32>
    %67 = vector.extract_strided_slice %65 {offsets = [8, 0], sizes = [8, 1024], strides = [1, 1]} : vector<16x1024xf32> to vector<8x1024xf32>
    %68 = arith.subf %26, %66 : vector<8x1024xf32>
    %cst_43 = arith.constant 0.000000e+00 : f32
    %69 = vector.broadcast %cst_43 : f32 to vector<8x1024xf32>
    %70 = arith.subf %69, %67 : vector<8x1024xf32>
    %71 = math.exp %70 : vector<8x1024xf32>
    %72 = arith.mulf %68, %71 : vector<8x1024xf32>
    %73 = arith.addf %50, %67 : vector<8x1024xf32>
    %c3 = arith.constant 3 : index
    %c0_44 = arith.constant 0 : index
    %c0_45 = arith.constant 0 : index
    %74 = vector.load %arg2[%c3, %c0_44, %c0_45] : memref<4x64x8xf32, #tpu.memory_space<vmem>>, vector<1x64x8xf32>
    %75 = vector.shape_cast %74 : vector<1x64x8xf32> to vector<64x8xf32>
    %cst_46 = arith.constant dense<0.000000e+00> : vector<64x1024xf32>
    %76 = tpu.matmul %75, %72, %cst_46 {dimension_numbers = #tpu.dot_dimension_numbers<[1], [0], [0], [1], [0, 0, 1, 1], [], []>} : vector<64x8xf32>, vector<8x1024xf32>, vector<64x1024xf32> -> vector<64x1024xf32>
    %c3_47 = arith.constant 3 : index
    %c0_48 = arith.constant 0 : index
    %c0_49 = arith.constant 0 : index
    %77 = vector.load %arg3[%c3_47, %c0_48, %c0_49] : memref<4x64x1xf32, #tpu.memory_space<vmem>>, vector<1x64x1xf32>
    %78 = vector.shape_cast %77 : vector<1x64x1xf32> to vector<64x1xf32>
    %79 = vector.broadcast %78 : vector<64x1xf32> to vector<64x1024xf32>
    %80 = arith.addf %76, %79 : vector<64x1024xf32>
    %81 = math.tanh %80 : vector<64x1024xf32>
    %c3_50 = arith.constant 3 : index
    %c0_51 = arith.constant 0 : index
    %c0_52 = arith.constant 0 : index
    %82 = vector.load %arg4[%c3_50, %c0_51, %c0_52] : memref<4x16x64xf32, #tpu.memory_space<vmem>>, vector<1x16x64xf32>
    %83 = vector.shape_cast %82 : vector<1x16x64xf32> to vector<16x64xf32>
    %cst_53 = arith.constant dense<0.000000e+00> : vector<16x1024xf32>
    %84 = tpu.matmul %83, %81, %cst_53 {dimension_numbers = #tpu.dot_dimension_numbers<[1], [0], [0], [1], [0, 0, 1, 1], [], []>} : vector<16x64xf32>, vector<64x1024xf32>, vector<16x1024xf32> -> vector<16x1024xf32>
    %c3_54 = arith.constant 3 : index
    %c0_55 = arith.constant 0 : index
    %c0_56 = arith.constant 0 : index
    %85 = vector.load %arg5[%c3_54, %c0_55, %c0_56] : memref<4x16x1xf32, #tpu.memory_space<vmem>>, vector<1x16x1xf32>
    %86 = vector.shape_cast %85 : vector<1x16x1xf32> to vector<16x1xf32>
    %87 = vector.broadcast %86 : vector<16x1xf32> to vector<16x1024xf32>
    %88 = arith.addf %84, %87 : vector<16x1024xf32>
    %89 = vector.extract_strided_slice %88 {offsets = [0, 0], sizes = [8, 1024], strides = [1, 1]} : vector<16x1024xf32> to vector<8x1024xf32>
    %90 = vector.extract_strided_slice %88 {offsets = [8, 0], sizes = [8, 1024], strides = [1, 1]} : vector<16x1024xf32> to vector<8x1024xf32>
    %91 = arith.subf %49, %89 : vector<8x1024xf32>
    %cst_57 = arith.constant 0.000000e+00 : f32
    %92 = vector.broadcast %cst_57 : f32 to vector<8x1024xf32>
    %93 = arith.subf %92, %90 : vector<8x1024xf32>
    %94 = math.exp %93 : vector<8x1024xf32>
    %95 = arith.mulf %91, %94 : vector<8x1024xf32>
    %96 = arith.addf %73, %90 : vector<8x1024xf32>
    %97 = arith.mulf %95, %95 : vector<8x1024xf32>
    %98 = arith.mulf %72, %72 : vector<8x1024xf32>
    %99 = arith.addf %97, %98 : vector<8x1024xf32>
    %cst_58 = arith.constant 5.000000e-01 : f32
    %100 = vector.broadcast %cst_58 : f32 to vector<8x1024xf32>
    %101 = arith.mulf %100, %99 : vector<8x1024xf32>
    %102 = arith.addf %101, %96 : vector<8x1024xf32>
    %cst_59 = arith.constant dense<0.000000e+00> : vector<1024xf32>
    %103 = vector.multi_reduction <add>, %102, %cst_59 [0] : vector<8x1024xf32> to vector<1024xf32>
    %104 = vector.shape_cast %103 : vector<1024xf32> to vector<1x1024xf32>
    %cst_60 = arith.constant 14.7030163 : f32
    %105 = vector.broadcast %cst_60 : f32 to vector<1x1024xf32>
    %106 = arith.addf %104, %105 : vector<1x1024xf32>
    %c0_61 = arith.constant 0 : index
    %c0_62 = arith.constant 0 : index
    %107 = vector.load %arg6[%c0_61, %c0_62] : memref<1x1024xf32, #tpu.memory_space<vmem>>, vector<1x1024xf32>
    tpu.vector_store %arg6[%c0_61, %c0_62], %106 {strides = array<i32>} : memref<1x1024xf32, #tpu.memory_space<vmem>>, vector<1x1024xf32>,
    return
  }
  func.func @transform_0(%arg0: i32) -> (i32, i32) {
    %c0_i32 = arith.constant 0 : i32
    %c0_i32_0 = arith.constant 0 : i32
    return %arg0, %c0_i32 : i32, i32
  }
  func.func @transform_1(%arg0: i32) -> (i32, i32, i32) {
    %c0_i32 = arith.constant 0 : i32
    %c0_i32_0 = arith.constant 0 : i32
    %c0_i32_1 = arith.constant 0 : i32
    %c0_i32_2 = arith.constant 0 : i32
    return %c0_i32, %c0_i32_0, %c0_i32_1 : i32, i32, i32
  }
  func.func @transform_2(%arg0: i32) -> (i32, i32, i32) {
    %c0_i32 = arith.constant 0 : i32
    %c0_i32_0 = arith.constant 0 : i32
    %c0_i32_1 = arith.constant 0 : i32
    %c0_i32_2 = arith.constant 0 : i32
    return %c0_i32, %c0_i32_0, %c0_i32_1 : i32, i32, i32
  }
  func.func @transform_3(%arg0: i32) -> (i32, i32, i32) {
    %c0_i32 = arith.constant 0 : i32
    %c0_i32_0 = arith.constant 0 : i32
    %c0_i32_1 = arith.constant 0 : i32
    %c0_i32_2 = arith.constant 0 : i32
    return %c0_i32, %c0_i32_0, %c0_i32_1 : i32, i32, i32
  }
  func.func @transform_4(%arg0: i32) -> (i32, i32, i32) {
    %c0_i32 = arith.constant 0 : i32
    %c0_i32_0 = arith.constant 0 : i32
    %c0_i32_1 = arith.constant 0 : i32
    %c0_i32_2 = arith.constant 0 : i32
    return %c0_i32, %c0_i32_0, %c0_i32_1 : i32, i32, i32
  }
  func.func @transform_5(%arg0: i32) -> (i32, i32) {
    %c0_i32 = arith.constant 0 : i32
    %c0_i32_0 = arith.constant 0 : i32
    return %c0_i32, %arg0 : i32, i32
  }
}

</mosaic_0001>

<llo_original>
// kernel: tpu_custom_call.1
$region0: #{tpu_custom_call.1}
  #allocation0 [shape = 'u32[]', space=smem, size = 0x4, offset = 0x4, fixed_abs, tag = 'smem constant byte address 0x4 - core index']
  #allocation1 [shape = 'u32[144,128]{1,0:T(1,128)}', space=vmem, size = 0x12000, scoped, tag = 'internal scratch']
  %s0 = inlined_call_operand.vmem [shape: f32[1024,16], index: 0, kind: input, shape index: {}]
  %s1 = inlined_call_operand.vmem [shape: f32[4,64,8], index: 1, kind: input, shape index: {}]
  %s2 = inlined_call_operand.vmem [shape: f32[4,64,1], index: 2, kind: input, shape index: {}]
  %s3 = inlined_call_operand.vmem [shape: f32[4,16,64], index: 3, kind: input, shape index: {}]
  %s4 = inlined_call_operand.vmem [shape: f32[4,16,1], index: 4, kind: input, shape index: {}]
  %s5 = inlined_call_operand.hbm [shape: f32[1,1024], index: 5, kind: output, shape index: {}]
  %s6 = sld [smem:[#allocation0]]
  $region30: #{tpu_custom_call.1} parent=0
    _
  %s8 = ssub.s32 1, %s6
  %s9 = scalar_select 0, %s8, %s6
  $region1: #{tpu_custom_call.1} parent=0
    #allocation2 [shape = 'u8[4096]{0}', space=vmem, size = 0x1000, scoped, tag = 'output window, operand 0, single buffered']
    #allocation3 [shape = 's32[1]{0}', space=sflag, size = 0x4, scoped, tag = 'scoped memory for tpu_custom_call.1']
    %10 = vsyncpa [#allocation3], 0
    // Predicated region
    $region2: #{tpu_custom_call.1} parent=1 // pred_check
      _
    $region3: #{tpu_custom_call.1} parent=1 // pred_check_branch
      %12 = sbr.rel (0) target = $region5
    $region4: #{tpu_custom_call.1} parent=1 // pred_region
      _
    $region5: #{tpu_custom_call.1} parent=1 // pred_fallthru
      _
    // Predicated region
    $region6: #{tpu_custom_call.1} parent=1 // pred_check
      _
    $region7: #{tpu_custom_call.1} parent=1 // pred_check_branch
      %14 = sbr.rel (0) target = $region9
    $region8: #{tpu_custom_call.1} parent=1 // pred_region
      _
    $region9: #{tpu_custom_call.1} parent=1 // pred_fallthru
      _
    // Predicated region
    $region10: #{tpu_custom_call.1} parent=1 // pred_check
      _
    $region11: #{tpu_custom_call.1} parent=1 // pred_check_branch
      %16 = sbr.rel (0) target = $region13
    $region12: #{tpu_custom_call.1} parent=1 // pred_region
      _
    $region13: #{tpu_custom_call.1} parent=1 // pred_fallthru
      _
    // Predicated region
    $region14: #{tpu_custom_call.1} parent=1 // pred_check
      _
    $region15: #{tpu_custom_call.1} parent=1 // pred_check_branch
      %18 = sbr.rel (0) target = $region17
    $region16: #{tpu_custom_call.1} parent=1 // pred_region
      _
    $region17: #{tpu_custom_call.1} parent=1 // pred_fallthru
      _
    // Predicated region
    $region18: #{tpu_custom_call.1} parent=1 // pred_check
      _
    $region19: #{tpu_custom_call.1} parent=1 // pred_check_branch
      %20 = sbr.rel (0) target = $region21
    $region20: #{tpu_custom_call.1} parent=1 // pred_region
      _
    $region21: #{tpu_custom_call.1} parent=1 // pred_fallthru
      _
    %v21 = vld [vmem:[%s0] sm:$0xff]
    %v22 = vld [vmem:[%s0 + $0x8] sm:$0xff]
    %v23 = vld [vmem:[%s0 + $0x10] sm:$0xff]
    %v24 = vld [vmem:[%s0 + $0x18] sm:$0xff]
    %v25 = vld [vmem:[%s0 + $0x20] sm:$0xff]
    %v26 = vld [vmem:[%s0 + $0x28] sm:$0xff]
    %v27 = vld [vmem:[%s0 + $0x30] sm:$0xff]
    %v28 = vld [vmem:[%s0 + $0x38] sm:$0xff]
    %v29 = vld [vmem:[%s0 + $0x40] sm:$0xff]
    %v30 = vld [vmem:[%s0 + $0x48] sm:$0xff]
    %v31 = vld [vmem:[%s0 + $0x50] sm:$0xff]
    %v32 = vld [vmem:[%s0 + $0x58] sm:$0xff]
    %v33 = vld [vmem:[%s0 + $0x60] sm:$0xff]
    %v34 = vld [vmem:[%s0 + $0x68] sm:$0xff]
    %v35 = vld [vmem:[%s0 + $0x70] sm:$0xff]
    %v36 = vld [vmem:[%s0 + $0x78] sm:$0xff]
    %v37 = vld [vmem:[%s0 + $0x80] sm:$0xff]
    %v38 = vld [vmem:[%s0 + $0x88] sm:$0xff]
    %v39 = vld [vmem:[%s0 + $0x90] sm:$0xff]
    %v40 = vld [vmem:[%s0 + $0x98] sm:$0xff]
    %v41 = vld [vmem:[%s0 + $0xa0] sm:$0xff]
    %v42 = vld [vmem:[%s0 + $0xa8] sm:$0xff]
    %v43 = vld [vmem:[%s0 + $0xb0] sm:$0xff]
    %v44 = vld [vmem:[%s0 + $0xb8] sm:$0xff]
    %v45 = vld [vmem:[%s0 + $0xc0] sm:$0xff]
    %v46 = vld [vmem:[%s0 + $0xc8] sm:$0xff]
    %v47 = vld [vmem:[%s0 + $0xd0] sm:$0xff]
    %v48 = vld [vmem:[%s0 + $0xd8] sm:$0xff]
    %v49 = vld [vmem:[%s0 + $0xe0] sm:$0xff]
    %v50 = vld [vmem:[%s0 + $0xe8] sm:$0xff]
    %v51 = vld [vmem:[%s0 + $0xf0] sm:$0xff]
    %v52 = vld [vmem:[%s0 + $0xf8] sm:$0xff]
    %v53 = vld [vmem:[%s0 + $0x100] sm:$0xff]
    %v54 = vld [vmem:[%s0 + $0x108] sm:$0xff]
    %v55 = vld [vmem:[%s0 + $0x110] sm:$0xff]
    %v56 = vld [vmem:[%s0 + $0x118] sm:$0xff]
    %v57 = vld [vmem:[%s0 + $0x120] sm:$0xff]
    %v58 = vld [vmem:[%s0 + $0x128] sm:$0xff]
    %v59 = vld [vmem:[%s0 + $0x130] sm:$0xff]
    %v60 = vld [vmem:[%s0 + $0x138] sm:$0xff]
    %v61 = vld [vmem:[%s0 + $0x140] sm:$0xff]
    %v62 = vld [vmem:[%s0 + $0x148] sm:$0xff]
    %v63 = vld [vmem:[%s0 + $0x150] sm:$0xff]
    %v64 = vld [vmem:[%s0 + $0x158] sm:$0xff]
    %v65 = vld [vmem:[%s0 + $0x160] sm:$0xff]
    %v66 = vld [vmem:[%s0 + $0x168] sm:$0xff]
    %v67 = vld [vmem:[%s0 + $0x170] sm:$0xff]
    %v68 = vld [vmem:[%s0 + $0x178] sm:$0xff]
    %v69 = vld [vmem:[%s0 + $0x180] sm:$0xff]
    %v70 = vld [vmem:[%s0 + $0x188] sm:$0xff]
    %v71 = vld [vmem:[%s0 + $0x190] sm:$0xff]
    %v72 = vld [vmem:[%s0 + $0x198] sm:$0xff]
    %v73 = vld [vmem:[%s0 + $0x1a0] sm:$0xff]
    %v74 = vld [vmem:[%s0 + $0x1a8] sm:$0xff]
    %v75 = vld [vmem:[%s0 + $0x1b0] sm:$0xff]
    %v76 = vld [vmem:[%s0 + $0x1b8] sm:$0xff]
    %v77 = vld [vmem:[%s0 + $0x1c0] sm:$0xff]
    %v78 = vld [vmem:[%s0 + $0x1c8] sm:$0xff]
    %v79 = vld [vmem:[%s0 + $0x1d0] sm:$0xff]
    %v80 = vld [vmem:[%s0 + $0x1d8] sm:$0xff]
    %v81 = vld [vmem:[%s0 + $0x1e0] sm:$0xff]
    %v82 = vld [vmem:[%s0 + $0x1e8] sm:$0xff]
    %v83 = vld [vmem:[%s0 + $0x1f0] sm:$0xff]
    %v84 = vld [vmem:[%s0 + $0x1f8] sm:$0xff]
    %v85 = vld [vmem:[%s0 + $0x200] sm:$0xff]
    %v86 = vld [vmem:[%s0 + $0x208] sm:$0xff]
    %v87 = vld [vmem:[%s0 + $0x210] sm:$0xff]
    %v88 = vld [vmem:[%s0 + $0x218] sm:$0xff]
    %v89 = vld [vmem:[%s0 + $0x220] sm:$0xff]
    %v90 = vld [vmem:[%s0 + $0x228] sm:$0xff]
    %v91 = vld [vmem:[%s0 + $0x230] sm:$0xff]
    %v92 = vld [vmem:[%s0 + $0x238] sm:$0xff]
    %v93 = vld [vmem:[%s0 + $0x240] sm:$0xff]
    %v94 = vld [vmem:[%s0 + $0x248] sm:$0xff]
    %v95 = vld [vmem:[%s0 + $0x250] sm:$0xff]
    %v96 = vld [vmem:[%s0 + $0x258] sm:$0xff]
    %v97 = vld [vmem:[%s0 + $0x260] sm:$0xff]
    %v98 = vld [vmem:[%s0 + $0x268] sm:$0xff]
    %v99 = vld [vmem:[%s0 + $0x270] sm:$0xff]
    %v100 = vld [vmem:[%s0 + $0x278] sm:$0xff]
    %v101 = vld [vmem:[%s0 + $0x280] sm:$0xff]
    %v102 = vld [vmem:[%s0 + $0x288] sm:$0xff]
    %v103 = vld [vmem:[%s0 + $0x290] sm:$0xff]
    %v104 = vld [vmem:[%s0 + $0x298] sm:$0xff]
    %v105 = vld [vmem:[%s0 + $0x2a0] sm:$0xff]
    %v106 = vld [vmem:[%s0 + $0x2a8] sm:$0xff]
    %v107 = vld [vmem:[%s0 + $0x2b0] sm:$0xff]
    %v108 = vld [vmem:[%s0 + $0x2b8] sm:$0xff]
    %v109 = vld [vmem:[%s0 + $0x2c0] sm:$0xff]
    %v110 = vld [vmem:[%s0 + $0x2c8] sm:$0xff]
    %v111 = vld [vmem:[%s0 + $0x2d0] sm:$0xff]
    %v112 = vld [vmem:[%s0 + $0x2d8] sm:$0xff]
    %v113 = vld [vmem:[%s0 + $0x2e0] sm:$0xff]
    %v114 = vld [vmem:[%s0 + $0x2e8] sm:$0xff]
    %v115 = vld [vmem:[%s0 + $0x2f0] sm:$0xff]
    %v116 = vld [vmem:[%s0 + $0x2f8] sm:$0xff]
    %v117 = vld [vmem:[%s0 + $0x300] sm:$0xff]
    %v118 = vld [vmem:[%s0 + $0x308] sm:$0xff]
    %v119 = vld [vmem:[%s0 + $0x310] sm:$0xff]
    %v120 = vld [vmem:[%s0 + $0x318] sm:$0xff]
    %v121 = vld [vmem:[%s0 + $0x320] sm:$0xff]
    %v122 = vld [vmem:[%s0 + $0x328] sm:$0xff]
    %v123 = vld [vmem:[%s0 + $0x330] sm:$0xff]
    %v124 = vld [vmem:[%s0 + $0x338] sm:$0xff]
    %v125 = vld [vmem:[%s0 + $0x340] sm:$0xff]
    %v126 = vld [vmem:[%s0 + $0x348] sm:$0xff]
    %v127 = vld [vmem:[%s0 + $0x350] sm:$0xff]
    %v128 = vld [vmem:[%s0 + $0x358] sm:$0xff]
    %v129 = vld [vmem:[%s0 + $0x360] sm:$0xff]
    %v130 = vld [vmem:[%s0 + $0x368] sm:$0xff]
    %v131 = vld [vmem:[%s0 + $0x370] sm:$0xff]
    %v132 = vld [vmem:[%s0 + $0x378] sm:$0xff]
    %v133 = vld [vmem:[%s0 + $0x380] sm:$0xff]
    %v134 = vld [vmem:[%s0 + $0x388] sm:$0xff]
    %v135 = vld [vmem:[%s0 + $0x390] sm:$0xff]
    %v136 = vld [vmem:[%s0 + $0x398] sm:$0xff]
    %v137 = vld [vmem:[%s0 + $0x3a0] sm:$0xff]
    %v138 = vld [vmem:[%s0 + $0x3a8] sm:$0xff]
    %v139 = vld [vmem:[%s0 + $0x3b0] sm:$0xff]
    %v140 = vld [vmem:[%s0 + $0x3b8] sm:$0xff]
    %v141 = vld [vmem:[%s0 + $0x3c0] sm:$0xff]
    %v142 = vld [vmem:[%s0 + $0x3c8] sm:$0xff]
    %v143 = vld [vmem:[%s0 + $0x3d0] sm:$0xff]
    %v144 = vld [vmem:[%s0 + $0x3d8] sm:$0xff]
    %v145 = vld [vmem:[%s0 + $0x3e0] sm:$0xff]
    %v146 = vld [vmem:[%s0 + $0x3e8] sm:$0xff]
    %v147 = vld [vmem:[%s0 + $0x3f0] sm:$0xff]
    %v148 = vld [vmem:[%s0 + $0x3f8] sm:$0xff]
    %149 = vxpose.xlu0.b32.start [1/16] %v21, 128
    %150 = vxpose.xlu0.b32.cont [2/16] %v22, 128
    %151 = vxpose.xlu0.b32.cont [3/16] %v23, 128
    %152 = vxpose.xlu0.b32.cont [4/16] %v24, 128
    %153 = vxpose.xlu0.b32.cont [5/16] %v25, 128
    %154 = vxpose.xlu0.b32.cont [6/16] %v26, 128
    %155 = vxpose.xlu0.b32.cont [7/16] %v27, 128
    %156 = vxpose.xlu0.b32.cont [8/16] %v28, 128
    %157 = vxpose.xlu0.b32.cont [9/16] %v29, 128
    %158 = vxpose.xlu0.b32.cont [10/16] %v30, 128
    %159 = vxpose.xlu0.b32.cont [11/16] %v31, 128
    %160 = vxpose.xlu0.b32.cont [12/16] %v32, 128
    %161 = vxpose.xlu0.b32.cont [13/16] %v33, 128
    %162 = vxpose.xlu0.b32.cont [14/16] %v34, 128
    %163 = vxpose.xlu0.b32.cont [15/16] %v35, 128
    %164 = vxpose.xlu0.b32.end [16/16] %v36, 128
    %v165 = vpop.trf.xlu0
    %v166 = vpop.trf.xlu0
    %v167 = vpop.trf.xlu0
    %v168 = vpop.trf.xlu0
    %v169 = vpop.trf.xlu0
    %v170 = vpop.trf.xlu0
    %v171 = vpop.trf.xlu0
    %v172 = vpop.trf.xlu0
    %v173 = vpop.trf.xlu0
    %v174 = vpop.trf.xlu0
    %v175 = vpop.trf.xlu0
    %v176 = vpop.trf.xlu0
    %v177 = vpop.trf.xlu0
    %v178 = vpop.trf.xlu0
    %v179 = vpop.trf.xlu0
    %v180 = vpop.trf.xlu0
    %181 = vxpose.xlu0.b32.start [1/16] %v37, 128
    %182 = vxpose.xlu0.b32.cont [2/16] %v38, 128
    %183 = vxpose.xlu0.b32.cont [3/16] %v39, 128
    %184 = vxpose.xlu0.b32.cont [4/16] %v40, 128
    %185 = vxpose.xlu0.b32.cont [5/16] %v41, 128
    %186 = vxpose.xlu0.b32.cont [6/16] %v42, 128
    %187 = vxpose.xlu0.b32.cont [7/16] %v43, 128
    %188 = vxpose.xlu0.b32.cont [8/16] %v44, 128
    %189 = vxpose.xlu0.b32.cont [9/16] %v45, 128
    %190 = vxpose.xlu0.b32.cont [10/16] %v46, 128
    %191 = vxpose.xlu0.b32.cont [11/16] %v47, 128
    %192 = vxpose.xlu0.b32.cont [12/16] %v48, 128
    %193 = vxpose.xlu0.b32.cont [13/16] %v49, 128
    %194 = vxpose.xlu0.b32.cont [14/16] %v50, 128
    %195 = vxpose.xlu0.b32.cont [15/16] %v51, 128
    %196 = vxpose.xlu0.b32.end [16/16] %v52, 128
    %v197 = vpop.trf.xlu0
    %v198 = vpop.trf.xlu0
    %v199 = vpop.trf.xlu0
    %v200 = vpop.trf.xlu0
    %v201 = vpop.trf.xlu0
    %v202 = vpop.trf.xlu0
    %v203 = vpop.trf.xlu0
    %v204 = vpop.trf.xlu0
    %v205 = vpop.trf.xlu0
    %v206 = vpop.trf.xlu0
    %v207 = vpop.trf.xlu0
    %v208 = vpop.trf.xlu0
    %v209 = vpop.trf.xlu0
    %v210 = vpop.trf.xlu0
    %v211 = vpop.trf.xlu0
    %v212 = vpop.trf.xlu0
    %213 = vxpose.xlu0.b32.start [1/16] %v53, 128
    %214 = vxpose.xlu0.b32.cont [2/16] %v54, 128
    %215 = vxpose.xlu0.b32.cont [3/16] %v55, 128
    %216 = vxpose.xlu0.b32.cont [4/16] %v56, 128
    %217 = vxpose.xlu0.b32.cont [5/16] %v57, 128
    %218 = vxpose.xlu0.b32.cont [6/16] %v58, 128
    %219 = vxpose.xlu0.b32.cont [7/16] %v59, 128
    %220 = vxpose.xlu0.b32.cont [8/16] %v60, 128
    %221 = vxpose.xlu0.b32.cont [9/16] %v61, 128
    %222 = vxpose.xlu0.b32.cont [10/16] %v62, 128
    %223 = vxpose.xlu0.b32.cont [11/16] %v63, 128
    %224 = vxpose.xlu0.b32.cont [12/16] %v64, 128
    %225 = vxpose.xlu0.b32.cont [13/16] %v65, 128
    %226 = vxpose.xlu0.b32.cont [14/16] %v66, 128
    %227 = vxpose.xlu0.b32.cont [15/16] %v67, 128
    %228 = vxpose.xlu0.b32.end [16/16] %v68, 128
    %v229 = vpop.trf.xlu0
    %v230 = vpop.trf.xlu0
    %v231 = vpop.trf.xlu0
    %v232 = vpop.trf.xlu0
    %v233 = vpop.trf.xlu0
    %v234 = vpop.trf.xlu0
    %v235 = vpop.trf.xlu0
    %v236 = vpop.trf.xlu0
    %v237 = vpop.trf.xlu0
    %v238 = vpop.trf.xlu0
    %v239 = vpop.trf.xlu0
    %v240 = vpop.trf.xlu0
    %v241 = vpop.trf.xlu0
    %v242 = vpop.trf.xlu0
    %v243 = vpop.trf.xlu0
    %v244 = vpop.trf.xlu0
    %245 = vxpose.xlu0.b32.start [1/16] %v69, 128
    %246 = vxpose.xlu0.b32.cont [2/16] %v70, 128
    %247 = vxpose.xlu0.b32.cont [3/16] %v71, 128
    %248 = vxpose.xlu0.b32.cont [4/16] %v72, 128
    %249 = vxpose.xlu0.b32.cont [5/16] %v73, 128
    %250 = vxpose.xlu0.b32.cont [6/16] %v74, 128
    %251 = vxpose.xlu0.b32.cont [7/16] %v75, 128
    %252 = vxpose.xlu0.b32.cont [8/16] %v76, 128
    %253 = vxpose.xlu0.b32.cont [9/16] %v77, 128
    %254 = vxpose.xlu0.b32.cont [10/16] %v78, 128
    %255 = vxpose.xlu0.b32.cont [11/16] %v79, 128
    %256 = vxpose.xlu0.b32.cont [12/16] %v80, 128
    %257 = vxpose.xlu0.b32.cont [13/16] %v81, 128
    %258 = vxpose.xlu0.b32.cont [14/16] %v82, 128
    %259 = vxpose.xlu0.b32.cont [15/16] %v83, 128
    %260 = vxpose.xlu0.b32.end [16/16] %v84, 128
    %v261 = vpop.trf.xlu0
    %v262 = vpop.trf.xlu0
    %v263 = vpop.trf.xlu0
    %v264 = vpop.trf.xlu0
    %v265 = vpop.trf.xlu0
    %v266 = vpop.trf.xlu0
    %v267 = vpop.trf.xlu0
    %v268 = vpop.trf.xlu0
    %v269 = vpop.trf.xlu0
    %v270 = vpop.trf.xlu0
    %v271 = vpop.trf.xlu0
    %v272 = vpop.trf.xlu0
    %v273 = vpop.trf.xlu0
    %v274 = vpop.trf.xlu0
    %v275 = vpop.trf.xlu0
    %v276 = vpop.trf.xlu0
    %277 = vxpose.xlu0.b32.start [1/16] %v85, 128
    %278 = vxpose.xlu0.b32.cont [2/16] %v86, 128
    %279 = vxpose.xlu0.b32.cont [3/16] %v87, 128
    %280 = vxpose.xlu0.b32.cont [4/16] %v88, 128
    %281 = vxpose.xlu0.b32.cont [5/16] %v89, 128
    %282 = vxpose.xlu0.b32.cont [6/16] %v90, 128
    %283 = vxpose.xlu0.b32.cont [7/16] %v91, 128
    %284 = vxpose.xlu0.b32.cont [8/16] %v92, 128
    %285 = vxpose.xlu0.b32.cont [9/16] %v93, 128
    %286 = vxpose.xlu0.b32.cont [10/16] %v94, 128
    %287 = vxpose.xlu0.b32.cont [11/16] %v95, 128
    %288 = vxpose.xlu0.b32.cont [12/16] %v96, 128
    %289 = vxpose.xlu0.b32.cont [13/16] %v97, 128
    %290 = vxpose.xlu0.b32.cont [14/16] %v98, 128
    %291 = vxpose.xlu0.b32.cont [15/16] %v99, 128
    %292 = vxpose.xlu0.b32.end [16/16] %v100, 128
    %v293 = vpop.trf.xlu0
    %v294 = vpop.trf.xlu0
    %v295 = vpop.trf.xlu0
    %v296 = vpop.trf.xlu0
    %v297 = vpop.trf.xlu0
    %v298 = vpop.trf.xlu0
    %v299 = vpop.trf.xlu0
    %v300 = vpop.trf.xlu0
    %v301 = vpop.trf.xlu0
    %v302 = vpop.trf.xlu0
    %v303 = vpop.trf.xlu0
    %v304 = vpop.trf.xlu0
    %v305 = vpop.trf.xlu0
    %v306 = vpop.trf.xlu0
    %v307 = vpop.trf.xlu0
    %v308 = vpop.trf.xlu0
    %309 = vxpose.xlu0.b32.start [1/16] %v101, 128
    %310 = vxpose.xlu0.b32.cont [2/16] %v102, 128
    %311 = vxpose.xlu0.b32.cont [3/16] %v103, 128
    %312 = vxpose.xlu0.b32.cont [4/16] %v104, 128
    %313 = vxpose.xlu0.b32.cont [5/16] %v105, 128
    %314 = vxpose.xlu0.b32.cont [6/16] %v106, 128
    %315 = vxpose.xlu0.b32.cont [7/16] %v107, 128
    %316 = vxpose.xlu0.b32.cont [8/16] %v108, 128
    %317 = vxpose.xlu0.b32.cont [9/16] %v109, 128
    %318 = vxpose.xlu0.b32.cont [10/16] %v110, 128
    %319 = vxpose.xlu0.b32.cont [11/16] %v111, 128
    %320 = vxpose.xlu0.b32.cont [12/16] %v112, 128
    %321 = vxpose.xlu0.b32.cont [13/16] %v113, 128
    %322 = vxpose.xlu0.b32.cont [14/16] %v114, 128
    %323 = vxpose.xlu0.b32.cont [15/16] %v115, 128
    %324 = vxpose.xlu0.b32.end [16/16] %v116, 128
    %v325 = vpop.trf.xlu0
    %v326 = vpop.trf.xlu0
    %v327 = vpop.trf.xlu0
    %v328 = vpop.trf.xlu0
    %v329 = vpop.trf.xlu0
    %v330 = vpop.trf.xlu0
    %v331 = vpop.trf.xlu0
    %v332 = vpop.trf.xlu0
    %v333 = vpop.trf.xlu0
    %v334 = vpop.trf.xlu0
    %v335 = vpop.trf.xlu0
    %v336 = vpop.trf.xlu0
    %v337 = vpop.trf.xlu0
    %v338 = vpop.trf.xlu0
    %v339 = vpop.trf.xlu0
    %v340 = vpop.trf.xlu0
    %341 = vxpose.xlu0.b32.start [1/16] %v117, 128
    %342 = vxpose.xlu0.b32.cont [2/16] %v118, 128
    %343 = vxpose.xlu0.b32.cont [3/16] %v119, 128
    %344 = vxpose.xlu0.b32.cont [4/16] %v120, 128
    %345 = vxpose.xlu0.b32.cont [5/16] %v121, 128
    %346 = vxpose.xlu0.b32.cont [6/16] %v122, 128
    %347 = vxpose.xlu0.b32.cont [7/16] %v123, 128
    %348 = vxpose.xlu0.b32.cont [8/16] %v124, 128
    %349 = vxpose.xlu0.b32.cont [9/16] %v125, 128
    %350 = vxpose.xlu0.b32.cont [10/16] %v126, 128
    %351 = vxpose.xlu0.b32.cont [11/16] %v127, 128
    %352 = vxpose.xlu0.b32.cont [12/16] %v128, 128
    %353 = vxpose.xlu0.b32.cont [13/16] %v129, 128
    %354 = vxpose.xlu0.b32.cont [14/16] %v130, 128
    %355 = vxpose.xlu0.b32.cont [15/16] %v131, 128
    %356 = vxpose.xlu0.b32.end [16/16] %v132, 128
    %v357 = vpop.trf.xlu0
    %v358 = vpop.trf.xlu0
    %v359 = vpop.trf.xlu0
    %v360 = vpop.trf.xlu0
    %v361 = vpop.trf.xlu0
    %v362 = vpop.trf.xlu0
    %v363 = vpop.trf.xlu0
    %v364 = vpop.trf.xlu0
    %v365 = vpop.trf.xlu0
    %v366 = vpop.trf.xlu0
    %v367 = vpop.trf.xlu0
    %v368 = vpop.trf.xlu0
    %v369 = vpop.trf.xlu0
    %v370 = vpop.trf.xlu0
    %v371 = vpop.trf.xlu0
    %v372 = vpop.trf.xlu0
    %373 = vxpose.xlu0.b32.start [1/16] %v133, 128
    %374 = vxpose.xlu0.b32.cont [2/16] %v134, 128
    %375 = vxpose.xlu0.b32.cont [3/16] %v135, 128
    %376 = vxpose.xlu0.b32.cont [4/16] %v136, 128
    %377 = vxpose.xlu0.b32.cont [5/16] %v137, 128
    %378 = vxpose.xlu0.b32.cont [6/16] %v138, 128
    %379 = vxpose.xlu0.b32.cont [7/16] %v139, 128
    %380 = vxpose.xlu0.b32.cont [8/16] %v140, 128
    %381 = vxpose.xlu0.b32.cont [9/16] %v141, 128
    %382 = vxpose.xlu0.b32.cont [10/16] %v142, 128
    %383 = vxpose.xlu0.b32.cont [11/16] %v143, 128
    %384 = vxpose.xlu0.b32.cont [12/16] %v144, 128
    %385 = vxpose.xlu0.b32.cont [13/16] %v145, 128
    %386 = vxpose.xlu0.b32.cont [14/16] %v146, 128
    %387 = vxpose.xlu0.b32.cont [15/16] %v147, 128
    %388 = vxpose.xlu0.b32.end [16/16] %v148, 128
    %v389 = vpop.trf.xlu0
    %v390 = vpop.trf.xlu0
    %v391 = vpop.trf.xlu0
    %v392 = vpop.trf.xlu0
    %v393 = vpop.trf.xlu0
    %v394 = vpop.trf.xlu0
    %v395 = vpop.trf.xlu0
    %v396 = vpop.trf.xlu0
    %v397 = vpop.trf.xlu0
    %v398 = vpop.trf.xlu0
    %v399 = vpop.trf.xlu0
    %v400 = vpop.trf.xlu0
    %v401 = vpop.trf.xlu0
    %v402 = vpop.trf.xlu0
    %v403 = vpop.trf.xlu0
    %v404 = vpop.trf.xlu0
    %v405 = vld [vmem:[%s1] sm:$0xff]
    %v406 = vld [vmem:[%s1 + $0x8] sm:$0xff]
    %v407 = vld [vmem:[%s1 + $0x10] sm:$0xff]
    %v408 = vld [vmem:[%s1 + $0x18] sm:$0xff]
    %v409 = vld [vmem:[%s1 + $0x20] sm:$0xff]
    %v410 = vld [vmem:[%s1 + $0x28] sm:$0xff]
    %v411 = vld [vmem:[%s1 + $0x30] sm:$0xff]
    %v412 = vld [vmem:[%s1 + $0x38] sm:$0xff]
    %v413 = vld [vmem:[%s2] sm:$0xff]
    %v414 = vld [vmem:[%s2 + $0x8] sm:$0xff]
    %v415 = vld [vmem:[%s2 + $0x10] sm:$0xff]
    %v416 = vld [vmem:[%s2 + $0x18] sm:$0xff]
    %v417 = vld [vmem:[%s2 + $0x20] sm:$0xff]
    %v418 = vld [vmem:[%s2 + $0x28] sm:$0xff]
    %v419 = vld [vmem:[%s2 + $0x30] sm:$0xff]
    %v420 = vld [vmem:[%s2 + $0x38] sm:$0xff]
    %422 = vset.pattern.permute.xlu0 0
    %423 = vperm.xlu0 %422, %v413
    %v424 = vpop.permute.xlu0 %423
    %427 = vset.pattern.permute.xlu0 0
    %428 = vperm.xlu0 %427, %v414
    %v429 = vpop.permute.xlu0 %428
    %432 = vset.pattern.permute.xlu0 0
    %433 = vperm.xlu0 %432, %v415
    %v434 = vpop.permute.xlu0 %433
    %437 = vset.pattern.permute.xlu0 0
    %438 = vperm.xlu0 %437, %v416
    %v439 = vpop.permute.xlu0 %438
    %442 = vset.pattern.permute.xlu0 0
    %443 = vperm.xlu0 %442, %v417
    %v444 = vpop.permute.xlu0 %443
    %447 = vset.pattern.permute.xlu0 0
    %448 = vperm.xlu0 %447, %v418
    %v449 = vpop.permute.xlu0 %448
    %452 = vset.pattern.permute.xlu0 0
    %453 = vperm.xlu0 %452, %v419
    %v454 = vpop.permute.xlu0 %453
    %457 = vset.pattern.permute.xlu0 0
    %458 = vperm.xlu0 %457, %v420
    %v459 = vpop.permute.xlu0 %458
    %vm461 = vcmask 64512
    %v463 = vsel %vm461, %v405, 0
    %v466 = vsel %vm461, %v406, 0
    %v469 = vsel %vm461, %v407, 0
    %v472 = vsel %vm461, %v408, 0
    %v475 = vsel %vm461, %v409, 0
    %v478 = vsel %vm461, %v410, 0
    %v481 = vsel %vm461, %v411, 0
    %v484 = vsel %vm461, %v412, 0
    %486 = vmatprep.subr.mxu0 0.0
    %487 = vmatpush1.msra.mxu0 0.0
    %488 = vmatprep.subr.mxu0 0.0
    %489 = vmatpush1.msra.mxu0 0.0
    %490 = vmatprep.subr.mxu0 0.0
    %491 = vmatpush1.msra.mxu0 0.0
    %492 = vmatprep.subr.mxu0 0.0
    %493 = vmatpush1.msra.mxu0 0.0
    %494 = vmatprep.subr.mxu0 0.0
    %495 = vmatpush1.msra.mxu0 0.0
    %496 = vmatprep.subr.mxu0 0.0
    %497 = vmatpush1.msra.mxu0 0.0
    %498 = vmatprep.subr.mxu0 0.0
    %499 = vmatpush1.msra.mxu0 0.0
    %500 = vmatprep.subr.mxu0 0.0
    %501 = vmatpush1.msra.mxu0 0.0
    %502 = vmatprep.subr.mxu0 0.0
    %503 = vmatpush1.msra.mxu0 0.0
    %504 = vmatprep.subr.mxu0 0.0
    %505 = vmatpush1.msra.mxu0 0.0
    %506 = vmatprep.subr.mxu0 0.0
    %507 = vmatpush1.msra.mxu0 0.0
    %508 = vmatprep.subr.mxu0 0.0
    %509 = vmatpush1.msra.mxu0 0.0
    %510 = vmatprep.subr.mxu0 0.0
    %511 = vmatpush1.msra.mxu0 0.0
    %512 = vmatprep.subr.mxu0 0.0
    %513 = vmatpush1.msra.mxu0 0.0
    %514 = vmatprep.subr.mxu0 0.0
    %515 = vmatpush1.msra.mxu0 0.0
    %516 = vmatprep.subr.mxu0 %v197
    %517 = vmatpush1.msra.mxu0 %v165
    %518 = vmatprep.subr.mxu0 0.0
    %519 = vmatpush2.msra.mxu0 0.0
    %520 = vmatprep.subr.mxu0 0.0
    %521 = vmatpush2.msra.mxu0 0.0
    %522 = vmatprep.subr.mxu0 0.0
    %523 = vmatpush2.msra.mxu0 0.0
    %524 = vmatprep.subr.mxu0 0.0
    %525 = vmatpush2.msra.mxu0 0.0
    %526 = vmatprep.subr.mxu0 0.0
    %527 = vmatpush2.msra.mxu0 0.0
    %528 = vmatprep.subr.mxu0 0.0
    %529 = vmatpush2.msra.mxu0 0.0
    %530 = vmatprep.subr.mxu0 0.0
    %531 = vmatpush2.msra.mxu0 0.0
    %532 = vmatprep.subr.mxu0 0.0
    %533 = vmatpush2.msra.mxu0 0.0
    %534 = vmatprep.subr.mxu0 0.0
    %535 = vmatpush2.msra.mxu0 0.0
    %536 = vmatprep.subr.mxu0 0.0
    %537 = vmatpush2.msra.mxu0 0.0
    %538 = vmatprep.subr.mxu0 0.0
    %539 = vmatpush2.msra.mxu0 0.0
    %540 = vmatprep.subr.mxu0 0.0
    %541 = vmatpush2.msra.mxu0 0.0
    %542 = vmatprep.subr.mxu0 0.0
    %543 = vmatpush2.msra.mxu0 0.0
    %544 = vmatprep.subr.mxu0 0.0
    %545 = vmatpush2.msra.mxu0 0.0
    %546 = vmatprep.subr.mxu0 0.0
    %547 = vmatpush2.msra.mxu0 0.0
    %548 = vmatprep.subr.mxu0 0.0
    %549 = vmatpush2.msra.mxu0 0.0
    %550 = vmatprep.mubr.f32.mxu0 0.0
    %551 = vmatmul.mubr.f32.gmra.mxu0 %v463
    %v552 = vpop.f32.mrf.mxu0
    %v553 = vadd.f32 %v424, %v552
    %v554 = vpop.f32.mrf.mxu0
    %v555 = vadd.f32 %v424, %v554
    %556 = vmatprep.mubr.f32.mxu0 0.0
    %557 = vmatmul.mubr.f32.gmra.mxu0 %v466
    %v558 = vpop.f32.mrf.mxu0
    %v559 = vadd.f32 %v429, %v558
    %v560 = vpop.f32.mrf.mxu0
    %v561 = vadd.f32 %v429, %v560
    %562 = vmatprep.mubr.f32.mxu0 0.0
    %563 = vmatmul.mubr.f32.gmra.mxu0 %v469
    %v564 = vpop.f32.mrf.mxu0
    %v565 = vadd.f32 %v434, %v564
    %v566 = vpop.f32.mrf.mxu0
    %v567 = vadd.f32 %v434, %v566
    %568 = vmatprep.mubr.f32.mxu0 0.0
    %569 = vmatmul.mubr.f32.gmra.mxu0 %v472
    %v570 = vpop.f32.mrf.mxu0
    %v571 = vadd.f32 %v439, %v570
    %v572 = vpop.f32.mrf.mxu0
    %v573 = vadd.f32 %v439, %v572
    %574 = vmatprep.mubr.f32.mxu0 0.0
    %575 = vmatmul.mubr.f32.gmra.mxu0 %v475
    %v576 = vpop.f32.mrf.mxu0
    %v577 = vadd.f32 %v444, %v576
    %v578 = vpop.f32.mrf.mxu0
    %v579 = vadd.f32 %v444, %v578
    %580 = vmatprep.mubr.f32.mxu0 0.0
    %581 = vmatmul.mubr.f32.gmra.mxu0 %v478
    %v582 = vpop.f32.mrf.mxu0
    %v583 = vadd.f32 %v449, %v582
    %v584 = vpop.f32.mrf.mxu0
    %v585 = vadd.f32 %v449, %v584
    %586 = vmatprep.mubr.f32.mxu0 0.0
    %587 = vmatmul.mubr.f32.gmra.mxu0 %v481
    %v588 = vpop.f32.mrf.mxu0
    %v589 = vadd.f32 %v454, %v588
    %v590 = vpop.f32.mrf.mxu0
    %v591 = vadd.f32 %v454, %v590
    %592 = vmatprep.mubr.f32.mxu0 0.0
    %593 = vmatmul.mubr.f32.gmra.mxu0 %v484
    %v594 = vpop.f32.mrf.mxu0
    %v595 = vadd.f32 %v459, %v594
    %v596 = vpop.f32.mrf.mxu0
    %v597 = vadd.f32 %v459, %v596
    %598 = vdwg.mxu0
    %599 = vmatprep.subr.mxu0 0.0
    %600 = vmatpush1.msra.mxu0 0.0
    %601 = vmatprep.subr.mxu0 0.0
    %602 = vmatpush1.msra.mxu0 0.0
    %603 = vmatprep.subr.mxu0 0.0
    %604 = vmatpush1.msra.mxu0 0.0
    %605 = vmatprep.subr.mxu0 0.0
    %606 = vmatpush1.msra.mxu0 0.0
    %607 = vmatprep.subr.mxu0 0.0
    %608 = vmatpush1.msra.mxu0 0.0
    %609 = vmatprep.subr.mxu0 0.0
    %610 = vmatpush1.msra.mxu0 0.0
    %611 = vmatprep.subr.mxu0 0.0
    %612 = vmatpush1.msra.mxu0 0.0
    %613 = vmatprep.subr.mxu0 0.0
    %614 = vmatpush1.msra.mxu0 0.0
    %615 = vmatprep.subr.mxu0 0.0
    %616 = vmatpush1.msra.mxu0 0.0
    %617 = vmatprep.subr.mxu0 0.0
    %618 = vmatpush1.msra.mxu0 0.0
    %619 = vmatprep.subr.mxu0 0.0
    %620 = vmatpush1.msra.mxu0 0.0
    %621 = vmatprep.subr.mxu0 0.0
    %622 = vmatpush1.msra.mxu0 0.0
    %623 = vmatprep.subr.mxu0 0.0
    %624 = vmatpush1.msra.mxu0 0.0
    %625 = vmatprep.subr.mxu0 0.0
    %626 = vmatpush1.msra.mxu0 0.0
    %627 = vmatprep.subr.mxu0 0.0
    %628 = vmatpush1.msra.mxu0 0.0
    %629 = vmatprep.subr.mxu0 %v261
    %630 = vmatpush1.msra.mxu0 %v229
    %631 = vmatprep.subr.mxu0 0.0
    %632 = vmatpush2.msra.mxu0 0.0
    %633 = vmatprep.subr.mxu0 0.0
    %634 = vmatpush2.msra.mxu0 0.0
    %635 = vmatprep.subr.mxu0 0.0
    %636 = vmatpush2.msra.mxu0 0.0
    %637 = vmatprep.subr.mxu0 0.0
    %638 = vmatpush2.msra.mxu0 0.0
    %639 = vmatprep.subr.mxu0 0.0
    %640 = vmatpush2.msra.mxu0 0.0
    %641 = vmatprep.subr.mxu0 0.0
    %642 = vmatpush2.msra.mxu0 0.0
    %643 = vmatprep.subr.mxu0 0.0
    %644 = vmatpush2.msra.mxu0 0.0
    %645 = vmatprep.subr.mxu0 0.0
    %646 = vmatpush2.msra.mxu0 0.0
    %647 = vmatprep.subr.mxu0 0.0
    %648 = vmatpush2.msra.mxu0 0.0
    %649 = vmatprep.subr.mxu0 0.0
    %650 = vmatpush2.msra.mxu0 0.0
    %651 = vmatprep.subr.mxu0 0.0
    %652 = vmatpush2.msra.mxu0 0.0
    %653 = vmatprep.subr.mxu0 0.0
    %654 = vmatpush2.msra.mxu0 0.0
    %655 = vmatprep.subr.mxu0 0.0
    %656 = vmatpush2.msra.mxu0 0.0
    %657 = vmatprep.subr.mxu0 0.0
    %658 = vmatpush2.msra.mxu0 0.0
    %659 = vmatprep.subr.mxu0 0.0
    %660 = vmatpush2.msra.mxu0 0.0
    %661 = vmatprep.subr.mxu0 0.0
    %662 = vmatpush2.msra.mxu0 0.0
    %663 = vmatprep.mubr.f32.mxu0 0.0
    %664 = vmatmul.mubr.f32.gmra.mxu0 %v463
    %v665 = vpop.f32.mrf.mxu0
    %v666 = vadd.f32 %v424, %v665
    %v667 = vpop.f32.mrf.mxu0
    %v668 = vadd.f32 %v424, %v667
    %669 = vmatprep.mubr.f32.mxu0 0.0
    %670 = vmatmul.mubr.f32.gmra.mxu0 %v466
    %v671 = vpop.f32.mrf.mxu0
    %v672 = vadd.f32 %v429, %v671
    %v673 = vpop.f32.mrf.mxu0
    %v674 = vadd.f32 %v429, %v673
    %675 = vmatprep.mubr.f32.mxu0 0.0
    %676 = vmatmul.mubr.f32.gmra.mxu0 %v469
    %v677 = vpop.f32.mrf.mxu0
    %v678 = vadd.f32 %v434, %v677
    %v679 = vpop.f32.mrf.mxu0
    %v680 = vadd.f32 %v434, %v679
    %681 = vmatprep.mubr.f32.mxu0 0.0
    %682 = vmatmul.mubr.f32.gmra.mxu0 %v472
    %v683 = vpop.f32.mrf.mxu0
    %v684 = vadd.f32 %v439, %v683
    %v685 = vpop.f32.mrf.mxu0
    %v686 = vadd.f32 %v439, %v685
    %687 = vmatprep.mubr.f32.mxu0 0.0
    %688 = vmatmul.mubr.f32.gmra.mxu0 %v475
    %v689 = vpop.f32.mrf.mxu0
    %v690 = vadd.f32 %v444, %v689
    %v691 = vpop.f32.mrf.mxu0
    %v692 = vadd.f32 %v444, %v691
    %693 = vmatprep.mubr.f32.mxu0 0.0
    %694 = vmatmul.mubr.f32.gmra.mxu0 %v478
    %v695 = vpop.f32.mrf.mxu0
    %v696 = vadd.f32 %v449, %v695
    %v697 = vpop.f32.mrf.mxu0
    %v698 = vadd.f32 %v449, %v697
    %699 = vmatprep.mubr.f32.mxu0 0.0
    %700 = vmatmul.mubr.f32.gmra.mxu0 %v481
    %v701 = vpop.f32.mrf.mxu0
    %v702 = vadd.f32 %v454, %v701
    %v703 = vpop.f32.mrf.mxu0
    %v704 = vadd.f32 %v454, %v703
    %705 = vmatprep.mubr.f32.mxu0 0.0
    %706 = vmatmul.mubr.f32.gmra.mxu0 %v484
    %v707 = vpop.f32.mrf.mxu0
    %v708 = vadd.f32 %v459, %v707
    %v709 = vpop.f32.mrf.mxu0
    %v710 = vadd.f32 %v459, %v709
    %711 = vdwg.mxu0
    %712 = vmatprep.subr.mxu0 0.0
    %713 = vmatpush1.msra.mxu0 0.0
    %714 = vmatprep.subr.mxu0 0.0
    %715 = vmatpush1.msra.mxu0 0.0
    %716 = vmatprep.subr.mxu0 0.0
    %717 = vmatpush1.msra.mxu0 0.0
    %718 = vmatprep.subr.mxu0 0.0
    %719 = vmatpush1.msra.mxu0 0.0
    %720 = vmatprep.subr.mxu0 0.0
    %721 = vmatpush1.msra.mxu0 0.0
    %722 = vmatprep.subr.mxu0 0.0
    %723 = vmatpush1.msra.mxu0 0.0
    %724 = vmatprep.subr.mxu0 0.0
    %725 = vmatpush1.msra.mxu0 0.0
    %726 = vmatprep.subr.mxu0 0.0
    %727 = vmatpush1.msra.mxu0 0.0
    %728 = vmatprep.subr.mxu0 0.0
    %729 = vmatpush1.msra.mxu0 0.0
    %730 = vmatprep.subr.mxu0 0.0
    %731 = vmatpush1.msra.mxu0 0.0
    %732 = vmatprep.subr.mxu0 0.0
    %733 = vmatpush1.msra.mxu0 0.0
    %734 = vmatprep.subr.mxu0 0.0
    %735 = vmatpush1.msra.mxu0 0.0
    %736 = vmatprep.subr.mxu0 0.0
    %737 = vmatpush1.msra.mxu0 0.0
    %738 = vmatprep.subr.mxu0 0.0
    %739 = vmatpush1.msra.mxu0 0.0
    %740 = vmatprep.subr.mxu0 0.0
    %741 = vmatpush1.msra.mxu0 0.0
    %742 = vmatprep.subr.mxu0 %v325
    %743 = vmatpush1.msra.mxu0 %v293
    %744 = vmatprep.subr.mxu0 0.0
    %745 = vmatpush2.msra.mxu0 0.0
    %746 = vmatprep.subr.mxu0 0.0
    %747 = vmatpush2.msra.mxu0 0.0
    %748 = vmatprep.subr.mxu0 0.0
    %749 = vmatpush2.msra.mxu0 0.0
    %750 = vmatprep.subr.mxu0 0.0
    %751 = vmatpush2.msra.mxu0 0.0
    %752 = vmatprep.subr.mxu0 0.0
    %753 = vmatpush2.msra.mxu0 0.0
    %754 = vmatprep.subr.mxu0 0.0
    %755 = vmatpush2.msra.mxu0 0.0
    %756 = vmatprep.subr.mxu0 0.0
    %757 = vmatpush2.msra.mxu0 0.0
    %758 = vmatprep.subr.mxu0 0.0
    %759 = vmatpush2.msra.mxu0 0.0
    %760 = vmatprep.subr.mxu0 0.0
    %761 = vmatpush2.msra.mxu0 0.0
    %762 = vmatprep.subr.mxu0 0.0
    %763 = vmatpush2.msra.mxu0 0.0
    %764 = vmatprep.subr.mxu0 0.0
    %765 = vmatpush2.msra.mxu0 0.0
    %766 = vmatprep.subr.mxu0 0.0
    %767 = vmatpush2.msra.mxu0 0.0
    %768 = vmatprep.subr.mxu0 0.0
    %769 = vmatpush2.msra.mxu0 0.0
    %770 = vmatprep.subr.mxu0 0.0
    %771 = vmatpush2.msra.mxu0 0.0
    %772 = vmatprep.subr.mxu0 0.0
    %773 = vmatpush2.msra.mxu0 0.0
    %774 = vmatprep.subr.mxu0 0.0
    %775 = vmatpush2.msra.mxu0 0.0
    %776 = vmatprep.mubr.f32.mxu0 0.0
    %777 = vmatmul.mubr.f32.gmra.mxu0 %v463
    %v778 = vpop.f32.mrf.mxu0
    %v779 = vadd.f32 %v424, %v778
    %v780 = vpop.f32.mrf.mxu0
    %v781 = vadd.f32 %v424, %v780
    %782 = vmatprep.mubr.f32.mxu0 0.0
    %783 = vmatmul.mubr.f32.gmra.mxu0 %v466
    %v784 = vpop.f32.mrf.mxu0
    %v785 = vadd.f32 %v429, %v784
    %v786 = vpop.f32.mrf.mxu0
    %v787 = vadd.f32 %v429, %v786
    %788 = vmatprep.mubr.f32.mxu0 0.0
    %789 = vmatmul.mubr.f32.gmra.mxu0 %v469
    %v790 = vpop.f32.mrf.mxu0
    %v791 = vadd.f32 %v434, %v790
    %v792 = vpop.f32.mrf.mxu0
    %v793 = vadd.f32 %v434, %v792
    %794 = vmatprep.mubr.f32.mxu0 0.0
    %795 = vmatmul.mubr.f32.gmra.mxu0 %v472
    %v796 = vpop.f32.mrf.mxu0
    %v797 = vadd.f32 %v439, %v796
    %v798 = vpop.f32.mrf.mxu0
    %v799 = vadd.f32 %v439, %v798
    %800 = vmatprep.mubr.f32.mxu0 0.0
    %801 = vmatmul.mubr.f32.gmra.mxu0 %v475
    %v802 = vpop.f32.mrf.mxu0
    %v803 = vadd.f32 %v444, %v802
    %v804 = vpop.f32.mrf.mxu0
    %v805 = vadd.f32 %v444, %v804
    %806 = vmatprep.mubr.f32.mxu0 0.0
    %807 = vmatmul.mubr.f32.gmra.mxu0 %v478
    %v808 = vpop.f32.mrf.mxu0
    %v809 = vadd.f32 %v449, %v808
    %v810 = vpop.f32.mrf.mxu0
    %v811 = vadd.f32 %v449, %v810
    %812 = vmatprep.mubr.f32.mxu0 0.0
    %813 = vmatmul.mubr.f32.gmra.mxu0 %v481
    %v814 = vpop.f32.mrf.mxu0
    %v815 = vadd.f32 %v454, %v814
    %v816 = vpop.f32.mrf.mxu0
    %v817 = vadd.f32 %v454, %v816
    %818 = vmatprep.mubr.f32.mxu0 0.0
    %819 = vmatmul.mubr.f32.gmra.mxu0 %v484
    %v820 = vpop.f32.mrf.mxu0
    %v821 = vadd.f32 %v459, %v820
    %v822 = vpop.f32.mrf.mxu0
    %v823 = vadd.f32 %v459, %v822
    %824 = vdwg.mxu0
    %825 = vmatprep.subr.mxu0 0.0
    %826 = vmatpush1.msra.mxu0 0.0
    %827 = vmatprep.subr.mxu0 0.0
    %828 = vmatpush1.msra.mxu0 0.0
    %829 = vmatprep.subr.mxu0 0.0
    %830 = vmatpush1.msra.mxu0 0.0
    %831 = vmatprep.subr.mxu0 0.0
    %832 = vmatpush1.msra.mxu0 0.0
    %833 = vmatprep.subr.mxu0 0.0
    %834 = vmatpush1.msra.mxu0 0.0
    %835 = vmatprep.subr.mxu0 0.0
    %836 = vmatpush1.msra.mxu0 0.0
    %837 = vmatprep.subr.mxu0 0.0
    %838 = vmatpush1.msra.mxu0 0.0
    %839 = vmatprep.subr.mxu0 0.0
    %840 = vmatpush1.msra.mxu0 0.0
    %841 = vmatprep.subr.mxu0 0.0
    %842 = vmatpush1.msra.mxu0 0.0
    %843 = vmatprep.subr.mxu0 0.0
    %844 = vmatpush1.msra.mxu0 0.0
    %845 = vmatprep.subr.mxu0 0.0
    %846 = vmatpush1.msra.mxu0 0.0
    %847 = vmatprep.subr.mxu0 0.0
    %848 = vmatpush1.msra.mxu0 0.0
    %849 = vmatprep.subr.mxu0 0.0
    %850 = vmatpush1.msra.mxu0 0.0
    %851 = vmatprep.subr.mxu0 0.0
    %852 = vmatpush1.msra.mxu0 0.0
    %853 = vmatprep.subr.mxu0 0.0
    %854 = vmatpush1.msra.mxu0 0.0
    %855 = vmatprep.subr.mxu0 %v389
    %856 = vmatpush1.msra.mxu0 %v357
    %857 = vmatprep.subr.mxu0 0.0
    %858 = vmatpush2.msra.mxu0 0.0
    %859 = vmatprep.subr.mxu0 0.0
    %860 = vmatpush2.msra.mxu0 0.0
    %861 = vmatprep.subr.mxu0 0.0
    %862 = vmatpush2.msra.mxu0 0.0
    %863 = vmatprep.subr.mxu0 0.0
    %864 = vmatpush2.msra.mxu0 0.0
    %865 = vmatprep.subr.mxu0 0.0
    %866 = vmatpush2.msra.mxu0 0.0
    %867 = vmatprep.subr.mxu0 0.0
    %868 = vmatpush2.msra.mxu0 0.0
    %869 = vmatprep.subr.mxu0 0.0
    %870 = vmatpush2.msra.mxu0 0.0
    %871 = vmatprep.subr.mxu0 0.0
    %872 = vmatpush2.msra.mxu0 0.0
    %873 = vmatprep.subr.mxu0 0.0
    %874 = vmatpush2.msra.mxu0 0.0
    %875 = vmatprep.subr.mxu0 0.0
    %876 = vmatpush2.msra.mxu0 0.0
    %877 = vmatprep.subr.mxu0 0.0
    %878 = vmatpush2.msra.mxu0 0.0
    %879 = vmatprep.subr.mxu0 0.0
    %880 = vmatpush2.msra.mxu0 0.0
    %881 = vmatprep.subr.mxu0 0.0
    %882 = vmatpush2.msra.mxu0 0.0
    %883 = vmatprep.subr.mxu0 0.0
    %884 = vmatpush2.msra.mxu0 0.0
    %885 = vmatprep.subr.mxu0 0.0
    %886 = vmatpush2.msra.mxu0 0.0
    %887 = vmatprep.subr.mxu0 0.0
    %888 = vmatpush2.msra.mxu0 0.0
    %889 = vmatprep.mubr.f32.mxu0 0.0
    %890 = vmatmul.mubr.f32.gmra.mxu0 %v463
    %v891 = vpop.f32.mrf.mxu0
    %v892 = vadd.f32 %v424, %v891
    %v893 = vpop.f32.mrf.mxu0
    %v894 = vadd.f32 %v424, %v893
    %895 = vmatprep.mubr.f32.mxu0 0.0
    %896 = vmatmul.mubr.f32.gmra.mxu0 %v466
    %v897 = vpop.f32.mrf.mxu0
    %v898 = vadd.f32 %v429, %v897
    %v899 = vpop.f32.mrf.mxu0
    %v900 = vadd.f32 %v429, %v899
    %901 = vmatprep.mubr.f32.mxu0 0.0
    %902 = vmatmul.mubr.f32.gmra.mxu0 %v469
    %v903 = vpop.f32.mrf.mxu0
    %v904 = vadd.f32 %v434, %v903
    %v905 = vpop.f32.mrf.mxu0
    %v906 = vadd.f32 %v434, %v905
    %907 = vmatprep.mubr.f32.mxu0 0.0
    %908 = vmatmul.mubr.f32.gmra.mxu0 %v472
    %v909 = vpop.f32.mrf.mxu0
    %v910 = vadd.f32 %v439, %v909
    %v911 = vpop.f32.mrf.mxu0
    %v912 = vadd.f32 %v439, %v911
    %913 = vmatprep.mubr.f32.mxu0 0.0
    %914 = vmatmul.mubr.f32.gmra.mxu0 %v475
    %v915 = vpop.f32.mrf.mxu0
    %v916 = vadd.f32 %v444, %v915
    %v917 = vpop.f32.mrf.mxu0
    %v918 = vadd.f32 %v444, %v917
    %919 = vmatprep.mubr.f32.mxu0 0.0
    %920 = vmatmul.mubr.f32.gmra.mxu0 %v478
    %v921 = vpop.f32.mrf.mxu0
    %v922 = vadd.f32 %v449, %v921
    %v923 = vpop.f32.mrf.mxu0
    %v924 = vadd.f32 %v449, %v923
    %925 = vmatprep.mubr.f32.mxu0 0.0
    %926 = vmatmul.mubr.f32.gmra.mxu0 %v481
    %v927 = vpop.f32.mrf.mxu0
    %v928 = vadd.f32 %v454, %v927
    %v929 = vpop.f32.mrf.mxu0
    %v930 = vadd.f32 %v454, %v929
    %931 = vmatprep.mubr.f32.mxu0 0.0
    %932 = vmatmul.mubr.f32.gmra.mxu0 %v484
    %v933 = vpop.f32.mrf.mxu0
    %v934 = vadd.f32 %v459, %v933
    %v935 = vpop.f32.mrf.mxu0
    %v936 = vadd.f32 %v459, %v935
    %937 = vdwg.mxu0
    %v938 = vtanh.pop %v553
    %v939 = vtanh.pop %v555
    %v940 = vtanh.pop %v666
    %v941 = vtanh.pop %v668
    %v942 = vtanh.pop %v779
    %v943 = vtanh.pop %v781
    %v944 = vtanh.pop %v892
    %v945 = vtanh.pop %v894
    %v946 = vtanh.pop %v559
    %v947 = vtanh.pop %v561
    %v948 = vtanh.pop %v672
    %v949 = vtanh.pop %v674
    %v950 = vtanh.pop %v785
    %v951 = vtanh.pop %v787
    %v952 = vtanh.pop %v898
    %v953 = vtanh.pop %v900
    %v954 = vtanh.pop %v565
    %v955 = vtanh.pop %v567
    %v956 = vtanh.pop %v678
    %v957 = vtanh.pop %v680
    %v958 = vtanh.pop %v791
    %v959 = vtanh.pop %v793
    %v960 = vtanh.pop %v904
    %v961 = vtanh.pop %v906
    %v962 = vtanh.pop %v571
    %v963 = vtanh.pop %v573
    %v964 = vtanh.pop %v684
    %v965 = vtanh.pop %v686
    %v966 = vtanh.pop %v797
    %v967 = vtanh.pop %v799
    %v968 = vtanh.pop %v910
    %v969 = vtanh.pop %v912
    %v970 = vtanh.pop %v577
    %v971 = vtanh.pop %v579
    %v972 = vtanh.pop %v690
    %v973 = vtanh.pop %v692
    %v974 = vtanh.pop %v803
    %v975 = vtanh.pop %v805
    %v976 = vtanh.pop %v916
    %v977 = vtanh.pop %v918
    %v978 = vtanh.pop %v583
    %v979 = vtanh.pop %v585
    %v980 = vtanh.pop %v696
    %v981 = vtanh.pop %v698
    %v982 = vtanh.pop %v809
    %v983 = vtanh.pop %v811
    %v984 = vtanh.pop %v922
    %v985 = vtanh.pop %v924
    %v986 = vtanh.pop %v589
    %v987 = vtanh.pop %v591
    %v988 = vtanh.pop %v702
    %v989 = vtanh.pop %v704
    %v990 = vtanh.pop %v815
    %v991 = vtanh.pop %v817
    %v992 = vtanh.pop %v928
    %v993 = vtanh.pop %v930
    %v994 = vtanh.pop %v595
    %v995 = vtanh.pop %v597
    %v996 = vtanh.pop %v708
    %v997 = vtanh.pop %v710
    %v998 = vtanh.pop %v821
    %v999 = vtanh.pop %v823
    %v1000 = vtanh.pop %v934
    %v1001 = vtanh.pop %v936
    %v1002 = vld [vmem:[%s3] sm:$0xff]
    %v1003 = vld [vmem:[%s3 + $0x8] sm:$0xff]
    %v1004 = vld [vmem:[%s4] sm:$0xff]
    %v1005 = vld [vmem:[%s4 + $0x8] sm:$0xff]
    %1007 = vset.pattern.permute.xlu0 0
    %1008 = vperm.xlu0 %1007, %v1004
    %v1009 = vpop.permute.xlu0 %1008
    %1012 = vset.pattern.permute.xlu0 0
    %1013 = vperm.xlu0 %1012, %v1005
    %v1014 = vpop.permute.xlu0 %1013
    %vm1016 = vcmask 523264
    %v1018 = vsel %vm1016, %v1002, 0
    %v1021 = vsel %vm1016, %v1003, 0
    %1023 = vmatprep.subr.mxu0 0.0
    %1024 = vmatpush1.msra.mxu0 0.0
    %1025 = vmatprep.subr.mxu0 0.0
    %1026 = vmatpush1.msra.mxu0 0.0
    %1027 = vmatprep.subr.mxu0 0.0
    %1028 = vmatpush1.msra.mxu0 0.0
    %1029 = vmatprep.subr.mxu0 0.0
    %1030 = vmatpush1.msra.mxu0 0.0
    %1031 = vmatprep.subr.mxu0 0.0
    %1032 = vmatpush1.msra.mxu0 0.0
    %1033 = vmatprep.subr.mxu0 0.0
    %1034 = vmatpush1.msra.mxu0 0.0
    %1035 = vmatprep.subr.mxu0 0.0
    %1036 = vmatpush1.msra.mxu0 0.0
    %1037 = vmatprep.subr.mxu0 0.0
    %1038 = vmatpush1.msra.mxu0 0.0
    %1039 = vmatprep.subr.mxu0 %v995
    %1040 = vmatpush1.msra.mxu0 %v994
    %1041 = vmatprep.subr.mxu0 %v987
    %1042 = vmatpush1.msra.mxu0 %v986
    %1043 = vmatprep.subr.mxu0 %v979
    %1044 = vmatpush1.msra.mxu0 %v978
    %1045 = vmatprep.subr.mxu0 %v971
    %1046 = vmatpush1.msra.mxu0 %v970
    %1047 = vmatprep.subr.mxu0 %v963
    %1048 = vmatpush1.msra.mxu0 %v962
    %1049 = vmatprep.subr.mxu0 %v955
    %1050 = vmatpush1.msra.mxu0 %v954
    %1051 = vmatprep.subr.mxu0 %v947
    %1052 = vmatpush1.msra.mxu0 %v946
    %1053 = vmatprep.subr.mxu0 %v939
    %1054 = vmatpush1.msra.mxu0 %v938
    %1055 = vmatprep.subr.mxu0 0.0
    %1056 = vmatpush2.msra.mxu0 0.0
    %1057 = vmatprep.subr.mxu0 0.0
    %1058 = vmatpush2.msra.mxu0 0.0
    %1059 = vmatprep.subr.mxu0 0.0
    %1060 = vmatpush2.msra.mxu0 0.0
    %1061 = vmatprep.subr.mxu0 0.0
    %1062 = vmatpush2.msra.mxu0 0.0
    %1063 = vmatprep.subr.mxu0 0.0
    %1064 = vmatpush2.msra.mxu0 0.0
    %1065 = vmatprep.subr.mxu0 0.0
    %1066 = vmatpush2.msra.mxu0 0.0
    %1067 = vmatprep.subr.mxu0 0.0
    %1068 = vmatpush2.msra.mxu0 0.0
    %1069 = vmatprep.subr.mxu0 0.0
    %1070 = vmatpush2.msra.mxu0 0.0
    %1071 = vmatprep.subr.mxu0 0.0
    %1072 = vmatpush2.msra.mxu0 0.0
    %1073 = vmatprep.subr.mxu0 0.0
    %1074 = vmatpush2.msra.mxu0 0.0
    %1075 = vmatprep.subr.mxu0 0.0
    %1076 = vmatpush2.msra.mxu0 0.0
    %1077 = vmatprep.subr.mxu0 0.0
    %1078 = vmatpush2.msra.mxu0 0.0
    %1079 = vmatprep.subr.mxu0 0.0
    %1080 = vmatpush2.msra.mxu0 0.0
    %1081 = vmatprep.subr.mxu0 0.0
    %1082 = vmatpush2.msra.mxu0 0.0
    %1083 = vmatprep.subr.mxu0 0.0
    %1084 = vmatpush2.msra.mxu0 0.0
    %1085 = vmatprep.subr.mxu0 0.0
    %1086 = vmatpush2.msra.mxu0 0.0
    %1087 = vmatprep.mubr.f32.mxu0 0.0
    %1088 = vmatmul.mubr.f32.gmra.mxu0 %v1018
    %v1089 = vpop.f32.mrf.mxu0
    %v1090 = vadd.f32 %v1009, %v1089
    %v1091 = vpop.f32.mrf.mxu0
    %v1092 = vadd.f32 %v1009, %v1091
    %1093 = vmatprep.mubr.f32.mxu0 0.0
    %1094 = vmatmul.mubr.f32.gmra.mxu0 %v1021
    %v1095 = vpop.f32.mrf.mxu0
    %v1096 = vadd.f32 %v1014, %v1095
    %v1097 = vpop.f32.mrf.mxu0
    %v1098 = vadd.f32 %v1014, %v1097
    %1099 = vdwg.mxu0
    %1100 = vmatprep.subr.mxu0 0.0
    %1101 = vmatpush1.msra.mxu0 0.0
    %1102 = vmatprep.subr.mxu0 0.0
    %1103 = vmatpush1.msra.mxu0 0.0
    %1104 = vmatprep.subr.mxu0 0.0
    %1105 = vmatpush1.msra.mxu0 0.0
    %1106 = vmatprep.subr.mxu0 0.0
    %1107 = vmatpush1.msra.mxu0 0.0
    %1108 = vmatprep.subr.mxu0 0.0
    %1109 = vmatpush1.msra.mxu0 0.0
    %1110 = vmatprep.subr.mxu0 0.0
    %1111 = vmatpush1.msra.mxu0 0.0
    %1112 = vmatprep.subr.mxu0 0.0
    %1113 = vmatpush1.msra.mxu0 0.0
    %1114 = vmatprep.subr.mxu0 0.0
    %1115 = vmatpush1.msra.mxu0 0.0
    %1116 = vmatprep.subr.mxu0 %v997
    %1117 = vmatpush1.msra.mxu0 %v996
    %1118 = vmatprep.subr.mxu0 %v989
    %1119 = vmatpush1.msra.mxu0 %v988
    %1120 = vmatprep.subr.mxu0 %v981
    %1121 = vmatpush1.msra.mxu0 %v980
    %1122 = vmatprep.subr.mxu0 %v973
    %1123 = vmatpush1.msra.mxu0 %v972
    %1124 = vmatprep.subr.mxu0 %v965
    %1125 = vmatpush1.msra.mxu0 %v964
    %1126 = vmatprep.subr.mxu0 %v957
    %1127 = vmatpush1.msra.mxu0 %v956
    %1128 = vmatprep.subr.mxu0 %v949
    %1129 = vmatpush1.msra.mxu0 %v948
    %1130 = vmatprep.subr.mxu0 %v941
    %1131 = vmatpush1.msra.mxu0 %v940
    %1132 = vmatprep.subr.mxu0 0.0
    %1133 = vmatpush2.msra.mxu0 0.0
    %1134 = vmatprep.subr.mxu0 0.0
    %1135 = vmatpush2.msra.mxu0 0.0
    %1136 = vmatprep.subr.mxu0 0.0
    %1137 = vmatpush2.msra.mxu0 0.0
    %1138 = vmatprep.subr.mxu0 0.0
    %1139 = vmatpush2.msra.mxu0 0.0
    %1140 = vmatprep.subr.mxu0 0.0
    %1141 = vmatpush2.msra.mxu0 0.0
    %1142 = vmatprep.subr.mxu0 0.0
    %1143 = vmatpush2.msra.mxu0 0.0
    %1144 = vmatprep.subr.mxu0 0.0
    %1145 = vmatpush2.msra.mxu0 0.0
    %1146 = vmatprep.subr.mxu0 0.0
    %1147 = vmatpush2.msra.mxu0 0.0
    %1148 = vmatprep.subr.mxu0 0.0
    %1149 = vmatpush2.msra.mxu0 0.0
    %1150 = vmatprep.subr.mxu0 0.0
    %1151 = vmatpush2.msra.mxu0 0.0
    %1152 = vmatprep.subr.mxu0 0.0
    %1153 = vmatpush2.msra.mxu0 0.0
    %1154 = vmatprep.subr.mxu0 0.0
    %1155 = vmatpush2.msra.mxu0 0.0
    %1156 = vmatprep.subr.mxu0 0.0
    %1157 = vmatpush2.msra.mxu0 0.0
    %1158 = vmatprep.subr.mxu0 0.0
    %1159 = vmatpush2.msra.mxu0 0.0
    %1160 = vmatprep.subr.mxu0 0.0
    %1161 = vmatpush2.msra.mxu0 0.0
    %1162 = vmatprep.subr.mxu0 0.0
    %1163 = vmatpush2.msra.mxu0 0.0
    %1164 = vmatprep.mubr.f32.mxu0 0.0
    %1165 = vmatmul.mubr.f32.gmra.mxu0 %v1018
    %v1166 = vpop.f32.mrf.mxu0
    %v1167 = vadd.f32 %v1009, %v1166
    %v1168 = vpop.f32.mrf.mxu0
    %v1169 = vadd.f32 %v1009, %v1168
    %1170 = vmatprep.mubr.f32.mxu0 0.0
    %1171 = vmatmul.mubr.f32.gmra.mxu0 %v1021
    %v1172 = vpop.f32.mrf.mxu0
    %v1173 = vadd.f32 %v1014, %v1172
    %v1174 = vpop.f32.mrf.mxu0
    %v1175 = vadd.f32 %v1014, %v1174
    %1176 = vdwg.mxu0
    %1177 = vmatprep.subr.mxu0 0.0
    %1178 = vmatpush1.msra.mxu0 0.0
    %1179 = vmatprep.subr.mxu0 0.0
    %1180 = vmatpush1.msra.mxu0 0.0
    %1181 = vmatprep.subr.mxu0 0.0
    %1182 = vmatpush1.msra.mxu0 0.0
    %1183 = vmatprep.subr.mxu0 0.0
    %1184 = vmatpush1.msra.mxu0 0.0
    %1185 = vmatprep.subr.mxu0 0.0
    %1186 = vmatpush1.msra.mxu0 0.0
    %1187 = vmatprep.subr.mxu0 0.0
    %1188 = vmatpush1.msra.mxu0 0.0
    %1189 = vmatprep.subr.mxu0 0.0
    %1190 = vmatpush1.msra.mxu0 0.0
    %1191 = vmatprep.subr.mxu0 0.0
    %1192 = vmatpush1.msra.mxu0 0.0
    %1193 = vmatprep.subr.mxu0 %v999
    %1194 = vmatpush1.msra.mxu0 %v998
    %1195 = vmatprep.subr.mxu0 %v991
    %1196 = vmatpush1.msra.mxu0 %v990
    %1197 = vmatprep.subr.mxu0 %v983
    %1198 = vmatpush1.msra.mxu0 %v982
    %1199 = vmatprep.subr.mxu0 %v975
    %1200 = vmatpush1.msra.mxu0 %v974
    %1201 = vmatprep.subr.mxu0 %v967
    %1202 = vmatpush1.msra.mxu0 %v966
    %1203 = vmatprep.subr.mxu0 %v959
    %1204 = vmatpush1.msra.mxu0 %v958
    %1205 = vmatprep.subr.mxu0 %v951
    %1206 = vmatpush1.msra.mxu0 %v950
    %1207 = vmatprep.subr.mxu0 %v943
    %1208 = vmatpush1.msra.mxu0 %v942
    %1209 = vmatprep.subr.mxu0 0.0
    %1210 = vmatpush2.msra.mxu0 0.0
    %1211 = vmatprep.subr.mxu0 0.0
    %1212 = vmatpush2.msra.mxu0 0.0
    %1213 = vmatprep.subr.mxu0 0.0
    %1214 = vmatpush2.msra.mxu0 0.0
    %1215 = vmatprep.subr.mxu0 0.0
    %1216 = vmatpush2.msra.mxu0 0.0
    %1217 = vmatprep.subr.mxu0 0.0
    %1218 = vmatpush2.msra.mxu0 0.0
    %1219 = vmatprep.subr.mxu0 0.0
    %1220 = vmatpush2.msra.mxu0 0.0
    %1221 = vmatprep.subr.mxu0 0.0
    %1222 = vmatpush2.msra.mxu0 0.0
    %1223 = vmatprep.subr.mxu0 0.0
    %1224 = vmatpush2.msra.mxu0 0.0
    %1225 = vmatprep.subr.mxu0 0.0
    %1226 = vmatpush2.msra.mxu0 0.0
    %1227 = vmatprep.subr.mxu0 0.0
    %1228 = vmatpush2.msra.mxu0 0.0
    %1229 = vmatprep.subr.mxu0 0.0
    %1230 = vmatpush2.msra.mxu0 0.0
    %1231 = vmatprep.subr.mxu0 0.0
    %1232 = vmatpush2.msra.mxu0 0.0
    %1233 = vmatprep.subr.mxu0 0.0
    %1234 = vmatpush2.msra.mxu0 0.0
    %1235 = vmatprep.subr.mxu0 0.0
    %1236 = vmatpush2.msra.mxu0 0.0
    %1237 = vmatprep.subr.mxu0 0.0
    %1238 = vmatpush2.msra.mxu0 0.0
    %1239 = vmatprep.subr.mxu0 0.0
    %1240 = vmatpush2.msra.mxu0 0.0
    %1241 = vmatprep.mubr.f32.mxu0 0.0
    %1242 = vmatmul.mubr.f32.gmra.mxu0 %v1018
    %v1243 = vpop.f32.mrf.mxu0
    %v1244 = vadd.f32 %v1009, %v1243
    %v1245 = vpop.f32.mrf.mxu0
    %v1246 = vadd.f32 %v1009, %v1245
    %1247 = vmatprep.mubr.f32.mxu0 0.0
    %1248 = vmatmul.mubr.f32.gmra.mxu0 %v1021
    %v1249 = vpop.f32.mrf.mxu0
    %v1250 = vadd.f32 %v1014, %v1249
    %v1251 = vpop.f32.mrf.mxu0
    %v1252 = vadd.f32 %v1014, %v1251
    %1253 = vdwg.mxu0
    %1254 = vmatprep.subr.mxu0 0.0
    %1255 = vmatpush1.msra.mxu0 0.0
    %1256 = vmatprep.subr.mxu0 0.0
    %1257 = vmatpush1.msra.mxu0 0.0
    %1258 = vmatprep.subr.mxu0 0.0
    %1259 = vmatpush1.msra.mxu0 0.0
    %1260 = vmatprep.subr.mxu0 0.0
    %1261 = vmatpush1.msra.mxu0 0.0
    %1262 = vmatprep.subr.mxu0 0.0
    %1263 = vmatpush1.msra.mxu0 0.0
    %1264 = vmatprep.subr.mxu0 0.0
    %1265 = vmatpush1.msra.mxu0 0.0
    %1266 = vmatprep.subr.mxu0 0.0
    %1267 = vmatpush1.msra.mxu0 0.0
    %1268 = vmatprep.subr.mxu0 0.0
    %1269 = vmatpush1.msra.mxu0 0.0
    %1270 = vmatprep.subr.mxu0 %v1001
    %1271 = vmatpush1.msra.mxu0 %v1000
    %1272 = vmatprep.subr.mxu0 %v993
    %1273 = vmatpush1.msra.mxu0 %v992
    %1274 = vmatprep.subr.mxu0 %v985
    %1275 = vmatpush1.msra.mxu0 %v984
    %1276 = vmatprep.subr.mxu0 %v977
    %1277 = vmatpush1.msra.mxu0 %v976
    %1278 = vmatprep.subr.mxu0 %v969
    %1279 = vmatpush1.msra.mxu0 %v968
    %1280 = vmatprep.subr.mxu0 %v961
    %1281 = vmatpush1.msra.mxu0 %v960
    %1282 = vmatprep.subr.mxu0 %v953
    %1283 = vmatpush1.msra.mxu0 %v952
    %1284 = vmatprep.subr.mxu0 %v945
    %1285 = vmatpush1.msra.mxu0 %v944
    %1286 = vmatprep.subr.mxu0 0.0
    %1287 = vmatpush2.msra.mxu0 0.0
    %1288 = vmatprep.subr.mxu0 0.0
    %1289 = vmatpush2.msra.mxu0 0.0
    %1290 = vmatprep.subr.mxu0 0.0
    %1291 = vmatpush2.msra.mxu0 0.0
    %1292 = vmatprep.subr.mxu0 0.0
    %1293 = vmatpush2.msra.mxu0 0.0
    %1294 = vmatprep.subr.mxu0 0.0
    %1295 = vmatpush2.msra.mxu0 0.0
    %1296 = vmatprep.subr.mxu0 0.0
    %1297 = vmatpush2.msra.mxu0 0.0
    %1298 = vmatprep.subr.mxu0 0.0
    %1299 = vmatpush2.msra.mxu0 0.0
    %1300 = vmatprep.subr.mxu0 0.0
    %1301 = vmatpush2.msra.mxu0 0.0
    %1302 = vmatprep.subr.mxu0 0.0
    %1303 = vmatpush2.msra.mxu0 0.0
    %1304 = vmatprep.subr.mxu0 0.0
    %1305 = vmatpush2.msra.mxu0 0.0
    %1306 = vmatprep.subr.mxu0 0.0
    %1307 = vmatpush2.msra.mxu0 0.0
    %1308 = vmatprep.subr.mxu0 0.0
    %1309 = vmatpush2.msra.mxu0 0.0
    %1310 = vmatprep.subr.mxu0 0.0
    %1311 = vmatpush2.msra.mxu0 0.0
    %1312 = vmatprep.subr.mxu0 0.0
    %1313 = vmatpush2.msra.mxu0 0.0
    %1314 = vmatprep.subr.mxu0 0.0
    %1315 = vmatpush2.msra.mxu0 0.0
    %1316 = vmatprep.subr.mxu0 0.0
    %1317 = vmatpush2.msra.mxu0 0.0
    %1318 = vmatprep.mubr.f32.mxu0 0.0
    %1319 = vmatmul.mubr.f32.gmra.mxu0 %v1018
    %v1320 = vpop.f32.mrf.mxu0
    %v1321 = vadd.f32 %v1009, %v1320
    %v1322 = vpop.f32.mrf.mxu0
    %v1323 = vadd.f32 %v1009, %v1322
    %1324 = vmatprep.mubr.f32.mxu0 0.0
    %1325 = vmatmul.mubr.f32.gmra.mxu0 %v1021
    %v1326 = vpop.f32.mrf.mxu0
    %v1327 = vadd.f32 %v1014, %v1326
    %v1328 = vpop.f32.mrf.mxu0
    %v1329 = vadd.f32 %v1014, %v1328
    %1330 = vdwg.mxu0
    %v1331 = vsub.f32 %v166, %v1090
    %v1332 = vsub.f32 %v198, %v1092
    %v1333 = vsub.f32 %v230, %v1167
    %v1334 = vsub.f32 %v262, %v1169
    %v1335 = vsub.f32 %v294, %v1244
    %v1336 = vsub.f32 %v326, %v1246
    %v1337 = vsub.f32 %v358, %v1321
    %v1338 = vsub.f32 %v390, %v1323
    %v1339 = vsub.f32 0.0, %v1096
    %v1340 = vsub.f32 0.0, %v1098
    %v1341 = vsub.f32 0.0, %v1173
    %v1342 = vsub.f32 0.0, %v1175
    %v1343 = vsub.f32 0.0, %v1250
    %v1344 = vsub.f32 0.0, %v1252
    %v1345 = vsub.f32 0.0, %v1327
    %v1346 = vsub.f32 0.0, %v1329
    %v1347 = vmul.f32 %v1339, 1.442695
    %v1348 = vpow.pop %v1347
    %v1349 = vmul.f32 %v1340, 1.442695
    %v1350 = vpow.pop %v1349
    %v1351 = vmul.f32 %v1341, 1.442695
    %v1352 = vpow.pop %v1351
    %v1353 = vmul.f32 %v1342, 1.442695
    %v1354 = vpow.pop %v1353
    %v1355 = vmul.f32 %v1343, 1.442695
    %v1356 = vpow.pop %v1355
    %v1357 = vmul.f32 %v1344, 1.442695
    %v1358 = vpow.pop %v1357
    %v1359 = vmul.f32 %v1345, 1.442695
    %v1360 = vpow.pop %v1359
    %v1361 = vmul.f32 %v1346, 1.442695
    %v1362 = vpow.pop %v1361
    %v1363 = vmul.f32 %v1331, %v1348
    %v1364 = vmul.f32 %v1332, %v1350
    %v1365 = vmul.f32 %v1333, %v1352
    %v1366 = vmul.f32 %v1334, %v1354
    %v1367 = vmul.f32 %v1335, %v1356
    %v1368 = vmul.f32 %v1336, %v1358
    %v1369 = vmul.f32 %v1337, %v1360
    %v1370 = vmul.f32 %v1338, %v1362
    %v1371 = vadd.f32 %v1096, 0.0
    %v1372 = vadd.f32 %v1098, 0.0
    %v1373 = vadd.f32 %v1173, 0.0
    %v1374 = vadd.f32 %v1175, 0.0
    %v1375 = vadd.f32 %v1250, 0.0
    %v1376 = vadd.f32 %v1252, 0.0
    %v1377 = vadd.f32 %v1327, 0.0
    %v1378 = vadd.f32 %v1329, 0.0
    %s1379 = scalar_lea.vmem %s1, 64
    %v1380 = vld [vmem:[%s1379] sm:$0xff]
    %v1381 = vld [vmem:[%s1379 + $0x8] sm:$0xff]
    %v1382 = vld [vmem:[%s1379 + $0x10] sm:$0xff]
    %v1383 = vld [vmem:[%s1379 + $0x18] sm:$0xff]
    %v1384 = vld [vmem:[%s1379 + $0x20] sm:$0xff]
    %v1385 = vld [vmem:[%s1379 + $0x28] sm:$0xff]
    %v1386 = vld [vmem:[%s1379 + $0x30] sm:$0xff]
    %v1387 = vld [vmem:[%s1379 + $0x38] sm:$0xff]
    %s1388 = scalar_lea.vmem %s2, 64
    %v1389 = vld [vmem:[%s1388] sm:$0xff]
    %v1390 = vld [vmem:[%s1388 + $0x8] sm:$0xff]
    %v1391 = vld [vmem:[%s1388 + $0x10] sm:$0xff]
    %v1392 = vld [vmem:[%s1388 + $0x18] sm:$0xff]
    %v1393 = vld [vmem:[%s1388 + $0x20] sm:$0xff]
    %v1394 = vld [vmem:[%s1388 + $0x28] sm:$0xff]
    %v1395 = vld [vmem:[%s1388 + $0x30] sm:$0xff]
    %v1396 = vld [vmem:[%s1388 + $0x38] sm:$0xff]
    %1398 = vset.pattern.permute.xlu0 0
    %1399 = vperm.xlu0 %1398, %v1389
    %v1400 = vpop.permute.xlu0 %1399
    %1403 = vset.pattern.permute.xlu0 0
    %1404 = vperm.xlu0 %1403, %v1390
    %v1405 = vpop.permute.xlu0 %1404
    %1408 = vset.pattern.permute.xlu0 0
    %1409 = vperm.xlu0 %1408, %v1391
    %v1410 = vpop.permute.xlu0 %1409
    %1413 = vset.pattern.permute.xlu0 0
    %1414 = vperm.xlu0 %1413, %v1392
    %v1415 = vpop.permute.xlu0 %1414
    %1418 = vset.pattern.permute.xlu0 0
    %1419 = vperm.xlu0 %1418, %v1393
    %v1420 = vpop.permute.xlu0 %1419
    %1423 = vset.pattern.permute.xlu0 0
    %1424 = vperm.xlu0 %1423, %v1394
    %v1425 = vpop.permute.xlu0 %1424
    %1428 = vset.pattern.permute.xlu0 0
    %1429 = vperm.xlu0 %1428, %v1395
    %v1430 = vpop.permute.xlu0 %1429
    %1433 = vset.pattern.permute.xlu0 0
    %1434 = vperm.xlu0 %1433, %v1396
    %v1435 = vpop.permute.xlu0 %1434
    %v1438 = vsel %vm461, %v1380, 0
    %v1441 = vsel %vm461, %v1381, 0
    %v1444 = vsel %vm461, %v1382, 0
    %v1447 = vsel %vm461, %v1383, 0
    %v1450 = vsel %vm461, %v1384, 0
    %v1453 = vsel %vm461, %v1385, 0
    %v1456 = vsel %vm461, %v1386, 0
    %v1459 = vsel %vm461, %v1387, 0
    %1461 = vmatprep.subr.mxu0 0.0
    %1462 = vmatpush1.msra.mxu0 0.0
    %1463 = vmatprep.subr.mxu0 0.0
    %1464 = vmatpush1.msra.mxu0 0.0
    %1465 = vmatprep.subr.mxu0 0.0
    %1466 = vmatpush1.msra.mxu0 0.0
    %1467 = vmatprep.subr.mxu0 0.0
    %1468 = vmatpush1.msra.mxu0 0.0
    %1469 = vmatprep.subr.mxu0 0.0
    %1470 = vmatpush1.msra.mxu0 0.0
    %1471 = vmatprep.subr.mxu0 0.0
    %1472 = vmatpush1.msra.mxu0 0.0
    %1473 = vmatprep.subr.mxu0 0.0
    %1474 = vmatpush1.msra.mxu0 0.0
    %1475 = vmatprep.subr.mxu0 0.0
    %1476 = vmatpush1.msra.mxu0 0.0
    %1477 = vmatprep.subr.mxu0 0.0
    %1478 = vmatpush1.msra.mxu0 0.0
    %1479 = vmatprep.subr.mxu0 0.0
    %1480 = vmatpush1.msra.mxu0 0.0
    %1481 = vmatprep.subr.mxu0 0.0
    %1482 = vmatpush1.msra.mxu0 0.0
    %1483 = vmatprep.subr.mxu0 0.0
    %1484 = vmatpush1.msra.mxu0 0.0
    %1485 = vmatprep.subr.mxu0 0.0
    %1486 = vmatpush1.msra.mxu0 0.0
    %1487 = vmatprep.subr.mxu0 0.0
    %1488 = vmatpush1.msra.mxu0 0.0
    %1489 = vmatprep.subr.mxu0 0.0
    %1490 = vmatpush1.msra.mxu0 0.0
    %1491 = vmatprep.subr.mxu0 %v1364
    %1492 = vmatpush1.msra.mxu0 %v1363
    %1493 = vmatprep.subr.mxu0 0.0
    %1494 = vmatpush2.msra.mxu0 0.0
    %1495 = vmatprep.subr.mxu0 0.0
    %1496 = vmatpush2.msra.mxu0 0.0
    %1497 = vmatprep.subr.mxu0 0.0
    %1498 = vmatpush2.msra.mxu0 0.0
    %1499 = vmatprep.subr.mxu0 0.0
    %1500 = vmatpush2.msra.mxu0 0.0
    %1501 = vmatprep.subr.mxu0 0.0
    %1502 = vmatpush2.msra.mxu0 0.0
    %1503 = vmatprep.subr.mxu0 0.0
    %1504 = vmatpush2.msra.mxu0 0.0
    %1505 = vmatprep.subr.mxu0 0.0
    %1506 = vmatpush2.msra.mxu0 0.0
    %1507 = vmatprep.subr.mxu0 0.0
    %1508 = vmatpush2.msra.mxu0 0.0
    %1509 = vmatprep.subr.mxu0 0.0
    %1510 = vmatpush2.msra.mxu0 0.0
    %1511 = vmatprep.subr.mxu0 0.0
    %1512 = vmatpush2.msra.mxu0 0.0
    %1513 = vmatprep.subr.mxu0 0.0
    %1514 = vmatpush2.msra.mxu0 0.0
    %1515 = vmatprep.subr.mxu0 0.0
    %1516 = vmatpush2.msra.mxu0 0.0
    %1517 = vmatprep.subr.mxu0 0.0
    %1518 = vmatpush2.msra.mxu0 0.0
    %1519 = vmatprep.subr.mxu0 0.0
    %1520 = vmatpush2.msra.mxu0 0.0
    %1521 = vmatprep.subr.mxu0 0.0
    %1522 = vmatpush2.msra.mxu0 0.0
    %1523 = vmatprep.subr.mxu0 0.0
    %1524 = vmatpush2.msra.mxu0 0.0
    %1525 = vmatprep.mubr.f32.mxu0 0.0
    %1526 = vmatmul.mubr.f32.gmra.mxu0 %v1438
    %v1527 = vpop.f32.mrf.mxu0
    %v1528 = vadd.f32 %v1400, %v1527
    %v1529 = vpop.f32.mrf.mxu0
    %v1530 = vadd.f32 %v1400, %v1529
    %1531 = vmatprep.mubr.f32.mxu0 0.0
    %1532 = vmatmul.mubr.f32.gmra.mxu0 %v1441
    %v1533 = vpop.f32.mrf.mxu0
    %v1534 = vadd.f32 %v1405, %v1533
    %v1535 = vpop.f32.mrf.mxu0
    %v1536 = vadd.f32 %v1405, %v1535
    %1537 = vmatprep.mubr.f32.mxu0 0.0
    %1538 = vmatmul.mubr.f32.gmra.mxu0 %v1444
    %v1539 = vpop.f32.mrf.mxu0
    %v1540 = vadd.f32 %v1410, %v1539
    %v1541 = vpop.f32.mrf.mxu0
    %v1542 = vadd.f32 %v1410, %v1541
    %1543 = vmatprep.mubr.f32.mxu0 0.0
    %1544 = vmatmul.mubr.f32.gmra.mxu0 %v1447
    %v1545 = vpop.f32.mrf.mxu0
    %v1546 = vadd.f32 %v1415, %v1545
    %v1547 = vpop.f32.mrf.mxu0
    %v1548 = vadd.f32 %v1415, %v1547
    %1549 = vmatprep.mubr.f32.mxu0 0.0
    %1550 = vmatmul.mubr.f32.gmra.mxu0 %v1450
    %v1551 = vpop.f32.mrf.mxu0
    %v1552 = vadd.f32 %v1420, %v1551
    %v1553 = vpop.f32.mrf.mxu0
    %v1554 = vadd.f32 %v1420, %v1553
    %1555 = vmatprep.mubr.f32.mxu0 0.0
    %1556 = vmatmul.mubr.f32.gmra.mxu0 %v1453
    %v1557 = vpop.f32.mrf.mxu0
    %v1558 = vadd.f32 %v1425, %v1557
    %v1559 = vpop.f32.mrf.mxu0
    %v1560 = vadd.f32 %v1425, %v1559
    %1561 = vmatprep.mubr.f32.mxu0 0.0
    %1562 = vmatmul.mubr.f32.gmra.mxu0 %v1456
    %v1563 = vpop.f32.mrf.mxu0
    %v1564 = vadd.f32 %v1430, %v1563
    %v1565 = vpop.f32.mrf.mxu0
    %v1566 = vadd.f32 %v1430, %v1565
    %1567 = vmatprep.mubr.f32.mxu0 0.0
    %1568 = vmatmul.mubr.f32.gmra.mxu0 %v1459
    %v1569 = vpop.f32.mrf.mxu0
    %v1570 = vadd.f32 %v1435, %v1569
    %v1571 = vpop.f32.mrf.mxu0
    %v1572 = vadd.f32 %v1435, %v1571
    %1573 = vdwg.mxu0
    %1574 = vmatprep.subr.mxu0 0.0
    %1575 = vmatpush1.msra.mxu0 0.0
    %1576 = vmatprep.subr.mxu0 0.0
    %1577 = vmatpush1.msra.mxu0 0.0
    %1578 = vmatprep.subr.mxu0 0.0
    %1579 = vmatpush1.msra.mxu0 0.0
    %1580 = vmatprep.subr.mxu0 0.0
    %1581 = vmatpush1.msra.mxu0 0.0
    %1582 = vmatprep.subr.mxu0 0.0
    %1583 = vmatpush1.msra.mxu0 0.0
    %1584 = vmatprep.subr.mxu0 0.0
    %1585 = vmatpush1.msra.mxu0 0.0
    %1586 = vmatprep.subr.mxu0 0.0
    %1587 = vmatpush1.msra.mxu0 0.0
    %1588 = vmatprep.subr.mxu0 0.0
    %1589 = vmatpush1.msra.mxu0 0.0
    %1590 = vmatprep.subr.mxu0 0.0
    %1591 = vmatpush1.msra.mxu0 0.0
    %1592 = vmatprep.subr.mxu0 0.0
    %1593 = vmatpush1.msra.mxu0 0.0
    %1594 = vmatprep.subr.mxu0 0.0
    %1595 = vmatpush1.msra.mxu0 0.0
    %1596 = vmatprep.subr.mxu0 0.0
    %1597 = vmatpush1.msra.mxu0 0.0
    %1598 = vmatprep.subr.mxu0 0.0
    %1599 = vmatpush1.msra.mxu0 0.0
    %1600 = vmatprep.subr.mxu0 0.0
    %1601 = vmatpush1.msra.mxu0 0.0
    %1602 = vmatprep.subr.mxu0 0.0
    %1603 = vmatpush1.msra.mxu0 0.0
    %1604 = vmatprep.subr.mxu0 %v1366
    %1605 = vmatpush1.msra.mxu0 %v1365
    %1606 = vmatprep.subr.mxu0 0.0
    %1607 = vmatpush2.msra.mxu0 0.0
    %1608 = vmatprep.subr.mxu0 0.0
    %1609 = vmatpush2.msra.mxu0 0.0
    %1610 = vmatprep.subr.mxu0 0.0
    %1611 = vmatpush2.msra.mxu0 0.0
    %1612 = vmatprep.subr.mxu0 0.0
    %1613 = vmatpush2.msra.mxu0 0.0
    %1614 = vmatprep.subr.mxu0 0.0
    %1615 = vmatpush2.msra.mxu0 0.0
    %1616 = vmatprep.subr.mxu0 0.0
    %1617 = vmatpush2.msra.mxu0 0.0
    %1618 = vmatprep.subr.mxu0 0.0
    %1619 = vmatpush2.msra.mxu0 0.0
    %1620 = vmatprep.subr.mxu0 0.0
    %1621 = vmatpush2.msra.mxu0 0.0
    %1622 = vmatprep.subr.mxu0 0.0
    %1623 = vmatpush2.msra.mxu0 0.0
    %1624 = vmatprep.subr.mxu0 0.0
    %1625 = vmatpush2.msra.mxu0 0.0
    %1626 = vmatprep.subr.mxu0 0.0
    %1627 = vmatpush2.msra.mxu0 0.0
    %1628 = vmatprep.subr.mxu0 0.0
    %1629 = vmatpush2.msra.mxu0 0.0
    %1630 = vmatprep.subr.mxu0 0.0
    %1631 = vmatpush2.msra.mxu0 0.0
    %1632 = vmatprep.subr.mxu0 0.0
    %1633 = vmatpush2.msra.mxu0 0.0
    %1634 = vmatprep.subr.mxu0 0.0
    %1635 = vmatpush2.msra.mxu0 0.0
    %1636 = vmatprep.subr.mxu0 0.0
    %1637 = vmatpush2.msra.mxu0 0.0
    %1638 = vmatprep.mubr.f32.mxu0 0.0
    %1639 = vmatmul.mubr.f32.gmra.mxu0 %v1438
    %v1640 = vpop.f32.mrf.mxu0
    %v1641 = vadd.f32 %v1400, %v1640
    %v1642 = vpop.f32.mrf.mxu0
    %v1643 = vadd.f32 %v1400, %v1642
    %1644 = vmatprep.mubr.f32.mxu0 0.0
    %1645 = vmatmul.mubr.f32.gmra.mxu0 %v1441
    %v1646 = vpop.f32.mrf.mxu0
    %v1647 = vadd.f32 %v1405, %v1646
    %v1648 = vpop.f32.mrf.mxu0
    %v1649 = vadd.f32 %v1405, %v1648
    %1650 = vmatprep.mubr.f32.mxu0 0.0
    %1651 = vmatmul.mubr.f32.gmra.mxu0 %v1444
    %v1652 = vpop.f32.mrf.mxu0
    %v1653 = vadd.f32 %v1410, %v1652
    %v1654 = vpop.f32.mrf.mxu0
    %v1655 = vadd.f32 %v1410, %v1654
    %1656 = vmatprep.mubr.f32.mxu0 0.0
    %1657 = vmatmul.mubr.f32.gmra.mxu0 %v1447
    %v1658 = vpop.f32.mrf.mxu0
    %v1659 = vadd.f32 %v1415, %v1658
    %v1660 = vpop.f32.mrf.mxu0
    %v1661 = vadd.f32 %v1415, %v1660
    %1662 = vmatprep.mubr.f32.mxu0 0.0
    %1663 = vmatmul.mubr.f32.gmra.mxu0 %v1450
    %v1664 = vpop.f32.mrf.mxu0
    %v1665 = vadd.f32 %v1420, %v1664
    %v1666 = vpop.f32.mrf.mxu0
    %v1667 = vadd.f32 %v1420, %v1666
    %1668 = vmatprep.mubr.f32.mxu0 0.0
    %1669 = vmatmul.mubr.f32.gmra.mxu0 %v1453
    %v1670 = vpop.f32.mrf.mxu0
    %v1671 = vadd.f32 %v1425, %v1670
    %v1672 = vpop.f32.mrf.mxu0
    %v1673 = vadd.f32 %v1425, %v1672
    %1674 = vmatprep.mubr.f32.mxu0 0.0
    %1675 = vmatmul.mubr.f32.gmra.mxu0 %v1456
    %v1676 = vpop.f32.mrf.mxu0
    %v1677 = vadd.f32 %v1430, %v1676
    %v1678 = vpop.f32.mrf.mxu0
    %v1679 = vadd.f32 %v1430, %v1678
    %1680 = vmatprep.mubr.f32.mxu0 0.0
    %1681 = vmatmul.mubr.f32.gmra.mxu0 %v1459
    %v1682 = vpop.f32.mrf.mxu0
    %v1683 = vadd.f32 %v1435, %v1682
    %v1684 = vpop.f32.mrf.mxu0
    %v1685 = vadd.f32 %v1435, %v1684
    %1686 = vdwg.mxu0
    %1687 = vmatprep.subr.mxu0 0.0
    %1688 = vmatpush1.msra.mxu0 0.0
    %1689 = vmatprep.subr.mxu0 0.0
    %1690 = vmatpush1.msra.mxu0 0.0
    %1691 = vmatprep.subr.mxu0 0.0
    %1692 = vmatpush1.msra.mxu0 0.0
    %1693 = vmatprep.subr.mxu0 0.0
    %1694 = vmatpush1.msra.mxu0 0.0
    %1695 = vmatprep.subr.mxu0 0.0
    %1696 = vmatpush1.msra.mxu0 0.0
    %1697 = vmatprep.subr.mxu0 0.0
    %1698 = vmatpush1.msra.mxu0 0.0
    %1699 = vmatprep.subr.mxu0 0.0
    %1700 = vmatpush1.msra.mxu0 0.0
    %1701 = vmatprep.subr.mxu0 0.0
    %1702 = vmatpush1.msra.mxu0 0.0
    %1703 = vmatprep.subr.mxu0 0.0
    %1704 = vmatpush1.msra.mxu0 0.0
    %1705 = vmatprep.subr.mxu0 0.0
    %1706 = vmatpush1.msra.mxu0 0.0
    %1707 = vmatprep.subr.mxu0 0.0
    %1708 = vmatpush1.msra.mxu0 0.0
    %1709 = vmatprep.subr.mxu0 0.0
    %1710 = vmatpush1.msra.mxu0 0.0
    %1711 = vmatprep.subr.mxu0 0.0
    %1712 = vmatpush1.msra.mxu0 0.0
    %1713 = vmatprep.subr.mxu0 0.0
    %1714 = vmatpush1.msra.mxu0 0.0
    %1715 = vmatprep.subr.mxu0 0.0
    %1716 = vmatpush1.msra.mxu0 0.0
    %1717 = vmatprep.subr.mxu0 %v1368
    %1718 = vmatpush1.msra.mxu0 %v1367
    %1719 = vmatprep.subr.mxu0 0.0
    %1720 = vmatpush2.msra.mxu0 0.0
    %1721 = vmatprep.subr.mxu0 0.0
    %1722 = vmatpush2.msra.mxu0 0.0
    %1723 = vmatprep.subr.mxu0 0.0
    %1724 = vmatpush2.msra.mxu0 0.0
    %1725 = vmatprep.subr.mxu0 0.0
    %1726 = vmatpush2.msra.mxu0 0.0
    %1727 = vmatprep.subr.mxu0 0.0
    %1728 = vmatpush2.msra.mxu0 0.0
    %1729 = vmatprep.subr.mxu0 0.0
    %1730 = vmatpush2.msra.mxu0 0.0
    %1731 = vmatprep.subr.mxu0 0.0
    %1732 = vmatpush2.msra.mxu0 0.0
    %1733 = vmatprep.subr.mxu0 0.0
    %1734 = vmatpush2.msra.mxu0 0.0
    %1735 = vmatprep.subr.mxu0 0.0
    %1736 = vmatpush2.msra.mxu0 0.0
    %1737 = vmatprep.subr.mxu0 0.0
    %1738 = vmatpush2.msra.mxu0 0.0
    %1739 = vmatprep.subr.mxu0 0.0
    %1740 = vmatpush2.msra.mxu0 0.0
    %1741 = vmatprep.subr.mxu0 0.0
    %1742 = vmatpush2.msra.mxu0 0.0
    %1743 = vmatprep.subr.mxu0 0.0
    %1744 = vmatpush2.msra.mxu0 0.0
    %1745 = vmatprep.subr.mxu0 0.0
    %1746 = vmatpush2.msra.mxu0 0.0
    %1747 = vmatprep.subr.mxu0 0.0
    %1748 = vmatpush2.msra.mxu0 0.0
    %1749 = vmatprep.subr.mxu0 0.0
    %1750 = vmatpush2.msra.mxu0 0.0
    %1751 = vmatprep.mubr.f32.mxu0 0.0
    %1752 = vmatmul.mubr.f32.gmra.mxu0 %v1438
    %v1753 = vpop.f32.mrf.mxu0
    %v1754 = vadd.f32 %v1400, %v1753
    %v1755 = vpop.f32.mrf.mxu0
    %v1756 = vadd.f32 %v1400, %v1755
    %1757 = vmatprep.mubr.f32.mxu0 0.0
    %1758 = vmatmul.mubr.f32.gmra.mxu0 %v1441
    %v1759 = vpop.f32.mrf.mxu0
    %v1760 = vadd.f32 %v1405, %v1759
    %v1761 = vpop.f32.mrf.mxu0
    %v1762 = vadd.f32 %v1405, %v1761
    %1763 = vmatprep.mubr.f32.mxu0 0.0
    %1764 = vmatmul.mubr.f32.gmra.mxu0 %v1444
    %v1765 = vpop.f32.mrf.mxu0
    %v1766 = vadd.f32 %v1410, %v1765
    %v1767 = vpop.f32.mrf.mxu0
    %v1768 = vadd.f32 %v1410, %v1767
    %1769 = vmatprep.mubr.f32.mxu0 0.0
    %1770 = vmatmul.mubr.f32.gmra.mxu0 %v1447
    %v1771 = vpop.f32.mrf.mxu0
    %v1772 = vadd.f32 %v1415, %v1771
    %v1773 = vpop.f32.mrf.mxu0
    %v1774 = vadd.f32 %v1415, %v1773
    %1775 = vmatprep.mubr.f32.mxu0 0.0
    %1776 = vmatmul.mubr.f32.gmra.mxu0 %v1450
    %v1777 = vpop.f32.mrf.mxu0
    %v1778 = vadd.f32 %v1420, %v1777
    %v1779 = vpop.f32.mrf.mxu0
    %v1780 = vadd.f32 %v1420, %v1779
    %1781 = vmatprep.mubr.f32.mxu0 0.0
    %1782 = vmatmul.mubr.f32.gmra.mxu0 %v1453
    %v1783 = vpop.f32.mrf.mxu0
    %v1784 = vadd.f32 %v1425, %v1783
    %v1785 = vpop.f32.mrf.mxu0
    %v1786 = vadd.f32 %v1425, %v1785
    %1787 = vmatprep.mubr.f32.mxu0 0.0
    %1788 = vmatmul.mubr.f32.gmra.mxu0 %v1456
    %v1789 = vpop.f32.mrf.mxu0
    %v1790 = vadd.f32 %v1430, %v1789
    %v1791 = vpop.f32.mrf.mxu0
    %v1792 = vadd.f32 %v1430, %v1791
    %1793 = vmatprep.mubr.f32.mxu0 0.0
    %1794 = vmatmul.mubr.f32.gmra.mxu0 %v1459
    %v1795 = vpop.f32.mrf.mxu0
    %v1796 = vadd.f32 %v1435, %v1795
    %v1797 = vpop.f32.mrf.mxu0
    %v1798 = vadd.f32 %v1435, %v1797
    %1799 = vdwg.mxu0
    %1800 = vmatprep.subr.mxu0 0.0
    %1801 = vmatpush1.msra.mxu0 0.0
    %1802 = vmatprep.subr.mxu0 0.0
    %1803 = vmatpush1.msra.mxu0 0.0
    %1804 = vmatprep.subr.mxu0 0.0
    %1805 = vmatpush1.msra.mxu0 0.0
    %1806 = vmatprep.subr.mxu0 0.0
    %1807 = vmatpush1.msra.mxu0 0.0
    %1808 = vmatprep.subr.mxu0 0.0
    %1809 = vmatpush1.msra.mxu0 0.0
    %1810 = vmatprep.subr.mxu0 0.0
    %1811 = vmatpush1.msra.mxu0 0.0
    %1812 = vmatprep.subr.mxu0 0.0
    %1813 = vmatpush1.msra.mxu0 0.0
    %1814 = vmatprep.subr.mxu0 0.0
    %1815 = vmatpush1.msra.mxu0 0.0
    %1816 = vmatprep.subr.mxu0 0.0
    %1817 = vmatpush1.msra.mxu0 0.0
    %1818 = vmatprep.subr.mxu0 0.0
    %1819 = vmatpush1.msra.mxu0 0.0
    %1820 = vmatprep.subr.mxu0 0.0
    %1821 = vmatpush1.msra.mxu0 0.0
    %1822 = vmatprep.subr.mxu0 0.0
    %1823 = vmatpush1.msra.mxu0 0.0
    %1824 = vmatprep.subr.mxu0 0.0
    %1825 = vmatpush1.msra.mxu0 0.0
    %1826 = vmatprep.subr.mxu0 0.0
    %1827 = vmatpush1.msra.mxu0 0.0
    %1828 = vmatprep.subr.mxu0 0.0
    %1829 = vmatpush1.msra.mxu0 0.0
    %1830 = vmatprep.subr.mxu0 %v1370
    %1831 = vmatpush1.msra.mxu0 %v1369
    %1832 = vmatprep.subr.mxu0 0.0
    %1833 = vmatpush2.msra.mxu0 0.0
    %1834 = vmatprep.subr.mxu0 0.0
    %1835 = vmatpush2.msra.mxu0 0.0
    %1836 = vmatprep.subr.mxu0 0.0
    %1837 = vmatpush2.msra.mxu0 0.0
    %1838 = vmatprep.subr.mxu0 0.0
    %1839 = vmatpush2.msra.mxu0 0.0
    %1840 = vmatprep.subr.mxu0 0.0
    %1841 = vmatpush2.msra.mxu0 0.0
    %1842 = vmatprep.subr.mxu0 0.0
    %1843 = vmatpush2.msra.mxu0 0.0
    %1844 = vmatprep.subr.mxu0 0.0
    %1845 = vmatpush2.msra.mxu0 0.0
    %1846 = vmatprep.subr.mxu0 0.0
    %1847 = vmatpush2.msra.mxu0 0.0
    %1848 = vmatprep.subr.mxu0 0.0
    %1849 = vmatpush2.msra.mxu0 0.0
    %1850 = vmatprep.subr.mxu0 0.0
    %1851 = vmatpush2.msra.mxu0 0.0
    %1852 = vmatprep.subr.mxu0 0.0
    %1853 = vmatpush2.msra.mxu0 0.0
    %1854 = vmatprep.subr.mxu0 0.0
    %1855 = vmatpush2.msra.mxu0 0.0
    %1856 = vmatprep.subr.mxu0 0.0
    %1857 = vmatpush2.msra.mxu0 0.0
    %1858 = vmatprep.subr.mxu0 0.0
    %1859 = vmatpush2.msra.mxu0 0.0
    %1860 = vmatprep.subr.mxu0 0.0
    %1861 = vmatpush2.msra.mxu0 0.0
    %1862 = vmatprep.subr.mxu0 0.0
    %1863 = vmatpush2.msra.mxu0 0.0
    %1864 = vmatprep.mubr.f32.mxu0 0.0
    %1865 = vmatmul.mubr.f32.gmra.mxu0 %v1438
    %v1866 = vpop.f32.mrf.mxu0
    %v1867 = vadd.f32 %v1400, %v1866
    %v1868 = vpop.f32.mrf.mxu0
    %v1869 = vadd.f32 %v1400, %v1868
    %1870 = vmatprep.mubr.f32.mxu0 0.0
    %1871 = vmatmul.mubr.f32.gmra.mxu0 %v1441
    %v1872 = vpop.f32.mrf.mxu0
    %v1873 = vadd.f32 %v1405, %v1872
    %v1874 = vpop.f32.mrf.mxu0
    %v1875 = vadd.f32 %v1405, %v1874
    %1876 = vmatprep.mubr.f32.mxu0 0.0
    %1877 = vmatmul.mubr.f32.gmra.mxu0 %v1444
    %v1878 = vpop.f32.mrf.mxu0
    %v1879 = vadd.f32 %v1410, %v1878
    %v1880 = vpop.f32.mrf.mxu0
    %v1881 = vadd.f32 %v1410, %v1880
    %1882 = vmatprep.mubr.f32.mxu0 0.0
    %1883 = vmatmul.mubr.f32.gmra.mxu0 %v1447
    %v1884 = vpop.f32.mrf.mxu0
    %v1885 = vadd.f32 %v1415, %v1884
    %v1886 = vpop.f32.mrf.mxu0
    %v1887 = vadd.f32 %v1415, %v1886
    %1888 = vmatprep.mubr.f32.mxu0 0.0
    %1889 = vmatmul.mubr.f32.gmra.mxu0 %v1450
    %v1890 = vpop.f32.mrf.mxu0
    %v1891 = vadd.f32 %v1420, %v1890
    %v1892 = vpop.f32.mrf.mxu0
    %v1893 = vadd.f32 %v1420, %v1892
    %1894 = vmatprep.mubr.f32.mxu0 0.0
    %1895 = vmatmul.mubr.f32.gmra.mxu0 %v1453
    %v1896 = vpop.f32.mrf.mxu0
    %v1897 = vadd.f32 %v1425, %v1896
    %v1898 = vpop.f32.mrf.mxu0
    %v1899 = vadd.f32 %v1425, %v1898
    %1900 = vmatprep.mubr.f32.mxu0 0.0
    %1901 = vmatmul.mubr.f32.gmra.mxu0 %v1456
    %v1902 = vpop.f32.mrf.mxu0
    %v1903 = vadd.f32 %v1430, %v1902
    %v1904 = vpop.f32.mrf.mxu0
    %v1905 = vadd.f32 %v1430, %v1904
    %1906 = vmatprep.mubr.f32.mxu0 0.0
    %1907 = vmatmul.mubr.f32.gmra.mxu0 %v1459
    %v1908 = vpop.f32.mrf.mxu0
    %v1909 = vadd.f32 %v1435, %v1908
    %v1910 = vpop.f32.mrf.mxu0
    %v1911 = vadd.f32 %v1435, %v1910
    %1912 = vdwg.mxu0
    %v1913 = vtanh.pop %v1528
    %v1914 = vtanh.pop %v1530
    %v1915 = vtanh.pop %v1641
    %v1916 = vtanh.pop %v1643
    %v1917 = vtanh.pop %v1754
    %v1918 = vtanh.pop %v1756
    %v1919 = vtanh.pop %v1867
    %v1920 = vtanh.pop %v1869
    %v1921 = vtanh.pop %v1534
    %v1922 = vtanh.pop %v1536
    %v1923 = vtanh.pop %v1647
    %v1924 = vtanh.pop %v1649
    %v1925 = vtanh.pop %v1760
    %v1926 = vtanh.pop %v1762
    %v1927 = vtanh.pop %v1873
    %v1928 = vtanh.pop %v1875
    %v1929 = vtanh.pop %v1540
    %v1930 = vtanh.pop %v1542
    %v1931 = vtanh.pop %v1653
    %v1932 = vtanh.pop %v1655
    %v1933 = vtanh.pop %v1766
    %v1934 = vtanh.pop %v1768
    %v1935 = vtanh.pop %v1879
    %v1936 = vtanh.pop %v1881
    %v1937 = vtanh.pop %v1546
    %v1938 = vtanh.pop %v1548
    %v1939 = vtanh.pop %v1659
    %v1940 = vtanh.pop %v1661
    %v1941 = vtanh.pop %v1772
    %v1942 = vtanh.pop %v1774
    %v1943 = vtanh.pop %v1885
    %v1944 = vtanh.pop %v1887
    %v1945 = vtanh.pop %v1552
    %v1946 = vtanh.pop %v1554
    %v1947 = vtanh.pop %v1665
    %v1948 = vtanh.pop %v1667
    %v1949 = vtanh.pop %v1778
    %v1950 = vtanh.pop %v1780
    %v1951 = vtanh.pop %v1891
    %v1952 = vtanh.pop %v1893
    %v1953 = vtanh.pop %v1558
    %v1954 = vtanh.pop %v1560
    %v1955 = vtanh.pop %v1671
    %v1956 = vtanh.pop %v1673
    %v1957 = vtanh.pop %v1784
    %v1958 = vtanh.pop %v1786
    %v1959 = vtanh.pop %v1897
    %v1960 = vtanh.pop %v1899
    %v1961 = vtanh.pop %v1564
    %v1962 = vtanh.pop %v1566
    %v1963 = vtanh.pop %v1677
    %v1964 = vtanh.pop %v1679
    %v1965 = vtanh.pop %v1790
    %v1966 = vtanh.pop %v1792
    %v1967 = vtanh.pop %v1903
    %v1968 = vtanh.pop %v1905
    %v1969 = vtanh.pop %v1570
    %v1970 = vtanh.pop %v1572
    %v1971 = vtanh.pop %v1683
    %v1972 = vtanh.pop %v1685
    %v1973 = vtanh.pop %v1796
    %v1974 = vtanh.pop %v1798
    %v1975 = vtanh.pop %v1909
    %v1976 = vtanh.pop %v1911
    %s1977 = scalar_lea.vmem %s3, 16
    %v1978 = vld [vmem:[%s1977] sm:$0xff]
    %v1979 = vld [vmem:[%s1977 + $0x8] sm:$0xff]
    %s1980 = scalar_lea.vmem %s4, 16
    %v1981 = vld [vmem:[%s1980] sm:$0xff]
    %v1982 = vld [vmem:[%s1980 + $0x8] sm:$0xff]
    %1984 = vset.pattern.permute.xlu0 0
    %1985 = vperm.xlu0 %1984, %v1981
    %v1986 = vpop.permute.xlu0 %1985
    %1989 = vset.pattern.permute.xlu0 0
    %1990 = vperm.xlu0 %1989, %v1982
    %v1991 = vpop.permute.xlu0 %1990
    %v1994 = vsel %vm1016, %v1978, 0
    %v1997 = vsel %vm1016, %v1979, 0
    %1999 = vmatprep.subr.mxu0 0.0
    %2000 = vmatpush1.msra.mxu0 0.0
    %2001 = vmatprep.subr.mxu0 0.0
    %2002 = vmatpush1.msra.mxu0 0.0
    %2003 = vmatprep.subr.mxu0 0.0
    %2004 = vmatpush1.msra.mxu0 0.0
    %2005 = vmatprep.subr.mxu0 0.0
    %2006 = vmatpush1.msra.mxu0 0.0
    %2007 = vmatprep.subr.mxu0 0.0
    %2008 = vmatpush1.msra.mxu0 0.0
    %2009 = vmatprep.subr.mxu0 0.0
    %2010 = vmatpush1.msra.mxu0 0.0
    %2011 = vmatprep.subr.mxu0 0.0
    %2012 = vmatpush1.msra.mxu0 0.0
    %2013 = vmatprep.subr.mxu0 0.0
    %2014 = vmatpush1.msra.mxu0 0.0
    %2015 = vmatprep.subr.mxu0 %v1970
    %2016 = vmatpush1.msra.mxu0 %v1969
    %2017 = vmatprep.subr.mxu0 %v1962
    %2018 = vmatpush1.msra.mxu0 %v1961
    %2019 = vmatprep.subr.mxu0 %v1954
    %2020 = vmatpush1.msra.mxu0 %v1953
    %2021 = vmatprep.subr.mxu0 %v1946
    %2022 = vmatpush1.msra.mxu0 %v1945
    %2023 = vmatprep.subr.mxu0 %v1938
    %2024 = vmatpush1.msra.mxu0 %v1937
    %2025 = vmatprep.subr.mxu0 %v1930
    %2026 = vmatpush1.msra.mxu0 %v1929
    %2027 = vmatprep.subr.mxu0 %v1922
    %2028 = vmatpush1.msra.mxu0 %v1921
    %2029 = vmatprep.subr.mxu0 %v1914
    %2030 = vmatpush1.msra.mxu0 %v1913
    %2031 = vmatprep.subr.mxu0 0.0
    %2032 = vmatpush2.msra.mxu0 0.0
    %2033 = vmatprep.subr.mxu0 0.0
    %2034 = vmatpush2.msra.mxu0 0.0
    %2035 = vmatprep.subr.mxu0 0.0
    %2036 = vmatpush2.msra.mxu0 0.0
    %2037 = vmatprep.subr.mxu0 0.0
    %2038 = vmatpush2.msra.mxu0 0.0
    %2039 = vmatprep.subr.mxu0 0.0
    %2040 = vmatpush2.msra.mxu0 0.0
    %2041 = vmatprep.subr.mxu0 0.0
    %2042 = vmatpush2.msra.mxu0 0.0
    %2043 = vmatprep.subr.mxu0 0.0
    %2044 = vmatpush2.msra.mxu0 0.0
    %2045 = vmatprep.subr.mxu0 0.0
    %2046 = vmatpush2.msra.mxu0 0.0
    %2047 = vmatprep.subr.mxu0 0.0
    %2048 = vmatpush2.msra.mxu0 0.0
    %2049 = vmatprep.subr.mxu0 0.0
    %2050 = vmatpush2.msra.mxu0 0.0
    %2051 = vmatprep.subr.mxu0 0.0
    %2052 = vmatpush2.msra.mxu0 0.0
    %2053 = vmatprep.subr.mxu0 0.0
    %2054 = vmatpush2.msra.mxu0 0.0
    %2055 = vmatprep.subr.mxu0 0.0
    %2056 = vmatpush2.msra.mxu0 0.0
    %2057 = vmatprep.subr.mxu0 0.0
    %2058 = vmatpush2.msra.mxu0 0.0
    %2059 = vmatprep.subr.mxu0 0.0
    %2060 = vmatpush2.msra.mxu0 0.0
    %2061 = vmatprep.subr.mxu0 0.0
    %2062 = vmatpush2.msra.mxu0 0.0
    %2063 = vmatprep.mubr.f32.mxu0 0.0
    %2064 = vmatmul.mubr.f32.gmra.mxu0 %v1994
    %v2065 = vpop.f32.mrf.mxu0
    %v2066 = vadd.f32 %v1986, %v2065
    %v2067 = vpop.f32.mrf.mxu0
    %v2068 = vadd.f32 %v1986, %v2067
    %2069 = vmatprep.mubr.f32.mxu0 0.0
    %2070 = vmatmul.mubr.f32.gmra.mxu0 %v1997
    %v2071 = vpop.f32.mrf.mxu0
    %v2072 = vadd.f32 %v1991, %v2071
    %v2073 = vpop.f32.mrf.mxu0
    %v2074 = vadd.f32 %v1991, %v2073
    %2075 = vdwg.mxu0
    %2076 = vmatprep.subr.mxu0 0.0
    %2077 = vmatpush1.msra.mxu0 0.0
    %2078 = vmatprep.subr.mxu0 0.0
    %2079 = vmatpush1.msra.mxu0 0.0
    %2080 = vmatprep.subr.mxu0 0.0
    %2081 = vmatpush1.msra.mxu0 0.0
    %2082 = vmatprep.subr.mxu0 0.0
    %2083 = vmatpush1.msra.mxu0 0.0
    %2084 = vmatprep.subr.mxu0 0.0
    %2085 = vmatpush1.msra.mxu0 0.0
    %2086 = vmatprep.subr.mxu0 0.0
    %2087 = vmatpush1.msra.mxu0 0.0
    %2088 = vmatprep.subr.mxu0 0.0
    %2089 = vmatpush1.msra.mxu0 0.0
    %2090 = vmatprep.subr.mxu0 0.0
    %2091 = vmatpush1.msra.mxu0 0.0
    %2092 = vmatprep.subr.mxu0 %v1972
    %2093 = vmatpush1.msra.mxu0 %v1971
    %2094 = vmatprep.subr.mxu0 %v1964
    %2095 = vmatpush1.msra.mxu0 %v1963
    %2096 = vmatprep.subr.mxu0 %v1956
    %2097 = vmatpush1.msra.mxu0 %v1955
    %2098 = vmatprep.subr.mxu0 %v1948
    %2099 = vmatpush1.msra.mxu0 %v1947
    %2100 = vmatprep.subr.mxu0 %v1940
    %2101 = vmatpush1.msra.mxu0 %v1939
    %2102 = vmatprep.subr.mxu0 %v1932
    %2103 = vmatpush1.msra.mxu0 %v1931
    %2104 = vmatprep.subr.mxu0 %v1924
    %2105 = vmatpush1.msra.mxu0 %v1923
    %2106 = vmatprep.subr.mxu0 %v1916
    %2107 = vmatpush1.msra.mxu0 %v1915
    %2108 = vmatprep.subr.mxu0 0.0
    %2109 = vmatpush2.msra.mxu0 0.0
    %2110 = vmatprep.subr.mxu0 0.0
    %2111 = vmatpush2.msra.mxu0 0.0
    %2112 = vmatprep.subr.mxu0 0.0
    %2113 = vmatpush2.msra.mxu0 0.0
    %2114 = vmatprep.subr.mxu0 0.0
    %2115 = vmatpush2.msra.mxu0 0.0
    %2116 = vmatprep.subr.mxu0 0.0
    %2117 = vmatpush2.msra.mxu0 0.0
    %2118 = vmatprep.subr.mxu0 0.0
    %2119 = vmatpush2.msra.mxu0 0.0
    %2120 = vmatprep.subr.mxu0 0.0
    %2121 = vmatpush2.msra.mxu0 0.0
    %2122 = vmatprep.subr.mxu0 0.0
    %2123 = vmatpush2.msra.mxu0 0.0
    %2124 = vmatprep.subr.mxu0 0.0
    %2125 = vmatpush2.msra.mxu0 0.0
    %2126 = vmatprep.subr.mxu0 0.0
    %2127 = vmatpush2.msra.mxu0 0.0
    %2128 = vmatprep.subr.mxu0 0.0
    %2129 = vmatpush2.msra.mxu0 0.0
    %2130 = vmatprep.subr.mxu0 0.0
    %2131 = vmatpush2.msra.mxu0 0.0
    %2132 = vmatprep.subr.mxu0 0.0
    %2133 = vmatpush2.msra.mxu0 0.0
    %2134 = vmatprep.subr.mxu0 0.0
    %2135 = vmatpush2.msra.mxu0 0.0
    %2136 = vmatprep.subr.mxu0 0.0
    %2137 = vmatpush2.msra.mxu0 0.0
    %2138 = vmatprep.subr.mxu0 0.0
    %2139 = vmatpush2.msra.mxu0 0.0
    %2140 = vmatprep.mubr.f32.mxu0 0.0
    %2141 = vmatmul.mubr.f32.gmra.mxu0 %v1994
    %v2142 = vpop.f32.mrf.mxu0
    %v2143 = vadd.f32 %v1986, %v2142
    %v2144 = vpop.f32.mrf.mxu0
    %v2145 = vadd.f32 %v1986, %v2144
    %2146 = vmatprep.mubr.f32.mxu0 0.0
    %2147 = vmatmul.mubr.f32.gmra.mxu0 %v1997
    %v2148 = vpop.f32.mrf.mxu0
    %v2149 = vadd.f32 %v1991, %v2148
    %v2150 = vpop.f32.mrf.mxu0
    %v2151 = vadd.f32 %v1991, %v2150
    %2152 = vdwg.mxu0
    %2153 = vmatprep.subr.mxu0 0.0
    %2154 = vmatpush1.msra.mxu0 0.0
    %2155 = vmatprep.subr.mxu0 0.0
    %2156 = vmatpush1.msra.mxu0 0.0
    %2157 = vmatprep.subr.mxu0 0.0
    %2158 = vmatpush1.msra.mxu0 0.0
    %2159 = vmatprep.subr.mxu0 0.0
    %2160 = vmatpush1.msra.mxu0 0.0
    %2161 = vmatprep.subr.mxu0 0.0
    %2162 = vmatpush1.msra.mxu0 0.0
    %2163 = vmatprep.subr.mxu0 0.0
    %2164 = vmatpush1.msra.mxu0 0.0
    %2165 = vmatprep.subr.mxu0 0.0
    %2166 = vmatpush1.msra.mxu0 0.0
    %2167 = vmatprep.subr.mxu0 0.0
    %2168 = vmatpush1.msra.mxu0 0.0
    %2169 = vmatprep.subr.mxu0 %v1974
    %2170 = vmatpush1.msra.mxu0 %v1973
    %2171 = vmatprep.subr.mxu0 %v1966
    %2172 = vmatpush1.msra.mxu0 %v1965
    %2173 = vmatprep.subr.mxu0 %v1958
    %2174 = vmatpush1.msra.mxu0 %v1957
    %2175 = vmatprep.subr.mxu0 %v1950
    %2176 = vmatpush1.msra.mxu0 %v1949
    %2177 = vmatprep.subr.mxu0 %v1942
    %2178 = vmatpush1.msra.mxu0 %v1941
    %2179 = vmatprep.subr.mxu0 %v1934
    %2180 = vmatpush1.msra.mxu0 %v1933
    %2181 = vmatprep.subr.mxu0 %v1926
    %2182 = vmatpush1.msra.mxu0 %v1925
    %2183 = vmatprep.subr.mxu0 %v1918
    %2184 = vmatpush1.msra.mxu0 %v1917
    %2185 = vmatprep.subr.mxu0 0.0
    %2186 = vmatpush2.msra.mxu0 0.0
    %2187 = vmatprep.subr.mxu0 0.0
    %2188 = vmatpush2.msra.mxu0 0.0
    %2189 = vmatprep.subr.mxu0 0.0
    %2190 = vmatpush2.msra.mxu0 0.0
    %2191 = vmatprep.subr.mxu0 0.0
    %2192 = vmatpush2.msra.mxu0 0.0
    %2193 = vmatprep.subr.mxu0 0.0
    %2194 = vmatpush2.msra.mxu0 0.0
    %2195 = vmatprep.subr.mxu0 0.0
    %2196 = vmatpush2.msra.mxu0 0.0
    %2197 = vmatprep.subr.mxu0 0.0
    %2198 = vmatpush2.msra.mxu0 0.0
    %2199 = vmatprep.subr.mxu0 0.0
    %2200 = vmatpush2.msra.mxu0 0.0
    %2201 = vmatprep.subr.mxu0 0.0
    %2202 = vmatpush2.msra.mxu0 0.0
    %2203 = vmatprep.subr.mxu0 0.0
    %2204 = vmatpush2.msra.mxu0 0.0
    %2205 = vmatprep.subr.mxu0 0.0
    %2206 = vmatpush2.msra.mxu0 0.0
    %2207 = vmatprep.subr.mxu0 0.0
    %2208 = vmatpush2.msra.mxu0 0.0
    %2209 = vmatprep.subr.mxu0 0.0
    %2210 = vmatpush2.msra.mxu0 0.0
    %2211 = vmatprep.subr.mxu0 0.0
    %2212 = vmatpush2.msra.mxu0 0.0
    %2213 = vmatprep.subr.mxu0 0.0
    %2214 = vmatpush2.msra.mxu0 0.0
    %2215 = vmatprep.subr.mxu0 0.0
    %2216 = vmatpush2.msra.mxu0 0.0
    %2217 = vmatprep.mubr.f32.mxu0 0.0
    %2218 = vmatmul.mubr.f32.gmra.mxu0 %v1994
    %v2219 = vpop.f32.mrf.mxu0
    %v2220 = vadd.f32 %v1986, %v2219
    %v2221 = vpop.f32.mrf.mxu0
    %v2222 = vadd.f32 %v1986, %v2221
    %2223 = vmatprep.mubr.f32.mxu0 0.0
    %2224 = vmatmul.mubr.f32.gmra.mxu0 %v1997
    %v2225 = vpop.f32.mrf.mxu0
    %v2226 = vadd.f32 %v1991, %v2225
    %v2227 = vpop.f32.mrf.mxu0
    %v2228 = vadd.f32 %v1991, %v2227
    %2229 = vdwg.mxu0
    %2230 = vmatprep.subr.mxu0 0.0
    %2231 = vmatpush1.msra.mxu0 0.0
    %2232 = vmatprep.subr.mxu0 0.0
    %2233 = vmatpush1.msra.mxu0 0.0
    %2234 = vmatprep.subr.mxu0 0.0
    %2235 = vmatpush1.msra.mxu0 0.0
    %2236 = vmatprep.subr.mxu0 0.0
    %2237 = vmatpush1.msra.mxu0 0.0
    %2238 = vmatprep.subr.mxu0 0.0
    %2239 = vmatpush1.msra.mxu0 0.0
    %2240 = vmatprep.subr.mxu0 0.0
    %2241 = vmatpush1.msra.mxu0 0.0
    %2242 = vmatprep.subr.mxu0 0.0
    %2243 = vmatpush1.msra.mxu0 0.0
    %2244 = vmatprep.subr.mxu0 0.0
    %2245 = vmatpush1.msra.mxu0 0.0
    %2246 = vmatprep.subr.mxu0 %v1976
    %2247 = vmatpush1.msra.mxu0 %v1975
    %2248 = vmatprep.subr.mxu0 %v1968
    %2249 = vmatpush1.msra.mxu0 %v1967
    %2250 = vmatprep.subr.mxu0 %v1960
    %2251 = vmatpush1.msra.mxu0 %v1959
    %2252 = vmatprep.subr.mxu0 %v1952
    %2253 = vmatpush1.msra.mxu0 %v1951
    %2254 = vmatprep.subr.mxu0 %v1944
    %2255 = vmatpush1.msra.mxu0 %v1943
    %2256 = vmatprep.subr.mxu0 %v1936
    %2257 = vmatpush1.msra.mxu0 %v1935
    %2258 = vmatprep.subr.mxu0 %v1928
    %2259 = vmatpush1.msra.mxu0 %v1927
    %2260 = vmatprep.subr.mxu0 %v1920
    %2261 = vmatpush1.msra.mxu0 %v1919
    %2262 = vmatprep.subr.mxu0 0.0
    %2263 = vmatpush2.msra.mxu0 0.0
    %2264 = vmatprep.subr.mxu0 0.0
    %2265 = vmatpush2.msra.mxu0 0.0
    %2266 = vmatprep.subr.mxu0 0.0
    %2267 = vmatpush2.msra.mxu0 0.0
    %2268 = vmatprep.subr.mxu0 0.0
    %2269 = vmatpush2.msra.mxu0 0.0
    %2270 = vmatprep.subr.mxu0 0.0
    %2271 = vmatpush2.msra.mxu0 0.0
    %2272 = vmatprep.subr.mxu0 0.0
    %2273 = vmatpush2.msra.mxu0 0.0
    %2274 = vmatprep.subr.mxu0 0.0
    %2275 = vmatpush2.msra.mxu0 0.0
    %2276 = vmatprep.subr.mxu0 0.0
    %2277 = vmatpush2.msra.mxu0 0.0
    %2278 = vmatprep.subr.mxu0 0.0
    %2279 = vmatpush2.msra.mxu0 0.0
    %2280 = vmatprep.subr.mxu0 0.0
    %2281 = vmatpush2.msra.mxu0 0.0
    %2282 = vmatprep.subr.mxu0 0.0
    %2283 = vmatpush2.msra.mxu0 0.0
    %2284 = vmatprep.subr.mxu0 0.0
    %2285 = vmatpush2.msra.mxu0 0.0
    %2286 = vmatprep.subr.mxu0 0.0
    %2287 = vmatpush2.msra.mxu0 0.0
    %2288 = vmatprep.subr.mxu0 0.0
    %2289 = vmatpush2.msra.mxu0 0.0
    %2290 = vmatprep.subr.mxu0 0.0
    %2291 = vmatpush2.msra.mxu0 0.0
    %2292 = vmatprep.subr.mxu0 0.0
    %2293 = vmatpush2.msra.mxu0 0.0
    %2294 = vmatprep.mubr.f32.mxu0 0.0
    %2295 = vmatmul.mubr.f32.gmra.mxu0 %v1994
    %v2296 = vpop.f32.mrf.mxu0
    %v2297 = vadd.f32 %v1986, %v2296
    %v2298 = vpop.f32.mrf.mxu0
    %v2299 = vadd.f32 %v1986, %v2298
    %2300 = vmatprep.mubr.f32.mxu0 0.0
    %2301 = vmatmul.mubr.f32.gmra.mxu0 %v1997
    %v2302 = vpop.f32.mrf.mxu0
    %v2303 = vadd.f32 %v1991, %v2302
    %v2304 = vpop.f32.mrf.mxu0
    %v2305 = vadd.f32 %v1991, %v2304
    %2306 = vdwg.mxu0
    %v2307 = vsub.f32 %v165, %v2066
    %v2308 = vsub.f32 %v197, %v2068
    %v2309 = vsub.f32 %v229, %v2143
    %v2310 = vsub.f32 %v261, %v2145
    %v2311 = vsub.f32 %v293, %v2220
    %v2312 = vsub.f32 %v325, %v2222
    %v2313 = vsub.f32 %v357, %v2297
    %v2314 = vsub.f32 %v389, %v2299
    %v2315 = vsub.f32 0.0, %v2072
    %v2316 = vsub.f32 0.0, %v2074
    %v2317 = vsub.f32 0.0, %v2149
    %v2318 = vsub.f32 0.0, %v2151
    %v2319 = vsub.f32 0.0, %v2226
    %v2320 = vsub.f32 0.0, %v2228
    %v2321 = vsub.f32 0.0, %v2303
    %v2322 = vsub.f32 0.0, %v2305
    %v2323 = vmul.f32 %v2315, 1.442695
    %v2324 = vpow.pop %v2323
    %v2325 = vmul.f32 %v2316, 1.442695
    %v2326 = vpow.pop %v2325
    %v2327 = vmul.f32 %v2317, 1.442695
    %v2328 = vpow.pop %v2327
    %v2329 = vmul.f32 %v2318, 1.442695
    %v2330 = vpow.pop %v2329
    %v2331 = vmul.f32 %v2319, 1.442695
    %v2332 = vpow.pop %v2331
    %v2333 = vmul.f32 %v2320, 1.442695
    %v2334 = vpow.pop %v2333
    %v2335 = vmul.f32 %v2321, 1.442695
    %v2336 = vpow.pop %v2335
    %v2337 = vmul.f32 %v2322, 1.442695
    %v2338 = vpow.pop %v2337
    %v2339 = vmul.f32 %v2307, %v2324
    %v2340 = vmul.f32 %v2308, %v2326
    %v2341 = vmul.f32 %v2309, %v2328
    %v2342 = vmul.f32 %v2310, %v2330
    %v2343 = vmul.f32 %v2311, %v2332
    %v2344 = vmul.f32 %v2312, %v2334
    %v2345 = vmul.f32 %v2313, %v2336
    %v2346 = vmul.f32 %v2314, %v2338
    %v2347 = vadd.f32 %v1371, %v2072
    %v2348 = vadd.f32 %v1372, %v2074
    %v2349 = vadd.f32 %v1373, %v2149
    %v2350 = vadd.f32 %v1374, %v2151
    %v2351 = vadd.f32 %v1375, %v2226
    %v2352 = vadd.f32 %v1376, %v2228
    %v2353 = vadd.f32 %v1377, %v2303
    %v2354 = vadd.f32 %v1378, %v2305
    %s2355 = scalar_lea.vmem %s1, 128
    %v2356 = vld [vmem:[%s2355] sm:$0xff]
    %v2357 = vld [vmem:[%s2355 + $0x8] sm:$0xff]
    %v2358 = vld [vmem:[%s2355 + $0x10] sm:$0xff]
    %v2359 = vld [vmem:[%s2355 + $0x18] sm:$0xff]
    %v2360 = vld [vmem:[%s2355 + $0x20] sm:$0xff]
    %v2361 = vld [vmem:[%s2355 + $0x28] sm:$0xff]
    %v2362 = vld [vmem:[%s2355 + $0x30] sm:$0xff]
    %v2363 = vld [vmem:[%s2355 + $0x38] sm:$0xff]
    %s2364 = scalar_lea.vmem %s2, 128
    %v2365 = vld [vmem:[%s2364] sm:$0xff]
    %v2366 = vld [vmem:[%s2364 + $0x8] sm:$0xff]
    %v2367 = vld [vmem:[%s2364 + $0x10] sm:$0xff]
    %v2368 = vld [vmem:[%s2364 + $0x18] sm:$0xff]
    %v2369 = vld [vmem:[%s2364 + $0x20] sm:$0xff]
    %v2370 = vld [vmem:[%s2364 + $0x28] sm:$0xff]
    %v2371 = vld [vmem:[%s2364 + $0x30] sm:$0xff]
    %v2372 = vld [vmem:[%s2364 + $0x38] sm:$0xff]
    %2374 = vset.pattern.permute.xlu0 0
    %2375 = vperm.xlu0 %2374, %v2365
    %v2376 = vpop.permute.xlu0 %2375
    %2379 = vset.pattern.permute.xlu0 0
    %2380 = vperm.xlu0 %2379, %v2366
    %v2381 = vpop.permute.xlu0 %2380
    %2384 = vset.pattern.permute.xlu0 0
    %2385 = vperm.xlu0 %2384, %v2367
    %v2386 = vpop.permute.xlu0 %2385
    %2389 = vset.pattern.permute.xlu0 0
    %2390 = vperm.xlu0 %2389, %v2368
    %v2391 = vpop.permute.xlu0 %2390
    %2394 = vset.pattern.permute.xlu0 0
    %2395 = vperm.xlu0 %2394, %v2369
    %v2396 = vpop.permute.xlu0 %2395
    %2399 = vset.pattern.permute.xlu0 0
    %2400 = vperm.xlu0 %2399, %v2370
    %v2401 = vpop.permute.xlu0 %2400
    %2404 = vset.pattern.permute.xlu0 0
    %2405 = vperm.xlu0 %2404, %v2371
    %v2406 = vpop.permute.xlu0 %2405
    %2409 = vset.pattern.permute.xlu0 0
    %2410 = vperm.xlu0 %2409, %v2372
    %v2411 = vpop.permute.xlu0 %2410
    %v2414 = vsel %vm461, %v2356, 0
    %v2417 = vsel %vm461, %v2357, 0
    %v2420 = vsel %vm461, %v2358, 0
    %v2423 = vsel %vm461, %v2359, 0
    %v2426 = vsel %vm461, %v2360, 0
    %v2429 = vsel %vm461, %v2361, 0
    %v2432 = vsel %vm461, %v2362, 0
    %v2435 = vsel %vm461, %v2363, 0
    %2437 = vmatprep.subr.mxu0 0.0
    %2438 = vmatpush1.msra.mxu0 0.0
    %2439 = vmatprep.subr.mxu0 0.0
    %2440 = vmatpush1.msra.mxu0 0.0
    %2441 = vmatprep.subr.mxu0 0.0
    %2442 = vmatpush1.msra.mxu0 0.0
    %2443 = vmatprep.subr.mxu0 0.0
    %2444 = vmatpush1.msra.mxu0 0.0
    %2445 = vmatprep.subr.mxu0 0.0
    %2446 = vmatpush1.msra.mxu0 0.0
    %2447 = vmatprep.subr.mxu0 0.0
    %2448 = vmatpush1.msra.mxu0 0.0
    %2449 = vmatprep.subr.mxu0 0.0
    %2450 = vmatpush1.msra.mxu0 0.0
    %2451 = vmatprep.subr.mxu0 0.0
    %2452 = vmatpush1.msra.mxu0 0.0
    %2453 = vmatprep.subr.mxu0 0.0
    %2454 = vmatpush1.msra.mxu0 0.0
    %2455 = vmatprep.subr.mxu0 0.0
    %2456 = vmatpush1.msra.mxu0 0.0
    %2457 = vmatprep.subr.mxu0 0.0
    %2458 = vmatpush1.msra.mxu0 0.0
    %2459 = vmatprep.subr.mxu0 0.0
    %2460 = vmatpush1.msra.mxu0 0.0
    %2461 = vmatprep.subr.mxu0 0.0
    %2462 = vmatpush1.msra.mxu0 0.0
    %2463 = vmatprep.subr.mxu0 0.0
    %2464 = vmatpush1.msra.mxu0 0.0
    %2465 = vmatprep.subr.mxu0 0.0
    %2466 = vmatpush1.msra.mxu0 0.0
    %2467 = vmatprep.subr.mxu0 %v2340
    %2468 = vmatpush1.msra.mxu0 %v2339
    %2469 = vmatprep.subr.mxu0 0.0
    %2470 = vmatpush2.msra.mxu0 0.0
    %2471 = vmatprep.subr.mxu0 0.0
    %2472 = vmatpush2.msra.mxu0 0.0
    %2473 = vmatprep.subr.mxu0 0.0
    %2474 = vmatpush2.msra.mxu0 0.0
    %2475 = vmatprep.subr.mxu0 0.0
    %2476 = vmatpush2.msra.mxu0 0.0
    %2477 = vmatprep.subr.mxu0 0.0
    %2478 = vmatpush2.msra.mxu0 0.0
    %2479 = vmatprep.subr.mxu0 0.0
    %2480 = vmatpush2.msra.mxu0 0.0
    %2481 = vmatprep.subr.mxu0 0.0
    %2482 = vmatpush2.msra.mxu0 0.0
    %2483 = vmatprep.subr.mxu0 0.0
    %2484 = vmatpush2.msra.mxu0 0.0
    %2485 = vmatprep.subr.mxu0 0.0
    %2486 = vmatpush2.msra.mxu0 0.0
    %2487 = vmatprep.subr.mxu0 0.0
    %2488 = vmatpush2.msra.mxu0 0.0
    %2489 = vmatprep.subr.mxu0 0.0
    %2490 = vmatpush2.msra.mxu0 0.0
    %2491 = vmatprep.subr.mxu0 0.0
    %2492 = vmatpush2.msra.mxu0 0.0
    %2493 = vmatprep.subr.mxu0 0.0
    %2494 = vmatpush2.msra.mxu0 0.0
    %2495 = vmatprep.subr.mxu0 0.0
    %2496 = vmatpush2.msra.mxu0 0.0
    %2497 = vmatprep.subr.mxu0 0.0
    %2498 = vmatpush2.msra.mxu0 0.0
    %2499 = vmatprep.subr.mxu0 0.0
    %2500 = vmatpush2.msra.mxu0 0.0
    %2501 = vmatprep.mubr.f32.mxu0 0.0
    %2502 = vmatmul.mubr.f32.gmra.mxu0 %v2414
    %v2503 = vpop.f32.mrf.mxu0
    %v2504 = vadd.f32 %v2376, %v2503
    %v2505 = vpop.f32.mrf.mxu0
    %v2506 = vadd.f32 %v2376, %v2505
    %2507 = vmatprep.mubr.f32.mxu0 0.0
    %2508 = vmatmul.mubr.f32.gmra.mxu0 %v2417
    %v2509 = vpop.f32.mrf.mxu0
    %v2510 = vadd.f32 %v2381, %v2509
    %v2511 = vpop.f32.mrf.mxu0
    %v2512 = vadd.f32 %v2381, %v2511
    %2513 = vmatprep.mubr.f32.mxu0 0.0
    %2514 = vmatmul.mubr.f32.gmra.mxu0 %v2420
    %v2515 = vpop.f32.mrf.mxu0
    %v2516 = vadd.f32 %v2386, %v2515
    %v2517 = vpop.f32.mrf.mxu0
    %v2518 = vadd.f32 %v2386, %v2517
    %2519 = vmatprep.mubr.f32.mxu0 0.0
    %2520 = vmatmul.mubr.f32.gmra.mxu0 %v2423
    %v2521 = vpop.f32.mrf.mxu0
    %v2522 = vadd.f32 %v2391, %v2521
    %v2523 = vpop.f32.mrf.mxu0
    %v2524 = vadd.f32 %v2391, %v2523
    %2525 = vmatprep.mubr.f32.mxu0 0.0
    %2526 = vmatmul.mubr.f32.gmra.mxu0 %v2426
    %v2527 = vpop.f32.mrf.mxu0
    %v2528 = vadd.f32 %v2396, %v2527
    %v2529 = vpop.f32.mrf.mxu0
    %v2530 = vadd.f32 %v2396, %v2529
    %2531 = vmatprep.mubr.f32.mxu0 0.0
    %2532 = vmatmul.mubr.f32.gmra.mxu0 %v2429
    %v2533 = vpop.f32.mrf.mxu0
    %v2534 = vadd.f32 %v2401, %v2533
    %v2535 = vpop.f32.mrf.mxu0
    %v2536 = vadd.f32 %v2401, %v2535
    %2537 = vmatprep.mubr.f32.mxu0 0.0
    %2538 = vmatmul.mubr.f32.gmra.mxu0 %v2432
    %v2539 = vpop.f32.mrf.mxu0
    %v2540 = vadd.f32 %v2406, %v2539
    %v2541 = vpop.f32.mrf.mxu0
    %v2542 = vadd.f32 %v2406, %v2541
    %2543 = vmatprep.mubr.f32.mxu0 0.0
    %2544 = vmatmul.mubr.f32.gmra.mxu0 %v2435
    %v2545 = vpop.f32.mrf.mxu0
    %v2546 = vadd.f32 %v2411, %v2545
    %v2547 = vpop.f32.mrf.mxu0
    %v2548 = vadd.f32 %v2411, %v2547
    %2549 = vdwg.mxu0
    %2550 = vmatprep.subr.mxu0 0.0
    %2551 = vmatpush1.msra.mxu0 0.0
    %2552 = vmatprep.subr.mxu0 0.0
    %2553 = vmatpush1.msra.mxu0 0.0
    %2554 = vmatprep.subr.mxu0 0.0
    %2555 = vmatpush1.msra.mxu0 0.0
    %2556 = vmatprep.subr.mxu0 0.0
    %2557 = vmatpush1.msra.mxu0 0.0
    %2558 = vmatprep.subr.mxu0 0.0
    %2559 = vmatpush1.msra.mxu0 0.0
    %2560 = vmatprep.subr.mxu0 0.0
    %2561 = vmatpush1.msra.mxu0 0.0
    %2562 = vmatprep.subr.mxu0 0.0
    %2563 = vmatpush1.msra.mxu0 0.0
    %2564 = vmatprep.subr.mxu0 0.0
    %2565 = vmatpush1.msra.mxu0 0.0
    %2566 = vmatprep.subr.mxu0 0.0
    %2567 = vmatpush1.msra.mxu0 0.0
    %2568 = vmatprep.subr.mxu0 0.0
    %2569 = vmatpush1.msra.mxu0 0.0
    %2570 = vmatprep.subr.mxu0 0.0
    %2571 = vmatpush1.msra.mxu0 0.0
    %2572 = vmatprep.subr.mxu0 0.0
    %2573 = vmatpush1.msra.mxu0 0.0
    %2574 = vmatprep.subr.mxu0 0.0
    %2575 = vmatpush1.msra.mxu0 0.0
    %2576 = vmatprep.subr.mxu0 0.0
    %2577 = vmatpush1.msra.mxu0 0.0
    %2578 = vmatprep.subr.mxu0 0.0
    %2579 = vmatpush1.msra.mxu0 0.0
    %2580 = vmatprep.subr.mxu0 %v2342
    %2581 = vmatpush1.msra.mxu0 %v2341
    %2582 = vmatprep.subr.mxu0 0.0
    %2583 = vmatpush2.msra.mxu0 0.0
    %2584 = vmatprep.subr.mxu0 0.0
    %2585 = vmatpush2.msra.mxu0 0.0
    %2586 = vmatprep.subr.mxu0 0.0
    %2587 = vmatpush2.msra.mxu0 0.0
    %2588 = vmatprep.subr.mxu0 0.0
    %2589 = vmatpush2.msra.mxu0 0.0
    %2590 = vmatprep.subr.mxu0 0.0
    %2591 = vmatpush2.msra.mxu0 0.0
    %2592 = vmatprep.subr.mxu0 0.0
    %2593 = vmatpush2.msra.mxu0 0.0
    %2594 = vmatprep.subr.mxu0 0.0
    %2595 = vmatpush2.msra.mxu0 0.0
    %2596 = vmatprep.subr.mxu0 0.0
    %2597 = vmatpush2.msra.mxu0 0.0
    %2598 = vmatprep.subr.mxu0 0.0
    %2599 = vmatpush2.msra.mxu0 0.0
    %2600 = vmatprep.subr.mxu0 0.0
    %2601 = vmatpush2.msra.mxu0 0.0
    %2602 = vmatprep.subr.mxu0 0.0
    %2603 = vmatpush2.msra.mxu0 0.0
    %2604 = vmatprep.subr.mxu0 0.0
    %2605 = vmatpush2.msra.mxu0 0.0
    %2606 = vmatprep.subr.mxu0 0.0
    %2607 = vmatpush2.msra.mxu0 0.0
    %2608 = vmatprep.subr.mxu0 0.0
    %2609 = vmatpush2.msra.mxu0 0.0
    %2610 = vmatprep.subr.mxu0 0.0
    %2611 = vmatpush2.msra.mxu0 0.0
    %2612 = vmatprep.subr.mxu0 0.0
    %2613 = vmatpush2.msra.mxu0 0.0
    %2614 = vmatprep.mubr.f32.mxu0 0.0
    %2615 = vmatmul.mubr.f32.gmra.mxu0 %v2414
    %v2616 = vpop.f32.mrf.mxu0
    %v2617 = vadd.f32 %v2376, %v2616
    %v2618 = vpop.f32.mrf.mxu0
    %v2619 = vadd.f32 %v2376, %v2618
    %2620 = vmatprep.mubr.f32.mxu0 0.0
    %2621 = vmatmul.mubr.f32.gmra.mxu0 %v2417
    %v2622 = vpop.f32.mrf.mxu0
    %v2623 = vadd.f32 %v2381, %v2622
    %v2624 = vpop.f32.mrf.mxu0
    %v2625 = vadd.f32 %v2381, %v2624
    %2626 = vmatprep.mubr.f32.mxu0 0.0
    %2627 = vmatmul.mubr.f32.gmra.mxu0 %v2420
    %v2628 = vpop.f32.mrf.mxu0
    %v2629 = vadd.f32 %v2386, %v2628
    %v2630 = vpop.f32.mrf.mxu0
    %v2631 = vadd.f32 %v2386, %v2630
    %2632 = vmatprep.mubr.f32.mxu0 0.0
    %2633 = vmatmul.mubr.f32.gmra.mxu0 %v2423
    %v2634 = vpop.f32.mrf.mxu0
    %v2635 = vadd.f32 %v2391, %v2634
    %v2636 = vpop.f32.mrf.mxu0
    %v2637 = vadd.f32 %v2391, %v2636
    %2638 = vmatprep.mubr.f32.mxu0 0.0
    %2639 = vmatmul.mubr.f32.gmra.mxu0 %v2426
    %v2640 = vpop.f32.mrf.mxu0
    %v2641 = vadd.f32 %v2396, %v2640
    %v2642 = vpop.f32.mrf.mxu0
    %v2643 = vadd.f32 %v2396, %v2642
    %2644 = vmatprep.mubr.f32.mxu0 0.0
    %2645 = vmatmul.mubr.f32.gmra.mxu0 %v2429
    %v2646 = vpop.f32.mrf.mxu0
    %v2647 = vadd.f32 %v2401, %v2646
    %v2648 = vpop.f32.mrf.mxu0
    %v2649 = vadd.f32 %v2401, %v2648
    %2650 = vmatprep.mubr.f32.mxu0 0.0
    %2651 = vmatmul.mubr.f32.gmra.mxu0 %v2432
    %v2652 = vpop.f32.mrf.mxu0
    %v2653 = vadd.f32 %v2406, %v2652
    %v2654 = vpop.f32.mrf.mxu0
    %v2655 = vadd.f32 %v2406, %v2654
    %2656 = vmatprep.mubr.f32.mxu0 0.0
    %2657 = vmatmul.mubr.f32.gmra.mxu0 %v2435
    %v2658 = vpop.f32.mrf.mxu0
    %v2659 = vadd.f32 %v2411, %v2658
    %v2660 = vpop.f32.mrf.mxu0
    %v2661 = vadd.f32 %v2411, %v2660
    %2662 = vdwg.mxu0
    %2663 = vmatprep.subr.mxu0 0.0
    %2664 = vmatpush1.msra.mxu0 0.0
    %2665 = vmatprep.subr.mxu0 0.0
    %2666 = vmatpush1.msra.mxu0 0.0
    %2667 = vmatprep.subr.mxu0 0.0
    %2668 = vmatpush1.msra.mxu0 0.0
    %2669 = vmatprep.subr.mxu0 0.0
    %2670 = vmatpush1.msra.mxu0 0.0
    %2671 = vmatprep.subr.mxu0 0.0
    %2672 = vmatpush1.msra.mxu0 0.0
    %2673 = vmatprep.subr.mxu0 0.0
    %2674 = vmatpush1.msra.mxu0 0.0
    %2675 = vmatprep.subr.mxu0 0.0
    %2676 = vmatpush1.msra.mxu0 0.0
    %2677 = vmatprep.subr.mxu0 0.0
    %2678 = vmatpush1.msra.mxu0 0.0
    %2679 = vmatprep.subr.mxu0 0.0
    %2680 = vmatpush1.msra.mxu0 0.0
    %2681 = vmatprep.subr.mxu0 0.0
    %2682 = vmatpush1.msra.mxu0 0.0
    %2683 = vmatprep.subr.mxu0 0.0
    %2684 = vmatpush1.msra.mxu0 0.0
    %2685 = vmatprep.subr.mxu0 0.0
    %2686 = vmatpush1.msra.mxu0 0.0
    %2687 = vmatprep.subr.mxu0 0.0
    %2688 = vmatpush1.msra.mxu0 0.0
    %2689 = vmatprep.subr.mxu0 0.0
    %2690 = vmatpush1.msra.mxu0 0.0
    %2691 = vmatprep.subr.mxu0 0.0
    %2692 = vmatpush1.msra.mxu0 0.0
    %2693 = vmatprep.subr.mxu0 %v2344
    %2694 = vmatpush1.msra.mxu0 %v2343
    %2695 = vmatprep.subr.mxu0 0.0
    %2696 = vmatpush2.msra.mxu0 0.0
    %2697 = vmatprep.subr.mxu0 0.0
    %2698 = vmatpush2.msra.mxu0 0.0
    %2699 = vmatprep.subr.mxu0 0.0
    %2700 = vmatpush2.msra.mxu0 0.0
    %2701 = vmatprep.subr.mxu0 0.0
    %2702 = vmatpush2.msra.mxu0 0.0
    %2703 = vmatprep.subr.mxu0 0.0
    %2704 = vmatpush2.msra.mxu0 0.0
    %2705 = vmatprep.subr.mxu0 0.0
    %2706 = vmatpush2.msra.mxu0 0.0
    %2707 = vmatprep.subr.mxu0 0.0
    %2708 = vmatpush2.msra.mxu0 0.0
    %2709 = vmatprep.subr.mxu0 0.0
    %2710 = vmatpush2.msra.mxu0 0.0
    %2711 = vmatprep.subr.mxu0 0.0
    %2712 = vmatpush2.msra.mxu0 0.0
    %2713 = vmatprep.subr.mxu0 0.0
    %2714 = vmatpush2.msra.mxu0 0.0
    %2715 = vmatprep.subr.mxu0 0.0
    %2716 = vmatpush2.msra.mxu0 0.0
    %2717 = vmatprep.subr.mxu0 0.0
    %2718 = vmatpush2.msra.mxu0 0.0
    %2719 = vmatprep.subr.mxu0 0.0
    %2720 = vmatpush2.msra.mxu0 0.0
    %2721 = vmatprep.subr.mxu0 0.0
    %2722 = vmatpush2.msra.mxu0 0.0
    %2723 = vmatprep.subr.mxu0 0.0
    %2724 = vmatpush2.msra.mxu0 0.0
    %2725 = vmatprep.subr.mxu0 0.0
    %2726 = vmatpush2.msra.mxu0 0.0
    %2727 = vmatprep.mubr.f32.mxu0 0.0
    %2728 = vmatmul.mubr.f32.gmra.mxu0 %v2414
    %v2729 = vpop.f32.mrf.mxu0
    %v2730 = vadd.f32 %v2376, %v2729
    %v2731 = vpop.f32.mrf.mxu0
    %v2732 = vadd.f32 %v2376, %v2731
    %2733 = vmatprep.mubr.f32.mxu0 0.0
    %2734 = vmatmul.mubr.f32.gmra.mxu0 %v2417
    %v2735 = vpop.f32.mrf.mxu0
    %v2736 = vadd.f32 %v2381, %v2735
    %v2737 = vpop.f32.mrf.mxu0
    %v2738 = vadd.f32 %v2381, %v2737
    %2739 = vmatprep.mubr.f32.mxu0 0.0
    %2740 = vmatmul.mubr.f32.gmra.mxu0 %v2420
    %v2741 = vpop.f32.mrf.mxu0
    %v2742 = vadd.f32 %v2386, %v2741
    %v2743 = vpop.f32.mrf.mxu0
    %v2744 = vadd.f32 %v2386, %v2743
    %2745 = vmatprep.mubr.f32.mxu0 0.0
    %2746 = vmatmul.mubr.f32.gmra.mxu0 %v2423
    %v2747 = vpop.f32.mrf.mxu0
    %v2748 = vadd.f32 %v2391, %v2747
    %v2749 = vpop.f32.mrf.mxu0
    %v2750 = vadd.f32 %v2391, %v2749
    %2751 = vmatprep.mubr.f32.mxu0 0.0
    %2752 = vmatmul.mubr.f32.gmra.mxu0 %v2426
    %v2753 = vpop.f32.mrf.mxu0
    %v2754 = vadd.f32 %v2396, %v2753
    %v2755 = vpop.f32.mrf.mxu0
    %v2756 = vadd.f32 %v2396, %v2755
    %2757 = vmatprep.mubr.f32.mxu0 0.0
    %2758 = vmatmul.mubr.f32.gmra.mxu0 %v2429
    %v2759 = vpop.f32.mrf.mxu0
    %v2760 = vadd.f32 %v2401, %v2759
    %v2761 = vpop.f32.mrf.mxu0
    %v2762 = vadd.f32 %v2401, %v2761
    %2763 = vmatprep.mubr.f32.mxu0 0.0
    %2764 = vmatmul.mubr.f32.gmra.mxu0 %v2432
    %v2765 = vpop.f32.mrf.mxu0
    %v2766 = vadd.f32 %v2406, %v2765
    %v2767 = vpop.f32.mrf.mxu0
    %v2768 = vadd.f32 %v2406, %v2767
    %2769 = vmatprep.mubr.f32.mxu0 0.0
    %2770 = vmatmul.mubr.f32.gmra.mxu0 %v2435
    %v2771 = vpop.f32.mrf.mxu0
    %v2772 = vadd.f32 %v2411, %v2771
    %v2773 = vpop.f32.mrf.mxu0
    %v2774 = vadd.f32 %v2411, %v2773
    %2775 = vdwg.mxu0
    %2776 = vmatprep.subr.mxu0 0.0
    %2777 = vmatpush1.msra.mxu0 0.0
    %2778 = vmatprep.subr.mxu0 0.0
    %2779 = vmatpush1.msra.mxu0 0.0
    %2780 = vmatprep.subr.mxu0 0.0
    %2781 = vmatpush1.msra.mxu0 0.0
    %2782 = vmatprep.subr.mxu0 0.0
    %2783 = vmatpush1.msra.mxu0 0.0
    %2784 = vmatprep.subr.mxu0 0.0
    %2785 = vmatpush1.msra.mxu0 0.0
    %2786 = vmatprep.subr.mxu0 0.0
    %2787 = vmatpush1.msra.mxu0 0.0
    %2788 = vmatprep.subr.mxu0 0.0
    %2789 = vmatpush1.msra.mxu0 0.0
    %2790 = vmatprep.subr.mxu0 0.0
    %2791 = vmatpush1.msra.mxu0 0.0
    %2792 = vmatprep.subr.mxu0 0.0
    %2793 = vmatpush1.msra.mxu0 0.0
    %2794 = vmatprep.subr.mxu0 0.0
    %2795 = vmatpush1.msra.mxu0 0.0
    %2796 = vmatprep.subr.mxu0 0.0
    %2797 = vmatpush1.msra.mxu0 0.0
    %2798 = vmatprep.subr.mxu0 0.0
    %2799 = vmatpush1.msra.mxu0 0.0
    %2800 = vmatprep.subr.mxu0 0.0
    %2801 = vmatpush1.msra.mxu0 0.0
    %2802 = vmatprep.subr.mxu0 0.0
    %2803 = vmatpush1.msra.mxu0 0.0
    %2804 = vmatprep.subr.mxu0 0.0
    %2805 = vmatpush1.msra.mxu0 0.0
    %2806 = vmatprep.subr.mxu0 %v2346
    %2807 = vmatpush1.msra.mxu0 %v2345
    %2808 = vmatprep.subr.mxu0 0.0
    %2809 = vmatpush2.msra.mxu0 0.0
    %2810 = vmatprep.subr.mxu0 0.0
    %2811 = vmatpush2.msra.mxu0 0.0
    %2812 = vmatprep.subr.mxu0 0.0
    %2813 = vmatpush2.msra.mxu0 0.0
    %2814 = vmatprep.subr.mxu0 0.0
    %2815 = vmatpush2.msra.mxu0 0.0
    %2816 = vmatprep.subr.mxu0 0.0
    %2817 = vmatpush2.msra.mxu0 0.0
    %2818 = vmatprep.subr.mxu0 0.0
    %2819 = vmatpush2.msra.mxu0 0.0
    %2820 = vmatprep.subr.mxu0 0.0
    %2821 = vmatpush2.msra.mxu0 0.0
    %2822 = vmatprep.subr.mxu0 0.0
    %2823 = vmatpush2.msra.mxu0 0.0
    %2824 = vmatprep.subr.mxu0 0.0
    %2825 = vmatpush2.msra.mxu0 0.0
    %2826 = vmatprep.subr.mxu0 0.0
    %2827 = vmatpush2.msra.mxu0 0.0
    %2828 = vmatprep.subr.mxu0 0.0
    %2829 = vmatpush2.msra.mxu0 0.0
    %2830 = vmatprep.subr.mxu0 0.0
    %2831 = vmatpush2.msra.mxu0 0.0
    %2832 = vmatprep.subr.mxu0 0.0
    %2833 = vmatpush2.msra.mxu0 0.0
    %2834 = vmatprep.subr.mxu0 0.0
    %2835 = vmatpush2.msra.mxu0 0.0
    %2836 = vmatprep.subr.mxu0 0.0
    %2837 = vmatpush2.msra.mxu0 0.0
    %2838 = vmatprep.subr.mxu0 0.0
    %2839 = vmatpush2.msra.mxu0 0.0
    %2840 = vmatprep.mubr.f32.mxu0 0.0
    %2841 = vmatmul.mubr.f32.gmra.mxu0 %v2414
    %v2842 = vpop.f32.mrf.mxu0
    %v2843 = vadd.f32 %v2376, %v2842
    %v2844 = vpop.f32.mrf.mxu0
    %v2845 = vadd.f32 %v2376, %v2844
    %2846 = vmatprep.mubr.f32.mxu0 0.0
    %2847 = vmatmul.mubr.f32.gmra.mxu0 %v2417
    %v2848 = vpop.f32.mrf.mxu0
    %v2849 = vadd.f32 %v2381, %v2848
    %v2850 = vpop.f32.mrf.mxu0
    %v2851 = vadd.f32 %v2381, %v2850
    %2852 = vmatprep.mubr.f32.mxu0 0.0
    %2853 = vmatmul.mubr.f32.gmra.mxu0 %v2420
    %v2854 = vpop.f32.mrf.mxu0
    %v2855 = vadd.f32 %v2386, %v2854
    %v2856 = vpop.f32.mrf.mxu0
    %v2857 = vadd.f32 %v2386, %v2856
    %2858 = vmatprep.mubr.f32.mxu0 0.0
    %2859 = vmatmul.mubr.f32.gmra.mxu0 %v2423
    %v2860 = vpop.f32.mrf.mxu0
    %v2861 = vadd.f32 %v2391, %v2860
    %v2862 = vpop.f32.mrf.mxu0
    %v2863 = vadd.f32 %v2391, %v2862
    %2864 = vmatprep.mubr.f32.mxu0 0.0
    %2865 = vmatmul.mubr.f32.gmra.mxu0 %v2426
    %v2866 = vpop.f32.mrf.mxu0
    %v2867 = vadd.f32 %v2396, %v2866
    %v2868 = vpop.f32.mrf.mxu0
    %v2869 = vadd.f32 %v2396, %v2868
    %2870 = vmatprep.mubr.f32.mxu0 0.0
    %2871 = vmatmul.mubr.f32.gmra.mxu0 %v2429
    %v2872 = vpop.f32.mrf.mxu0
    %v2873 = vadd.f32 %v2401, %v2872
    %v2874 = vpop.f32.mrf.mxu0
    %v2875 = vadd.f32 %v2401, %v2874
    %2876 = vmatprep.mubr.f32.mxu0 0.0
    %2877 = vmatmul.mubr.f32.gmra.mxu0 %v2432
    %v2878 = vpop.f32.mrf.mxu0
    %v2879 = vadd.f32 %v2406, %v2878
    %v2880 = vpop.f32.mrf.mxu0
    %v2881 = vadd.f32 %v2406, %v2880
    %2882 = vmatprep.mubr.f32.mxu0 0.0
    %2883 = vmatmul.mubr.f32.gmra.mxu0 %v2435
    %v2884 = vpop.f32.mrf.mxu0
    %v2885 = vadd.f32 %v2411, %v2884
    %v2886 = vpop.f32.mrf.mxu0
    %v2887 = vadd.f32 %v2411, %v2886
    %2888 = vdwg.mxu0
    %v2889 = vtanh.pop %v2504
    %v2890 = vtanh.pop %v2506
    %v2891 = vtanh.pop %v2617
    %v2892 = vtanh.pop %v2619
    %v2893 = vtanh.pop %v2730
    %v2894 = vtanh.pop %v2732
    %v2895 = vtanh.pop %v2843
    %v2896 = vtanh.pop %v2845
    %v2897 = vtanh.pop %v2510
    %v2898 = vtanh.pop %v2512
    %v2899 = vtanh.pop %v2623
    %v2900 = vtanh.pop %v2625
    %v2901 = vtanh.pop %v2736
    %v2902 = vtanh.pop %v2738
    %v2903 = vtanh.pop %v2849
    %v2904 = vtanh.pop %v2851
    %v2905 = vtanh.pop %v2516
    %v2906 = vtanh.pop %v2518
    %v2907 = vtanh.pop %v2629
    %v2908 = vtanh.pop %v2631
    %v2909 = vtanh.pop %v2742
    %v2910 = vtanh.pop %v2744
    %v2911 = vtanh.pop %v2855
    %v2912 = vtanh.pop %v2857
    %v2913 = vtanh.pop %v2522
    %v2914 = vtanh.pop %v2524
    %v2915 = vtanh.pop %v2635
    %v2916 = vtanh.pop %v2637
    %v2917 = vtanh.pop %v2748
    %v2918 = vtanh.pop %v2750
    %v2919 = vtanh.pop %v2861
    %v2920 = vtanh.pop %v2863
    %v2921 = vtanh.pop %v2528
    %v2922 = vtanh.pop %v2530
    %v2923 = vtanh.pop %v2641
    %v2924 = vtanh.pop %v2643
    %v2925 = vtanh.pop %v2754
    %v2926 = vtanh.pop %v2756
    %v2927 = vtanh.pop %v2867
    %v2928 = vtanh.pop %v2869
    %v2929 = vtanh.pop %v2534
    %v2930 = vtanh.pop %v2536
    %v2931 = vtanh.pop %v2647
    %v2932 = vtanh.pop %v2649
    %v2933 = vtanh.pop %v2760
    %v2934 = vtanh.pop %v2762
    %v2935 = vtanh.pop %v2873
    %v2936 = vtanh.pop %v2875
    %v2937 = vtanh.pop %v2540
    %v2938 = vtanh.pop %v2542
    %v2939 = vtanh.pop %v2653
    %v2940 = vtanh.pop %v2655
    %v2941 = vtanh.pop %v2766
    %v2942 = vtanh.pop %v2768
    %v2943 = vtanh.pop %v2879
    %v2944 = vtanh.pop %v2881
    %v2945 = vtanh.pop %v2546
    %v2946 = vtanh.pop %v2548
    %v2947 = vtanh.pop %v2659
    %v2948 = vtanh.pop %v2661
    %v2949 = vtanh.pop %v2772
    %v2950 = vtanh.pop %v2774
    %v2951 = vtanh.pop %v2885
    %v2952 = vtanh.pop %v2887
    %s2953 = scalar_lea.vmem %s3, 32
    %v2954 = vld [vmem:[%s2953] sm:$0xff]
    %v2955 = vld [vmem:[%s2953 + $0x8] sm:$0xff]
    %s2956 = scalar_lea.vmem %s4, 32
    %v2957 = vld [vmem:[%s2956] sm:$0xff]
    %v2958 = vld [vmem:[%s2956 + $0x8] sm:$0xff]
    %2960 = vset.pattern.permute.xlu0 0
    %2961 = vperm.xlu0 %2960, %v2957
    %v2962 = vpop.permute.xlu0 %2961
    %2965 = vset.pattern.permute.xlu0 0
    %2966 = vperm.xlu0 %2965, %v2958
    %v2967 = vpop.permute.xlu0 %2966
    %v2970 = vsel %vm1016, %v2954, 0
    %v2973 = vsel %vm1016, %v2955, 0
    %2975 = vmatprep.subr.mxu0 0.0
    %2976 = vmatpush1.msra.mxu0 0.0
    %2977 = vmatprep.subr.mxu0 0.0
    %2978 = vmatpush1.msra.mxu0 0.0
    %2979 = vmatprep.subr.mxu0 0.0
    %2980 = vmatpush1.msra.mxu0 0.0
    %2981 = vmatprep.subr.mxu0 0.0
    %2982 = vmatpush1.msra.mxu0 0.0
    %2983 = vmatprep.subr.mxu0 0.0
    %2984 = vmatpush1.msra.mxu0 0.0
    %2985 = vmatprep.subr.mxu0 0.0
    %2986 = vmatpush1.msra.mxu0 0.0
    %2987 = vmatprep.subr.mxu0 0.0
    %2988 = vmatpush1.msra.mxu0 0.0
    %2989 = vmatprep.subr.mxu0 0.0
    %2990 = vmatpush1.msra.mxu0 0.0
    %2991 = vmatprep.subr.mxu0 %v2946
    %2992 = vmatpush1.msra.mxu0 %v2945
    %2993 = vmatprep.subr.mxu0 %v2938
    %2994 = vmatpush1.msra.mxu0 %v2937
    %2995 = vmatprep.subr.mxu0 %v2930
    %2996 = vmatpush1.msra.mxu0 %v2929
    %2997 = vmatprep.subr.mxu0 %v2922
    %2998 = vmatpush1.msra.mxu0 %v2921
    %2999 = vmatprep.subr.mxu0 %v2914
    %3000 = vmatpush1.msra.mxu0 %v2913
    %3001 = vmatprep.subr.mxu0 %v2906
    %3002 = vmatpush1.msra.mxu0 %v2905
    %3003 = vmatprep.subr.mxu0 %v2898
    %3004 = vmatpush1.msra.mxu0 %v2897
    %3005 = vmatprep.subr.mxu0 %v2890
    %3006 = vmatpush1.msra.mxu0 %v2889
    %3007 = vmatprep.subr.mxu0 0.0
    %3008 = vmatpush2.msra.mxu0 0.0
    %3009 = vmatprep.subr.mxu0 0.0
    %3010 = vmatpush2.msra.mxu0 0.0
    %3011 = vmatprep.subr.mxu0 0.0
    %3012 = vmatpush2.msra.mxu0 0.0
    %3013 = vmatprep.subr.mxu0 0.0
    %3014 = vmatpush2.msra.mxu0 0.0
    %3015 = vmatprep.subr.mxu0 0.0
    %3016 = vmatpush2.msra.mxu0 0.0
    %3017 = vmatprep.subr.mxu0 0.0
    %3018 = vmatpush2.msra.mxu0 0.0
    %3019 = vmatprep.subr.mxu0 0.0
    %3020 = vmatpush2.msra.mxu0 0.0
    %3021 = vmatprep.subr.mxu0 0.0
    %3022 = vmatpush2.msra.mxu0 0.0
    %3023 = vmatprep.subr.mxu0 0.0
    %3024 = vmatpush2.msra.mxu0 0.0
    %3025 = vmatprep.subr.mxu0 0.0
    %3026 = vmatpush2.msra.mxu0 0.0
    %3027 = vmatprep.subr.mxu0 0.0
    %3028 = vmatpush2.msra.mxu0 0.0
    %3029 = vmatprep.subr.mxu0 0.0
    %3030 = vmatpush2.msra.mxu0 0.0
    %3031 = vmatprep.subr.mxu0 0.0
    %3032 = vmatpush2.msra.mxu0 0.0
    %3033 = vmatprep.subr.mxu0 0.0
    %3034 = vmatpush2.msra.mxu0 0.0
    %3035 = vmatprep.subr.mxu0 0.0
    %3036 = vmatpush2.msra.mxu0 0.0
    %3037 = vmatprep.subr.mxu0 0.0
    %3038 = vmatpush2.msra.mxu0 0.0
    %3039 = vmatprep.mubr.f32.mxu0 0.0
    %3040 = vmatmul.mubr.f32.gmra.mxu0 %v2970
    %v3041 = vpop.f32.mrf.mxu0
    %v3042 = vadd.f32 %v2962, %v3041
    %v3043 = vpop.f32.mrf.mxu0
    %v3044 = vadd.f32 %v2962, %v3043
    %3045 = vmatprep.mubr.f32.mxu0 0.0
    %3046 = vmatmul.mubr.f32.gmra.mxu0 %v2973
    %v3047 = vpop.f32.mrf.mxu0
    %v3048 = vadd.f32 %v2967, %v3047
    %v3049 = vpop.f32.mrf.mxu0
    %v3050 = vadd.f32 %v2967, %v3049
    %3051 = vdwg.mxu0
    %3052 = vmatprep.subr.mxu0 0.0
    %3053 = vmatpush1.msra.mxu0 0.0
    %3054 = vmatprep.subr.mxu0 0.0
    %3055 = vmatpush1.msra.mxu0 0.0
    %3056 = vmatprep.subr.mxu0 0.0
    %3057 = vmatpush1.msra.mxu0 0.0
    %3058 = vmatprep.subr.mxu0 0.0
    %3059 = vmatpush1.msra.mxu0 0.0
    %3060 = vmatprep.subr.mxu0 0.0
    %3061 = vmatpush1.msra.mxu0 0.0
    %3062 = vmatprep.subr.mxu0 0.0
    %3063 = vmatpush1.msra.mxu0 0.0
    %3064 = vmatprep.subr.mxu0 0.0
    %3065 = vmatpush1.msra.mxu0 0.0
    %3066 = vmatprep.subr.mxu0 0.0
    %3067 = vmatpush1.msra.mxu0 0.0
    %3068 = vmatprep.subr.mxu0 %v2948
    %3069 = vmatpush1.msra.mxu0 %v2947
    %3070 = vmatprep.subr.mxu0 %v2940
    %3071 = vmatpush1.msra.mxu0 %v2939
    %3072 = vmatprep.subr.mxu0 %v2932
    %3073 = vmatpush1.msra.mxu0 %v2931
    %3074 = vmatprep.subr.mxu0 %v2924
    %3075 = vmatpush1.msra.mxu0 %v2923
    %3076 = vmatprep.subr.mxu0 %v2916
    %3077 = vmatpush1.msra.mxu0 %v2915
    %3078 = vmatprep.subr.mxu0 %v2908
    %3079 = vmatpush1.msra.mxu0 %v2907
    %3080 = vmatprep.subr.mxu0 %v2900
    %3081 = vmatpush1.msra.mxu0 %v2899
    %3082 = vmatprep.subr.mxu0 %v2892
    %3083 = vmatpush1.msra.mxu0 %v2891
    %3084 = vmatprep.subr.mxu0 0.0
    %3085 = vmatpush2.msra.mxu0 0.0
    %3086 = vmatprep.subr.mxu0 0.0
    %3087 = vmatpush2.msra.mxu0 0.0
    %3088 = vmatprep.subr.mxu0 0.0
    %3089 = vmatpush2.msra.mxu0 0.0
    %3090 = vmatprep.subr.mxu0 0.0
    %3091 = vmatpush2.msra.mxu0 0.0
    %3092 = vmatprep.subr.mxu0 0.0
    %3093 = vmatpush2.msra.mxu0 0.0
    %3094 = vmatprep.subr.mxu0 0.0
    %3095 = vmatpush2.msra.mxu0 0.0
    %3096 = vmatprep.subr.mxu0 0.0
    %3097 = vmatpush2.msra.mxu0 0.0
    %3098 = vmatprep.subr.mxu0 0.0
    %3099 = vmatpush2.msra.mxu0 0.0
    %3100 = vmatprep.subr.mxu0 0.0
    %3101 = vmatpush2.msra.mxu0 0.0
    %3102 = vmatprep.subr.mxu0 0.0
    %3103 = vmatpush2.msra.mxu0 0.0
    %3104 = vmatprep.subr.mxu0 0.0
    %3105 = vmatpush2.msra.mxu0 0.0
    %3106 = vmatprep.subr.mxu0 0.0
    %3107 = vmatpush2.msra.mxu0 0.0
    %3108 = vmatprep.subr.mxu0 0.0
    %3109 = vmatpush2.msra.mxu0 0.0
    %3110 = vmatprep.subr.mxu0 0.0
    %3111 = vmatpush2.msra.mxu0 0.0
    %3112 = vmatprep.subr.mxu0 0.0
    %3113 = vmatpush2.msra.mxu0 0.0
    %3114 = vmatprep.subr.mxu0 0.0
    %3115 = vmatpush2.msra.mxu0 0.0
    %3116 = vmatprep.mubr.f32.mxu0 0.0
    %3117 = vmatmul.mubr.f32.gmra.mxu0 %v2970
    %v3118 = vpop.f32.mrf.mxu0
    %v3119 = vadd.f32 %v2962, %v3118
    %v3120 = vpop.f32.mrf.mxu0
    %v3121 = vadd.f32 %v2962, %v3120
    %3122 = vmatprep.mubr.f32.mxu0 0.0
    %3123 = vmatmul.mubr.f32.gmra.mxu0 %v2973
    %v3124 = vpop.f32.mrf.mxu0
    %v3125 = vadd.f32 %v2967, %v3124
    %v3126 = vpop.f32.mrf.mxu0
    %v3127 = vadd.f32 %v2967, %v3126
    %3128 = vdwg.mxu0
    %3129 = vmatprep.subr.mxu0 0.0
    %3130 = vmatpush1.msra.mxu0 0.0
    %3131 = vmatprep.subr.mxu0 0.0
    %3132 = vmatpush1.msra.mxu0 0.0
    %3133 = vmatprep.subr.mxu0 0.0
    %3134 = vmatpush1.msra.mxu0 0.0
    %3135 = vmatprep.subr.mxu0 0.0
    %3136 = vmatpush1.msra.mxu0 0.0
    %3137 = vmatprep.subr.mxu0 0.0
    %3138 = vmatpush1.msra.mxu0 0.0
    %3139 = vmatprep.subr.mxu0 0.0
    %3140 = vmatpush1.msra.mxu0 0.0
    %3141 = vmatprep.subr.mxu0 0.0
    %3142 = vmatpush1.msra.mxu0 0.0
    %3143 = vmatprep.subr.mxu0 0.0
    %3144 = vmatpush1.msra.mxu0 0.0
    %3145 = vmatprep.subr.mxu0 %v2950
    %3146 = vmatpush1.msra.mxu0 %v2949
    %3147 = vmatprep.subr.mxu0 %v2942
    %3148 = vmatpush1.msra.mxu0 %v2941
    %3149 = vmatprep.subr.mxu0 %v2934
    %3150 = vmatpush1.msra.mxu0 %v2933
    %3151 = vmatprep.subr.mxu0 %v2926
    %3152 = vmatpush1.msra.mxu0 %v2925
    %3153 = vmatprep.subr.mxu0 %v2918
    %3154 = vmatpush1.msra.mxu0 %v2917
    %3155 = vmatprep.subr.mxu0 %v2910
    %3156 = vmatpush1.msra.mxu0 %v2909
    %3157 = vmatprep.subr.mxu0 %v2902
    %3158 = vmatpush1.msra.mxu0 %v2901
    %3159 = vmatprep.subr.mxu0 %v2894
    %3160 = vmatpush1.msra.mxu0 %v2893
    %3161 = vmatprep.subr.mxu0 0.0
    %3162 = vmatpush2.msra.mxu0 0.0
    %3163 = vmatprep.subr.mxu0 0.0
    %3164 = vmatpush2.msra.mxu0 0.0
    %3165 = vmatprep.subr.mxu0 0.0
    %3166 = vmatpush2.msra.mxu0 0.0
    %3167 = vmatprep.subr.mxu0 0.0
    %3168 = vmatpush2.msra.mxu0 0.0
    %3169 = vmatprep.subr.mxu0 0.0
    %3170 = vmatpush2.msra.mxu0 0.0
    %3171 = vmatprep.subr.mxu0 0.0
    %3172 = vmatpush2.msra.mxu0 0.0
    %3173 = vmatprep.subr.mxu0 0.0
    %3174 = vmatpush2.msra.mxu0 0.0
    %3175 = vmatprep.subr.mxu0 0.0
    %3176 = vmatpush2.msra.mxu0 0.0
    %3177 = vmatprep.subr.mxu0 0.0
    %3178 = vmatpush2.msra.mxu0 0.0
    %3179 = vmatprep.subr.mxu0 0.0
    %3180 = vmatpush2.msra.mxu0 0.0
    %3181 = vmatprep.subr.mxu0 0.0
    %3182 = vmatpush2.msra.mxu0 0.0
    %3183 = vmatprep.subr.mxu0 0.0
    %3184 = vmatpush2.msra.mxu0 0.0
    %3185 = vmatprep.subr.mxu0 0.0
    %3186 = vmatpush2.msra.mxu0 0.0
    %3187 = vmatprep.subr.mxu0 0.0
    %3188 = vmatpush2.msra.mxu0 0.0
    %3189 = vmatprep.subr.mxu0 0.0
    %3190 = vmatpush2.msra.mxu0 0.0
    %3191 = vmatprep.subr.mxu0 0.0
    %3192 = vmatpush2.msra.mxu0 0.0
    %3193 = vmatprep.mubr.f32.mxu0 0.0
    %3194 = vmatmul.mubr.f32.gmra.mxu0 %v2970
    %v3195 = vpop.f32.mrf.mxu0
    %v3196 = vadd.f32 %v2962, %v3195
    %v3197 = vpop.f32.mrf.mxu0
    %v3198 = vadd.f32 %v2962, %v3197
    %3199 = vmatprep.mubr.f32.mxu0 0.0
    %3200 = vmatmul.mubr.f32.gmra.mxu0 %v2973
    %v3201 = vpop.f32.mrf.mxu0
    %v3202 = vadd.f32 %v2967, %v3201
    %v3203 = vpop.f32.mrf.mxu0
    %v3204 = vadd.f32 %v2967, %v3203
    %3205 = vdwg.mxu0
    %3206 = vmatprep.subr.mxu0 0.0
    %3207 = vmatpush1.msra.mxu0 0.0
    %3208 = vmatprep.subr.mxu0 0.0
    %3209 = vmatpush1.msra.mxu0 0.0
    %3210 = vmatprep.subr.mxu0 0.0
    %3211 = vmatpush1.msra.mxu0 0.0
    %3212 = vmatprep.subr.mxu0 0.0
    %3213 = vmatpush1.msra.mxu0 0.0
    %3214 = vmatprep.subr.mxu0 0.0
    %3215 = vmatpush1.msra.mxu0 0.0
    %3216 = vmatprep.subr.mxu0 0.0
    %3217 = vmatpush1.msra.mxu0 0.0
    %3218 = vmatprep.subr.mxu0 0.0
    %3219 = vmatpush1.msra.mxu0 0.0
    %3220 = vmatprep.subr.mxu0 0.0
    %3221 = vmatpush1.msra.mxu0 0.0
    %3222 = vmatprep.subr.mxu0 %v2952
    %3223 = vmatpush1.msra.mxu0 %v2951
    %3224 = vmatprep.subr.mxu0 %v2944
    %3225 = vmatpush1.msra.mxu0 %v2943
    %3226 = vmatprep.subr.mxu0 %v2936
    %3227 = vmatpush1.msra.mxu0 %v2935
    %3228 = vmatprep.subr.mxu0 %v2928
    %3229 = vmatpush1.msra.mxu0 %v2927
    %3230 = vmatprep.subr.mxu0 %v2920
    %3231 = vmatpush1.msra.mxu0 %v2919
    %3232 = vmatprep.subr.mxu0 %v2912
    %3233 = vmatpush1.msra.mxu0 %v2911
    %3234 = vmatprep.subr.mxu0 %v2904
    %3235 = vmatpush1.msra.mxu0 %v2903
    %3236 = vmatprep.subr.mxu0 %v2896
    %3237 = vmatpush1.msra.mxu0 %v2895
    %3238 = vmatprep.subr.mxu0 0.0
    %3239 = vmatpush2.msra.mxu0 0.0
    %3240 = vmatprep.subr.mxu0 0.0
    %3241 = vmatpush2.msra.mxu0 0.0
    %3242 = vmatprep.subr.mxu0 0.0
    %3243 = vmatpush2.msra.mxu0 0.0
    %3244 = vmatprep.subr.mxu0 0.0
    %3245 = vmatpush2.msra.mxu0 0.0
    %3246 = vmatprep.subr.mxu0 0.0
    %3247 = vmatpush2.msra.mxu0 0.0
    %3248 = vmatprep.subr.mxu0 0.0
    %3249 = vmatpush2.msra.mxu0 0.0
    %3250 = vmatprep.subr.mxu0 0.0
    %3251 = vmatpush2.msra.mxu0 0.0
    %3252 = vmatprep.subr.mxu0 0.0
    %3253 = vmatpush2.msra.mxu0 0.0
    %3254 = vmatprep.subr.mxu0 0.0
    %3255 = vmatpush2.msra.mxu0 0.0
    %3256 = vmatprep.subr.mxu0 0.0
    %3257 = vmatpush2.msra.mxu0 0.0
    %3258 = vmatprep.subr.mxu0 0.0
    %3259 = vmatpush2.msra.mxu0 0.0
    %3260 = vmatprep.subr.mxu0 0.0
    %3261 = vmatpush2.msra.mxu0 0.0
    %3262 = vmatprep.subr.mxu0 0.0
    %3263 = vmatpush2.msra.mxu0 0.0
    %3264 = vmatprep.subr.mxu0 0.0
    %3265 = vmatpush2.msra.mxu0 0.0
    %3266 = vmatprep.subr.mxu0 0.0
    %3267 = vmatpush2.msra.mxu0 0.0
    %3268 = vmatprep.subr.mxu0 0.0
    %3269 = vmatpush2.msra.mxu0 0.0
    %3270 = vmatprep.mubr.f32.mxu0 0.0
    %3271 = vmatmul.mubr.f32.gmra.mxu0 %v2970
    %v3272 = vpop.f32.mrf.mxu0
    %v3273 = vadd.f32 %v2962, %v3272
    %v3274 = vpop.f32.mrf.mxu0
    %v3275 = vadd.f32 %v2962, %v3274
    %3276 = vmatprep.mubr.f32.mxu0 0.0
    %3277 = vmatmul.mubr.f32.gmra.mxu0 %v2973
    %v3278 = vpop.f32.mrf.mxu0
    %v3279 = vadd.f32 %v2967, %v3278
    %v3280 = vpop.f32.mrf.mxu0
    %v3281 = vadd.f32 %v2967, %v3280
    %3282 = vdwg.mxu0
    %v3283 = vsub.f32 %v1363, %v3042
    %v3284 = vsub.f32 %v1364, %v3044
    %v3285 = vsub.f32 %v1365, %v3119
    %v3286 = vsub.f32 %v1366, %v3121
    %v3287 = vsub.f32 %v1367, %v3196
    %v3288 = vsub.f32 %v1368, %v3198
    %v3289 = vsub.f32 %v1369, %v3273
    %v3290 = vsub.f32 %v1370, %v3275
    %v3291 = vsub.f32 0.0, %v3048
    %v3292 = vsub.f32 0.0, %v3050
    %v3293 = vsub.f32 0.0, %v3125
    %v3294 = vsub.f32 0.0, %v3127
    %v3295 = vsub.f32 0.0, %v3202
    %v3296 = vsub.f32 0.0, %v3204
    %v3297 = vsub.f32 0.0, %v3279
    %v3298 = vsub.f32 0.0, %v3281
    %v3299 = vmul.f32 %v3291, 1.442695
    %v3300 = vpow.pop %v3299
    %v3301 = vmul.f32 %v3292, 1.442695
    %v3302 = vpow.pop %v3301
    %v3303 = vmul.f32 %v3293, 1.442695
    %v3304 = vpow.pop %v3303
    %v3305 = vmul.f32 %v3294, 1.442695
    %v3306 = vpow.pop %v3305
    %v3307 = vmul.f32 %v3295, 1.442695
    %v3308 = vpow.pop %v3307
    %v3309 = vmul.f32 %v3296, 1.442695
    %v3310 = vpow.pop %v3309
    %v3311 = vmul.f32 %v3297, 1.442695
    %v3312 = vpow.pop %v3311
    %v3313 = vmul.f32 %v3298, 1.442695
    %v3314 = vpow.pop %v3313
    %v3315 = vmul.f32 %v3283, %v3300
    %v3316 = vmul.f32 %v3284, %v3302
    %v3317 = vmul.f32 %v3285, %v3304
    %v3318 = vmul.f32 %v3286, %v3306
    %v3319 = vmul.f32 %v3287, %v3308
    %v3320 = vmul.f32 %v3288, %v3310
    %v3321 = vmul.f32 %v3289, %v3312
    %v3322 = vmul.f32 %v3290, %v3314
    %v3323 = vadd.f32 %v2347, %v3048
    %v3324 = vadd.f32 %v2348, %v3050
    %v3325 = vadd.f32 %v2349, %v3125
    %v3326 = vadd.f32 %v2350, %v3127
    %v3327 = vadd.f32 %v2351, %v3202
    %v3328 = vadd.f32 %v2352, %v3204
    %v3329 = vadd.f32 %v2353, %v3279
    %v3330 = vadd.f32 %v2354, %v3281
    %s3331 = scalar_lea.vmem %s1, 192
    %v3332 = vld [vmem:[%s3331] sm:$0xff]
    %v3333 = vld [vmem:[%s3331 + $0x8] sm:$0xff]
    %v3334 = vld [vmem:[%s3331 + $0x10] sm:$0xff]
    %v3335 = vld [vmem:[%s3331 + $0x18] sm:$0xff]
    %v3336 = vld [vmem:[%s3331 + $0x20] sm:$0xff]
    %v3337 = vld [vmem:[%s3331 + $0x28] sm:$0xff]
    %v3338 = vld [vmem:[%s3331 + $0x30] sm:$0xff]
    %v3339 = vld [vmem:[%s3331 + $0x38] sm:$0xff]
    %s3340 = scalar_lea.vmem %s2, 192
    %v3341 = vld [vmem:[%s3340] sm:$0xff]
    %v3342 = vld [vmem:[%s3340 + $0x8] sm:$0xff]
    %v3343 = vld [vmem:[%s3340 + $0x10] sm:$0xff]
    %v3344 = vld [vmem:[%s3340 + $0x18] sm:$0xff]
    %v3345 = vld [vmem:[%s3340 + $0x20] sm:$0xff]
    %v3346 = vld [vmem:[%s3340 + $0x28] sm:$0xff]
    %v3347 = vld [vmem:[%s3340 + $0x30] sm:$0xff]
    %v3348 = vld [vmem:[%s3340 + $0x38] sm:$0xff]
    %3350 = vset.pattern.permute.xlu0 0
    %3351 = vperm.xlu0 %3350, %v3341
    %v3352 = vpop.permute.xlu0 %3351
    %3355 = vset.pattern.permute.xlu0 0
    %3356 = vperm.xlu0 %3355, %v3342
    %v3357 = vpop.permute.xlu0 %3356
    %3360 = vset.pattern.permute.xlu0 0
    %3361 = vperm.xlu0 %3360, %v3343
    %v3362 = vpop.permute.xlu0 %3361
    %3365 = vset.pattern.permute.xlu0 0
    %3366 = vperm.xlu0 %3365, %v3344
    %v3367 = vpop.permute.xlu0 %3366
    %3370 = vset.pattern.permute.xlu0 0
    %3371 = vperm.xlu0 %3370, %v3345
    %v3372 = vpop.permute.xlu0 %3371
    %3375 = vset.pattern.permute.xlu0 0
    %3376 = vperm.xlu0 %3375, %v3346
    %v3377 = vpop.permute.xlu0 %3376
    %3380 = vset.pattern.permute.xlu0 0
    %3381 = vperm.xlu0 %3380, %v3347
    %v3382 = vpop.permute.xlu0 %3381
    %3385 = vset.pattern.permute.xlu0 0
    %3386 = vperm.xlu0 %3385, %v3348
    %v3387 = vpop.permute.xlu0 %3386
    %v3390 = vsel %vm461, %v3332, 0
    %v3393 = vsel %vm461, %v3333, 0
    %v3396 = vsel %vm461, %v3334, 0
    %v3399 = vsel %vm461, %v3335, 0
    %v3402 = vsel %vm461, %v3336, 0
    %v3405 = vsel %vm461, %v3337, 0
    %v3408 = vsel %vm461, %v3338, 0
    %v3411 = vsel %vm461, %v3339, 0
    %3413 = vmatprep.subr.mxu0 0.0
    %3414 = vmatpush1.msra.mxu0 0.0
    %3415 = vmatprep.subr.mxu0 0.0
    %3416 = vmatpush1.msra.mxu0 0.0
    %3417 = vmatprep.subr.mxu0 0.0
    %3418 = vmatpush1.msra.mxu0 0.0
    %3419 = vmatprep.subr.mxu0 0.0
    %3420 = vmatpush1.msra.mxu0 0.0
    %3421 = vmatprep.subr.mxu0 0.0
    %3422 = vmatpush1.msra.mxu0 0.0
    %3423 = vmatprep.subr.mxu0 0.0
    %3424 = vmatpush1.msra.mxu0 0.0
    %3425 = vmatprep.subr.mxu0 0.0
    %3426 = vmatpush1.msra.mxu0 0.0
    %3427 = vmatprep.subr.mxu0 0.0
    %3428 = vmatpush1.msra.mxu0 0.0
    %3429 = vmatprep.subr.mxu0 0.0
    %3430 = vmatpush1.msra.mxu0 0.0
    %3431 = vmatprep.subr.mxu0 0.0
    %3432 = vmatpush1.msra.mxu0 0.0
    %3433 = vmatprep.subr.mxu0 0.0
    %3434 = vmatpush1.msra.mxu0 0.0
    %3435 = vmatprep.subr.mxu0 0.0
    %3436 = vmatpush1.msra.mxu0 0.0
    %3437 = vmatprep.subr.mxu0 0.0
    %3438 = vmatpush1.msra.mxu0 0.0
    %3439 = vmatprep.subr.mxu0 0.0
    %3440 = vmatpush1.msra.mxu0 0.0
    %3441 = vmatprep.subr.mxu0 0.0
    %3442 = vmatpush1.msra.mxu0 0.0
    %3443 = vmatprep.subr.mxu0 %v3316
    %3444 = vmatpush1.msra.mxu0 %v3315
    %3445 = vmatprep.subr.mxu0 0.0
    %3446 = vmatpush2.msra.mxu0 0.0
    %3447 = vmatprep.subr.mxu0 0.0
    %3448 = vmatpush2.msra.mxu0 0.0
    %3449 = vmatprep.subr.mxu0 0.0
    %3450 = vmatpush2.msra.mxu0 0.0
    %3451 = vmatprep.subr.mxu0 0.0
    %3452 = vmatpush2.msra.mxu0 0.0
    %3453 = vmatprep.subr.mxu0 0.0
    %3454 = vmatpush2.msra.mxu0 0.0
    %3455 = vmatprep.subr.mxu0 0.0
    %3456 = vmatpush2.msra.mxu0 0.0
    %3457 = vmatprep.subr.mxu0 0.0
    %3458 = vmatpush2.msra.mxu0 0.0
    %3459 = vmatprep.subr.mxu0 0.0
    %3460 = vmatpush2.msra.mxu0 0.0
    %3461 = vmatprep.subr.mxu0 0.0
    %3462 = vmatpush2.msra.mxu0 0.0
    %3463 = vmatprep.subr.mxu0 0.0
    %3464 = vmatpush2.msra.mxu0 0.0
    %3465 = vmatprep.subr.mxu0 0.0
    %3466 = vmatpush2.msra.mxu0 0.0
    %3467 = vmatprep.subr.mxu0 0.0
    %3468 = vmatpush2.msra.mxu0 0.0
    %3469 = vmatprep.subr.mxu0 0.0
    %3470 = vmatpush2.msra.mxu0 0.0
    %3471 = vmatprep.subr.mxu0 0.0
    %3472 = vmatpush2.msra.mxu0 0.0
    %3473 = vmatprep.subr.mxu0 0.0
    %3474 = vmatpush2.msra.mxu0 0.0
    %3475 = vmatprep.subr.mxu0 0.0
    %3476 = vmatpush2.msra.mxu0 0.0
    %3477 = vmatprep.mubr.f32.mxu0 0.0
    %3478 = vmatmul.mubr.f32.gmra.mxu0 %v3390
    %v3479 = vpop.f32.mrf.mxu0
    %v3480 = vadd.f32 %v3352, %v3479
    %v3481 = vpop.f32.mrf.mxu0
    %v3482 = vadd.f32 %v3352, %v3481
    %3483 = vmatprep.mubr.f32.mxu0 0.0
    %3484 = vmatmul.mubr.f32.gmra.mxu0 %v3393
    %v3485 = vpop.f32.mrf.mxu0
    %v3486 = vadd.f32 %v3357, %v3485
    %v3487 = vpop.f32.mrf.mxu0
    %v3488 = vadd.f32 %v3357, %v3487
    %3489 = vmatprep.mubr.f32.mxu0 0.0
    %3490 = vmatmul.mubr.f32.gmra.mxu0 %v3396
    %v3491 = vpop.f32.mrf.mxu0
    %v3492 = vadd.f32 %v3362, %v3491
    %v3493 = vpop.f32.mrf.mxu0
    %v3494 = vadd.f32 %v3362, %v3493
    %3495 = vmatprep.mubr.f32.mxu0 0.0
    %3496 = vmatmul.mubr.f32.gmra.mxu0 %v3399
    %v3497 = vpop.f32.mrf.mxu0
    %v3498 = vadd.f32 %v3367, %v3497
    %v3499 = vpop.f32.mrf.mxu0
    %v3500 = vadd.f32 %v3367, %v3499
    %3501 = vmatprep.mubr.f32.mxu0 0.0
    %3502 = vmatmul.mubr.f32.gmra.mxu0 %v3402
    %v3503 = vpop.f32.mrf.mxu0
    %v3504 = vadd.f32 %v3372, %v3503
    %v3505 = vpop.f32.mrf.mxu0
    %v3506 = vadd.f32 %v3372, %v3505
    %3507 = vmatprep.mubr.f32.mxu0 0.0
    %3508 = vmatmul.mubr.f32.gmra.mxu0 %v3405
    %v3509 = vpop.f32.mrf.mxu0
    %v3510 = vadd.f32 %v3377, %v3509
    %v3511 = vpop.f32.mrf.mxu0
    %v3512 = vadd.f32 %v3377, %v3511
    %3513 = vmatprep.mubr.f32.mxu0 0.0
    %3514 = vmatmul.mubr.f32.gmra.mxu0 %v3408
    %v3515 = vpop.f32.mrf.mxu0
    %v3516 = vadd.f32 %v3382, %v3515
    %v3517 = vpop.f32.mrf.mxu0
    %v3518 = vadd.f32 %v3382, %v3517
    %3519 = vmatprep.mubr.f32.mxu0 0.0
    %3520 = vmatmul.mubr.f32.gmra.mxu0 %v3411
    %v3521 = vpop.f32.mrf.mxu0
    %v3522 = vadd.f32 %v3387, %v3521
    %v3523 = vpop.f32.mrf.mxu0
    %v3524 = vadd.f32 %v3387, %v3523
    %3525 = vdwg.mxu0
    %3526 = vmatprep.subr.mxu0 0.0
    %3527 = vmatpush1.msra.mxu0 0.0
    %3528 = vmatprep.subr.mxu0 0.0
    %3529 = vmatpush1.msra.mxu0 0.0
    %3530 = vmatprep.subr.mxu0 0.0
    %3531 = vmatpush1.msra.mxu0 0.0
    %3532 = vmatprep.subr.mxu0 0.0
    %3533 = vmatpush1.msra.mxu0 0.0
    %3534 = vmatprep.subr.mxu0 0.0
    %3535 = vmatpush1.msra.mxu0 0.0
    %3536 = vmatprep.subr.mxu0 0.0
    %3537 = vmatpush1.msra.mxu0 0.0
    %3538 = vmatprep.subr.mxu0 0.0
    %3539 = vmatpush1.msra.mxu0 0.0
    %3540 = vmatprep.subr.mxu0 0.0
    %3541 = vmatpush1.msra.mxu0 0.0
    %3542 = vmatprep.subr.mxu0 0.0
    %3543 = vmatpush1.msra.mxu0 0.0
    %3544 = vmatprep.subr.mxu0 0.0
    %3545 = vmatpush1.msra.mxu0 0.0
    %3546 = vmatprep.subr.mxu0 0.0
    %3547 = vmatpush1.msra.mxu0 0.0
    %3548 = vmatprep.subr.mxu0 0.0
    %3549 = vmatpush1.msra.mxu0 0.0
    %3550 = vmatprep.subr.mxu0 0.0
    %3551 = vmatpush1.msra.mxu0 0.0
    %3552 = vmatprep.subr.mxu0 0.0
    %3553 = vmatpush1.msra.mxu0 0.0
    %3554 = vmatprep.subr.mxu0 0.0
    %3555 = vmatpush1.msra.mxu0 0.0
    %3556 = vmatprep.subr.mxu0 %v3318
    %3557 = vmatpush1.msra.mxu0 %v3317
    %3558 = vmatprep.subr.mxu0 0.0
    %3559 = vmatpush2.msra.mxu0 0.0
    %3560 = vmatprep.subr.mxu0 0.0
    %3561 = vmatpush2.msra.mxu0 0.0
    %3562 = vmatprep.subr.mxu0 0.0
    %3563 = vmatpush2.msra.mxu0 0.0
    %3564 = vmatprep.subr.mxu0 0.0
    %3565 = vmatpush2.msra.mxu0 0.0
    %3566 = vmatprep.subr.mxu0 0.0
    %3567 = vmatpush2.msra.mxu0 0.0
    %3568 = vmatprep.subr.mxu0 0.0
    %3569 = vmatpush2.msra.mxu0 0.0
    %3570 = vmatprep.subr.mxu0 0.0
    %3571 = vmatpush2.msra.mxu0 0.0
    %3572 = vmatprep.subr.mxu0 0.0
    %3573 = vmatpush2.msra.mxu0 0.0
    %3574 = vmatprep.subr.mxu0 0.0
    %3575 = vmatpush2.msra.mxu0 0.0
    %3576 = vmatprep.subr.mxu0 0.0
    %3577 = vmatpush2.msra.mxu0 0.0
    %3578 = vmatprep.subr.mxu0 0.0
    %3579 = vmatpush2.msra.mxu0 0.0
    %3580 = vmatprep.subr.mxu0 0.0
    %3581 = vmatpush2.msra.mxu0 0.0
    %3582 = vmatprep.subr.mxu0 0.0
    %3583 = vmatpush2.msra.mxu0 0.0
    %3584 = vmatprep.subr.mxu0 0.0
    %3585 = vmatpush2.msra.mxu0 0.0
    %3586 = vmatprep.subr.mxu0 0.0
    %3587 = vmatpush2.msra.mxu0 0.0
    %3588 = vmatprep.subr.mxu0 0.0
    %3589 = vmatpush2.msra.mxu0 0.0
    %3590 = vmatprep.mubr.f32.mxu0 0.0
    %3591 = vmatmul.mubr.f32.gmra.mxu0 %v3390
    %v3592 = vpop.f32.mrf.mxu0
    %v3593 = vadd.f32 %v3352, %v3592
    %v3594 = vpop.f32.mrf.mxu0
    %v3595 = vadd.f32 %v3352, %v3594
    %3596 = vmatprep.mubr.f32.mxu0 0.0
    %3597 = vmatmul.mubr.f32.gmra.mxu0 %v3393
    %v3598 = vpop.f32.mrf.mxu0
    %v3599 = vadd.f32 %v3357, %v3598
    %v3600 = vpop.f32.mrf.mxu0
    %v3601 = vadd.f32 %v3357, %v3600
    %3602 = vmatprep.mubr.f32.mxu0 0.0
    %3603 = vmatmul.mubr.f32.gmra.mxu0 %v3396
    %v3604 = vpop.f32.mrf.mxu0
    %v3605 = vadd.f32 %v3362, %v3604
    %v3606 = vpop.f32.mrf.mxu0
    %v3607 = vadd.f32 %v3362, %v3606
    %3608 = vmatprep.mubr.f32.mxu0 0.0
    %3609 = vmatmul.mubr.f32.gmra.mxu0 %v3399
    %v3610 = vpop.f32.mrf.mxu0
    %v3611 = vadd.f32 %v3367, %v3610
    %v3612 = vpop.f32.mrf.mxu0
    %v3613 = vadd.f32 %v3367, %v3612
    %3614 = vmatprep.mubr.f32.mxu0 0.0
    %3615 = vmatmul.mubr.f32.gmra.mxu0 %v3402
    %v3616 = vpop.f32.mrf.mxu0
    %v3617 = vadd.f32 %v3372, %v3616
    %v3618 = vpop.f32.mrf.mxu0
    %v3619 = vadd.f32 %v3372, %v3618
    %3620 = vmatprep.mubr.f32.mxu0 0.0
    %3621 = vmatmul.mubr.f32.gmra.mxu0 %v3405
    %v3622 = vpop.f32.mrf.mxu0
    %v3623 = vadd.f32 %v3377, %v3622
    %v3624 = vpop.f32.mrf.mxu0
    %v3625 = vadd.f32 %v3377, %v3624
    %3626 = vmatprep.mubr.f32.mxu0 0.0
    %3627 = vmatmul.mubr.f32.gmra.mxu0 %v3408
    %v3628 = vpop.f32.mrf.mxu0
    %v3629 = vadd.f32 %v3382, %v3628
    %v3630 = vpop.f32.mrf.mxu0
    %v3631 = vadd.f32 %v3382, %v3630
    %3632 = vmatprep.mubr.f32.mxu0 0.0
    %3633 = vmatmul.mubr.f32.gmra.mxu0 %v3411
    %v3634 = vpop.f32.mrf.mxu0
    %v3635 = vadd.f32 %v3387, %v3634
    %v3636 = vpop.f32.mrf.mxu0
    %v3637 = vadd.f32 %v3387, %v3636
    %3638 = vdwg.mxu0
    %3639 = vmatprep.subr.mxu0 0.0
    %3640 = vmatpush1.msra.mxu0 0.0
    %3641 = vmatprep.subr.mxu0 0.0
    %3642 = vmatpush1.msra.mxu0 0.0
    %3643 = vmatprep.subr.mxu0 0.0
    %3644 = vmatpush1.msra.mxu0 0.0
    %3645 = vmatprep.subr.mxu0 0.0
    %3646 = vmatpush1.msra.mxu0 0.0
    %3647 = vmatprep.subr.mxu0 0.0
    %3648 = vmatpush1.msra.mxu0 0.0
    %3649 = vmatprep.subr.mxu0 0.0
    %3650 = vmatpush1.msra.mxu0 0.0
    %3651 = vmatprep.subr.mxu0 0.0
    %3652 = vmatpush1.msra.mxu0 0.0
    %3653 = vmatprep.subr.mxu0 0.0
    %3654 = vmatpush1.msra.mxu0 0.0
    %3655 = vmatprep.subr.mxu0 0.0
    %3656 = vmatpush1.msra.mxu0 0.0
    %3657 = vmatprep.subr.mxu0 0.0
    %3658 = vmatpush1.msra.mxu0 0.0
    %3659 = vmatprep.subr.mxu0 0.0
    %3660 = vmatpush1.msra.mxu0 0.0
    %3661 = vmatprep.subr.mxu0 0.0
    %3662 = vmatpush1.msra.mxu0 0.0
    %3663 = vmatprep.subr.mxu0 0.0
    %3664 = vmatpush1.msra.mxu0 0.0
    %3665 = vmatprep.subr.mxu0 0.0
    %3666 = vmatpush1.msra.mxu0 0.0
    %3667 = vmatprep.subr.mxu0 0.0
    %3668 = vmatpush1.msra.mxu0 0.0
    %3669 = vmatprep.subr.mxu0 %v3320
    %3670 = vmatpush1.msra.mxu0 %v3319
    %3671 = vmatprep.subr.mxu0 0.0
    %3672 = vmatpush2.msra.mxu0 0.0
    %3673 = vmatprep.subr.mxu0 0.0
    %3674 = vmatpush2.msra.mxu0 0.0
    %3675 = vmatprep.subr.mxu0 0.0
    %3676 = vmatpush2.msra.mxu0 0.0
    %3677 = vmatprep.subr.mxu0 0.0
    %3678 = vmatpush2.msra.mxu0 0.0
    %3679 = vmatprep.subr.mxu0 0.0
    %3680 = vmatpush2.msra.mxu0 0.0
    %3681 = vmatprep.subr.mxu0 0.0
    %3682 = vmatpush2.msra.mxu0 0.0
    %3683 = vmatprep.subr.mxu0 0.0
    %3684 = vmatpush2.msra.mxu0 0.0
    %3685 = vmatprep.subr.mxu0 0.0
    %3686 = vmatpush2.msra.mxu0 0.0
    %3687 = vmatprep.subr.mxu0 0.0
    %3688 = vmatpush2.msra.mxu0 0.0
    %3689 = vmatprep.subr.mxu0 0.0
    %3690 = vmatpush2.msra.mxu0 0.0
    %3691 = vmatprep.subr.mxu0 0.0
    %3692 = vmatpush2.msra.mxu0 0.0
    %3693 = vmatprep.subr.mxu0 0.0
    %3694 = vmatpush2.msra.mxu0 0.0
    %3695 = vmatprep.subr.mxu0 0.0
    %3696 = vmatpush2.msra.mxu0 0.0
    %3697 = vmatprep.subr.mxu0 0.0
    %3698 = vmatpush2.msra.mxu0 0.0
    %3699 = vmatprep.subr.mxu0 0.0
    %3700 = vmatpush2.msra.mxu0 0.0
    %3701 = vmatprep.subr.mxu0 0.0
    %3702 = vmatpush2.msra.mxu0 0.0
    %3703 = vmatprep.mubr.f32.mxu0 0.0
    %3704 = vmatmul.mubr.f32.gmra.mxu0 %v3390
    %v3705 = vpop.f32.mrf.mxu0
    %v3706 = vadd.f32 %v3352, %v3705
    %v3707 = vpop.f32.mrf.mxu0
    %v3708 = vadd.f32 %v3352, %v3707
    %3709 = vmatprep.mubr.f32.mxu0 0.0
    %3710 = vmatmul.mubr.f32.gmra.mxu0 %v3393
    %v3711 = vpop.f32.mrf.mxu0
    %v3712 = vadd.f32 %v3357, %v3711
    %v3713 = vpop.f32.mrf.mxu0
    %v3714 = vadd.f32 %v3357, %v3713
    %3715 = vmatprep.mubr.f32.mxu0 0.0
    %3716 = vmatmul.mubr.f32.gmra.mxu0 %v3396
    %v3717 = vpop.f32.mrf.mxu0
    %v3718 = vadd.f32 %v3362, %v3717
    %v3719 = vpop.f32.mrf.mxu0
    %v3720 = vadd.f32 %v3362, %v3719
    %3721 = vmatprep.mubr.f32.mxu0 0.0
    %3722 = vmatmul.mubr.f32.gmra.mxu0 %v3399
    %v3723 = vpop.f32.mrf.mxu0
    %v3724 = vadd.f32 %v3367, %v3723
    %v3725 = vpop.f32.mrf.mxu0
    %v3726 = vadd.f32 %v3367, %v3725
    %3727 = vmatprep.mubr.f32.mxu0 0.0
    %3728 = vmatmul.mubr.f32.gmra.mxu0 %v3402
    %v3729 = vpop.f32.mrf.mxu0
    %v3730 = vadd.f32 %v3372, %v3729
    %v3731 = vpop.f32.mrf.mxu0
    %v3732 = vadd.f32 %v3372, %v3731
    %3733 = vmatprep.mubr.f32.mxu0 0.0
    %3734 = vmatmul.mubr.f32.gmra.mxu0 %v3405
    %v3735 = vpop.f32.mrf.mxu0
    %v3736 = vadd.f32 %v3377, %v3735
    %v3737 = vpop.f32.mrf.mxu0
    %v3738 = vadd.f32 %v3377, %v3737
    %3739 = vmatprep.mubr.f32.mxu0 0.0
    %3740 = vmatmul.mubr.f32.gmra.mxu0 %v3408
    %v3741 = vpop.f32.mrf.mxu0
    %v3742 = vadd.f32 %v3382, %v3741
    %v3743 = vpop.f32.mrf.mxu0
    %v3744 = vadd.f32 %v3382, %v3743
    %3745 = vmatprep.mubr.f32.mxu0 0.0
    %3746 = vmatmul.mubr.f32.gmra.mxu0 %v3411
    %v3747 = vpop.f32.mrf.mxu0
    %v3748 = vadd.f32 %v3387, %v3747
    %v3749 = vpop.f32.mrf.mxu0
    %v3750 = vadd.f32 %v3387, %v3749
    %3751 = vdwg.mxu0
    %3752 = vmatprep.subr.mxu0 0.0
    %3753 = vmatpush1.msra.mxu0 0.0
    %3754 = vmatprep.subr.mxu0 0.0
    %3755 = vmatpush1.msra.mxu0 0.0
    %3756 = vmatprep.subr.mxu0 0.0
    %3757 = vmatpush1.msra.mxu0 0.0
    %3758 = vmatprep.subr.mxu0 0.0
    %3759 = vmatpush1.msra.mxu0 0.0
    %3760 = vmatprep.subr.mxu0 0.0
    %3761 = vmatpush1.msra.mxu0 0.0
    %3762 = vmatprep.subr.mxu0 0.0
    %3763 = vmatpush1.msra.mxu0 0.0
    %3764 = vmatprep.subr.mxu0 0.0
    %3765 = vmatpush1.msra.mxu0 0.0
    %3766 = vmatprep.subr.mxu0 0.0
    %3767 = vmatpush1.msra.mxu0 0.0
    %3768 = vmatprep.subr.mxu0 0.0
    %3769 = vmatpush1.msra.mxu0 0.0
    %3770 = vmatprep.subr.mxu0 0.0
    %3771 = vmatpush1.msra.mxu0 0.0
    %3772 = vmatprep.subr.mxu0 0.0
    %3773 = vmatpush1.msra.mxu0 0.0
    %3774 = vmatprep.subr.mxu0 0.0
    %3775 = vmatpush1.msra.mxu0 0.0
    %3776 = vmatprep.subr.mxu0 0.0
    %3777 = vmatpush1.msra.mxu0 0.0
    %3778 = vmatprep.subr.mxu0 0.0
    %3779 = vmatpush1.msra.mxu0 0.0
    %3780 = vmatprep.subr.mxu0 0.0
    %3781 = vmatpush1.msra.mxu0 0.0
    %3782 = vmatprep.subr.mxu0 %v3322
    %3783 = vmatpush1.msra.mxu0 %v3321
    %3784 = vmatprep.subr.mxu0 0.0
    %3785 = vmatpush2.msra.mxu0 0.0
    %3786 = vmatprep.subr.mxu0 0.0
    %3787 = vmatpush2.msra.mxu0 0.0
    %3788 = vmatprep.subr.mxu0 0.0
    %3789 = vmatpush2.msra.mxu0 0.0
    %3790 = vmatprep.subr.mxu0 0.0
    %3791 = vmatpush2.msra.mxu0 0.0
    %3792 = vmatprep.subr.mxu0 0.0
    %3793 = vmatpush2.msra.mxu0 0.0
    %3794 = vmatprep.subr.mxu0 0.0
    %3795 = vmatpush2.msra.mxu0 0.0
    %3796 = vmatprep.subr.mxu0 0.0
    %3797 = vmatpush2.msra.mxu0 0.0
    %3798 = vmatprep.subr.mxu0 0.0
    %3799 = vmatpush2.msra.mxu0 0.0
    %3800 = vmatprep.subr.mxu0 0.0
    %3801 = vmatpush2.msra.mxu0 0.0
    %3802 = vmatprep.subr.mxu0 0.0
    %3803 = vmatpush2.msra.mxu0 0.0
    %3804 = vmatprep.subr.mxu0 0.0
    %3805 = vmatpush2.msra.mxu0 0.0
    %3806 = vmatprep.subr.mxu0 0.0
    %3807 = vmatpush2.msra.mxu0 0.0
    %3808 = vmatprep.subr.mxu0 0.0
    %3809 = vmatpush2.msra.mxu0 0.0
    %3810 = vmatprep.subr.mxu0 0.0
    %3811 = vmatpush2.msra.mxu0 0.0
    %3812 = vmatprep.subr.mxu0 0.0
    %3813 = vmatpush2.msra.mxu0 0.0
    %3814 = vmatprep.subr.mxu0 0.0
    %3815 = vmatpush2.msra.mxu0 0.0
    %3816 = vmatprep.mubr.f32.mxu0 0.0
    %3817 = vmatmul.mubr.f32.gmra.mxu0 %v3390
    %v3818 = vpop.f32.mrf.mxu0
    %v3819 = vadd.f32 %v3352, %v3818
    %v3820 = vpop.f32.mrf.mxu0
    %v3821 = vadd.f32 %v3352, %v3820
    %3822 = vmatprep.mubr.f32.mxu0 0.0
    %3823 = vmatmul.mubr.f32.gmra.mxu0 %v3393
    %v3824 = vpop.f32.mrf.mxu0
    %v3825 = vadd.f32 %v3357, %v3824
    %v3826 = vpop.f32.mrf.mxu0
    %v3827 = vadd.f32 %v3357, %v3826
    %3828 = vmatprep.mubr.f32.mxu0 0.0
    %3829 = vmatmul.mubr.f32.gmra.mxu0 %v3396
    %v3830 = vpop.f32.mrf.mxu0
    %v3831 = vadd.f32 %v3362, %v3830
    %v3832 = vpop.f32.mrf.mxu0
    %v3833 = vadd.f32 %v3362, %v3832
    %3834 = vmatprep.mubr.f32.mxu0 0.0
    %3835 = vmatmul.mubr.f32.gmra.mxu0 %v3399
    %v3836 = vpop.f32.mrf.mxu0
    %v3837 = vadd.f32 %v3367, %v3836
    %v3838 = vpop.f32.mrf.mxu0
    %v3839 = vadd.f32 %v3367, %v3838
    %3840 = vmatprep.mubr.f32.mxu0 0.0
    %3841 = vmatmul.mubr.f32.gmra.mxu0 %v3402
    %v3842 = vpop.f32.mrf.mxu0
    %v3843 = vadd.f32 %v3372, %v3842
    %v3844 = vpop.f32.mrf.mxu0
    %v3845 = vadd.f32 %v3372, %v3844
    %3846 = vmatprep.mubr.f32.mxu0 0.0
    %3847 = vmatmul.mubr.f32.gmra.mxu0 %v3405
    %v3848 = vpop.f32.mrf.mxu0
    %v3849 = vadd.f32 %v3377, %v3848
    %v3850 = vpop.f32.mrf.mxu0
    %v3851 = vadd.f32 %v3377, %v3850
    %3852 = vmatprep.mubr.f32.mxu0 0.0
    %3853 = vmatmul.mubr.f32.gmra.mxu0 %v3408
    %v3854 = vpop.f32.mrf.mxu0
    %v3855 = vadd.f32 %v3382, %v3854
    %v3856 = vpop.f32.mrf.mxu0
    %v3857 = vadd.f32 %v3382, %v3856
    %3858 = vmatprep.mubr.f32.mxu0 0.0
    %3859 = vmatmul.mubr.f32.gmra.mxu0 %v3411
    %v3860 = vpop.f32.mrf.mxu0
    %v3861 = vadd.f32 %v3387, %v3860
    %v3862 = vpop.f32.mrf.mxu0
    %v3863 = vadd.f32 %v3387, %v3862
    %3864 = vdwg.mxu0
    %v3865 = vtanh.pop %v3480
    %v3866 = vtanh.pop %v3482
    %v3867 = vtanh.pop %v3593
    %v3868 = vtanh.pop %v3595
    %v3869 = vtanh.pop %v3706
    %v3870 = vtanh.pop %v3708
    %v3871 = vtanh.pop %v3819
    %v3872 = vtanh.pop %v3821
    %v3873 = vtanh.pop %v3486
    %v3874 = vtanh.pop %v3488
    %v3875 = vtanh.pop %v3599
    %v3876 = vtanh.pop %v3601
    %v3877 = vtanh.pop %v3712
    %v3878 = vtanh.pop %v3714
    %v3879 = vtanh.pop %v3825
    %v3880 = vtanh.pop %v3827
    %v3881 = vtanh.pop %v3492
    %v3882 = vtanh.pop %v3494
    %v3883 = vtanh.pop %v3605
    %v3884 = vtanh.pop %v3607
    %v3885 = vtanh.pop %v3718
    %v3886 = vtanh.pop %v3720
    %v3887 = vtanh.pop %v3831
    %v3888 = vtanh.pop %v3833
    %v3889 = vtanh.pop %v3498
    %v3890 = vtanh.pop %v3500
    %v3891 = vtanh.pop %v3611
    %v3892 = vtanh.pop %v3613
    %v3893 = vtanh.pop %v3724
    %v3894 = vtanh.pop %v3726
    %v3895 = vtanh.pop %v3837
    %v3896 = vtanh.pop %v3839
    %v3897 = vtanh.pop %v3504
    %v3898 = vtanh.pop %v3506
    %v3899 = vtanh.pop %v3617
    %v3900 = vtanh.pop %v3619
    %v3901 = vtanh.pop %v3730
    %v3902 = vtanh.pop %v3732
    %v3903 = vtanh.pop %v3843
    %v3904 = vtanh.pop %v3845
    %v3905 = vtanh.pop %v3510
    %v3906 = vtanh.pop %v3512
    %v3907 = vtanh.pop %v3623
    %v3908 = vtanh.pop %v3625
    %v3909 = vtanh.pop %v3736
    %v3910 = vtanh.pop %v3738
    %v3911 = vtanh.pop %v3849
    %v3912 = vtanh.pop %v3851
    %v3913 = vtanh.pop %v3516
    %v3914 = vtanh.pop %v3518
    %v3915 = vtanh.pop %v3629
    %v3916 = vtanh.pop %v3631
    %v3917 = vtanh.pop %v3742
    %v3918 = vtanh.pop %v3744
    %v3919 = vtanh.pop %v3855
    %v3920 = vtanh.pop %v3857
    %v3921 = vtanh.pop %v3522
    %v3922 = vtanh.pop %v3524
    %v3923 = vtanh.pop %v3635
    %v3924 = vtanh.pop %v3637
    %v3925 = vtanh.pop %v3748
    %v3926 = vtanh.pop %v3750
    %v3927 = vtanh.pop %v3861
    %v3928 = vtanh.pop %v3863
    %s3929 = scalar_lea.vmem %s3, 48
    %v3930 = vld [vmem:[%s3929] sm:$0xff]
    %v3931 = vld [vmem:[%s3929 + $0x8] sm:$0xff]
    %s3932 = scalar_lea.vmem %s4, 48
    %v3933 = vld [vmem:[%s3932] sm:$0xff]
    %v3934 = vld [vmem:[%s3932 + $0x8] sm:$0xff]
    %3936 = vset.pattern.permute.xlu0 0
    %3937 = vperm.xlu0 %3936, %v3933
    %v3938 = vpop.permute.xlu0 %3937
    %3941 = vset.pattern.permute.xlu0 0
    %3942 = vperm.xlu0 %3941, %v3934
    %v3943 = vpop.permute.xlu0 %3942
    %v3946 = vsel %vm1016, %v3930, 0
    %v3949 = vsel %vm1016, %v3931, 0
    %3951 = vmatprep.subr.mxu0 0.0
    %3952 = vmatpush1.msra.mxu0 0.0
    %3953 = vmatprep.subr.mxu0 0.0
    %3954 = vmatpush1.msra.mxu0 0.0
    %3955 = vmatprep.subr.mxu0 0.0
    %3956 = vmatpush1.msra.mxu0 0.0
    %3957 = vmatprep.subr.mxu0 0.0
    %3958 = vmatpush1.msra.mxu0 0.0
    %3959 = vmatprep.subr.mxu0 0.0
    %3960 = vmatpush1.msra.mxu0 0.0
    %3961 = vmatprep.subr.mxu0 0.0
    %3962 = vmatpush1.msra.mxu0 0.0
    %3963 = vmatprep.subr.mxu0 0.0
    %3964 = vmatpush1.msra.mxu0 0.0
    %3965 = vmatprep.subr.mxu0 0.0
    %3966 = vmatpush1.msra.mxu0 0.0
    %3967 = vmatprep.subr.mxu0 %v3922
    %3968 = vmatpush1.msra.mxu0 %v3921
    %3969 = vmatprep.subr.mxu0 %v3914
    %3970 = vmatpush1.msra.mxu0 %v3913
    %3971 = vmatprep.subr.mxu0 %v3906
    %3972 = vmatpush1.msra.mxu0 %v3905
    %3973 = vmatprep.subr.mxu0 %v3898
    %3974 = vmatpush1.msra.mxu0 %v3897
    %3975 = vmatprep.subr.mxu0 %v3890
    %3976 = vmatpush1.msra.mxu0 %v3889
    %3977 = vmatprep.subr.mxu0 %v3882
    %3978 = vmatpush1.msra.mxu0 %v3881
    %3979 = vmatprep.subr.mxu0 %v3874
    %3980 = vmatpush1.msra.mxu0 %v3873
    %3981 = vmatprep.subr.mxu0 %v3866
    %3982 = vmatpush1.msra.mxu0 %v3865
    %3983 = vmatprep.subr.mxu0 0.0
    %3984 = vmatpush2.msra.mxu0 0.0
    %3985 = vmatprep.subr.mxu0 0.0
    %3986 = vmatpush2.msra.mxu0 0.0
    %3987 = vmatprep.subr.mxu0 0.0
    %3988 = vmatpush2.msra.mxu0 0.0
    %3989 = vmatprep.subr.mxu0 0.0
    %3990 = vmatpush2.msra.mxu0 0.0
    %3991 = vmatprep.subr.mxu0 0.0
    %3992 = vmatpush2.msra.mxu0 0.0
    %3993 = vmatprep.subr.mxu0 0.0
    %3994 = vmatpush2.msra.mxu0 0.0
    %3995 = vmatprep.subr.mxu0 0.0
    %3996 = vmatpush2.msra.mxu0 0.0
    %3997 = vmatprep.subr.mxu0 0.0
    %3998 = vmatpush2.msra.mxu0 0.0
    %3999 = vmatprep.subr.mxu0 0.0
    %4000 = vmatpush2.msra.mxu0 0.0
    %4001 = vmatprep.subr.mxu0 0.0
    %4002 = vmatpush2.msra.mxu0 0.0
    %4003 = vmatprep.subr.mxu0 0.0
    %4004 = vmatpush2.msra.mxu0 0.0
    %4005 = vmatprep.subr.mxu0 0.0
    %4006 = vmatpush2.msra.mxu0 0.0
    %4007 = vmatprep.subr.mxu0 0.0
    %4008 = vmatpush2.msra.mxu0 0.0
    %4009 = vmatprep.subr.mxu0 0.0
    %4010 = vmatpush2.msra.mxu0 0.0
    %4011 = vmatprep.subr.mxu0 0.0
    %4012 = vmatpush2.msra.mxu0 0.0
    %4013 = vmatprep.subr.mxu0 0.0
    %4014 = vmatpush2.msra.mxu0 0.0
    %4015 = vmatprep.mubr.f32.mxu0 0.0
    %4016 = vmatmul.mubr.f32.gmra.mxu0 %v3946
    %v4017 = vpop.f32.mrf.mxu0
    %v4018 = vadd.f32 %v3938, %v4017
    %v4019 = vpop.f32.mrf.mxu0
    %v4020 = vadd.f32 %v3938, %v4019
    %4021 = vmatprep.mubr.f32.mxu0 0.0
    %4022 = vmatmul.mubr.f32.gmra.mxu0 %v3949
    %v4023 = vpop.f32.mrf.mxu0
    %v4024 = vadd.f32 %v3943, %v4023
    %v4025 = vpop.f32.mrf.mxu0
    %v4026 = vadd.f32 %v3943, %v4025
    %4027 = vdwg.mxu0
    %4028 = vmatprep.subr.mxu0 0.0
    %4029 = vmatpush1.msra.mxu0 0.0
    %4030 = vmatprep.subr.mxu0 0.0
    %4031 = vmatpush1.msra.mxu0 0.0
    %4032 = vmatprep.subr.mxu0 0.0
    %4033 = vmatpush1.msra.mxu0 0.0
    %4034 = vmatprep.subr.mxu0 0.0
    %4035 = vmatpush1.msra.mxu0 0.0
    %4036 = vmatprep.subr.mxu0 0.0
    %4037 = vmatpush1.msra.mxu0 0.0
    %4038 = vmatprep.subr.mxu0 0.0
    %4039 = vmatpush1.msra.mxu0 0.0
    %4040 = vmatprep.subr.mxu0 0.0
    %4041 = vmatpush1.msra.mxu0 0.0
    %4042 = vmatprep.subr.mxu0 0.0
    %4043 = vmatpush1.msra.mxu0 0.0
    %4044 = vmatprep.subr.mxu0 %v3924
    %4045 = vmatpush1.msra.mxu0 %v3923
    %4046 = vmatprep.subr.mxu0 %v3916
    %4047 = vmatpush1.msra.mxu0 %v3915
    %4048 = vmatprep.subr.mxu0 %v3908
    %4049 = vmatpush1.msra.mxu0 %v3907
    %4050 = vmatprep.subr.mxu0 %v3900
    %4051 = vmatpush1.msra.mxu0 %v3899
    %4052 = vmatprep.subr.mxu0 %v3892
    %4053 = vmatpush1.msra.mxu0 %v3891
    %4054 = vmatprep.subr.mxu0 %v3884
    %4055 = vmatpush1.msra.mxu0 %v3883
    %4056 = vmatprep.subr.mxu0 %v3876
    %4057 = vmatpush1.msra.mxu0 %v3875
    %4058 = vmatprep.subr.mxu0 %v3868
    %4059 = vmatpush1.msra.mxu0 %v3867
    %4060 = vmatprep.subr.mxu0 0.0
    %4061 = vmatpush2.msra.mxu0 0.0
    %4062 = vmatprep.subr.mxu0 0.0
    %4063 = vmatpush2.msra.mxu0 0.0
    %4064 = vmatprep.subr.mxu0 0.0
    %4065 = vmatpush2.msra.mxu0 0.0
    %4066 = vmatprep.subr.mxu0 0.0
    %4067 = vmatpush2.msra.mxu0 0.0
    %4068 = vmatprep.subr.mxu0 0.0
    %4069 = vmatpush2.msra.mxu0 0.0
    %4070 = vmatprep.subr.mxu0 0.0
    %4071 = vmatpush2.msra.mxu0 0.0
    %4072 = vmatprep.subr.mxu0 0.0
    %4073 = vmatpush2.msra.mxu0 0.0
    %4074 = vmatprep.subr.mxu0 0.0
    %4075 = vmatpush2.msra.mxu0 0.0
    %4076 = vmatprep.subr.mxu0 0.0
    %4077 = vmatpush2.msra.mxu0 0.0
    %4078 = vmatprep.subr.mxu0 0.0
    %4079 = vmatpush2.msra.mxu0 0.0
    %4080 = vmatprep.subr.mxu0 0.0
    %4081 = vmatpush2.msra.mxu0 0.0
    %4082 = vmatprep.subr.mxu0 0.0
    %4083 = vmatpush2.msra.mxu0 0.0
    %4084 = vmatprep.subr.mxu0 0.0
    %4085 = vmatpush2.msra.mxu0 0.0
    %4086 = vmatprep.subr.mxu0 0.0
    %4087 = vmatpush2.msra.mxu0 0.0
    %4088 = vmatprep.subr.mxu0 0.0
    %4089 = vmatpush2.msra.mxu0 0.0
    %4090 = vmatprep.subr.mxu0 0.0
    %4091 = vmatpush2.msra.mxu0 0.0
    %4092 = vmatprep.mubr.f32.mxu0 0.0
    %4093 = vmatmul.mubr.f32.gmra.mxu0 %v3946
    %v4094 = vpop.f32.mrf.mxu0
    %v4095 = vadd.f32 %v3938, %v4094
    %v4096 = vpop.f32.mrf.mxu0
    %v4097 = vadd.f32 %v3938, %v4096
    %4098 = vmatprep.mubr.f32.mxu0 0.0
    %4099 = vmatmul.mubr.f32.gmra.mxu0 %v3949
    %v4100 = vpop.f32.mrf.mxu0
    %v4101 = vadd.f32 %v3943, %v4100
    %v4102 = vpop.f32.mrf.mxu0
    %v4103 = vadd.f32 %v3943, %v4102
    %4104 = vdwg.mxu0
    %4105 = vmatprep.subr.mxu0 0.0
    %4106 = vmatpush1.msra.mxu0 0.0
    %4107 = vmatprep.subr.mxu0 0.0
    %4108 = vmatpush1.msra.mxu0 0.0
    %4109 = vmatprep.subr.mxu0 0.0
    %4110 = vmatpush1.msra.mxu0 0.0
    %4111 = vmatprep.subr.mxu0 0.0
    %4112 = vmatpush1.msra.mxu0 0.0
    %4113 = vmatprep.subr.mxu0 0.0
    %4114 = vmatpush1.msra.mxu0 0.0
    %4115 = vmatprep.subr.mxu0 0.0
    %4116 = vmatpush1.msra.mxu0 0.0
    %4117 = vmatprep.subr.mxu0 0.0
    %4118 = vmatpush1.msra.mxu0 0.0
    %4119 = vmatprep.subr.mxu0 0.0
    %4120 = vmatpush1.msra.mxu0 0.0
    %4121 = vmatprep.subr.mxu0 %v3926
    %4122 = vmatpush1.msra.mxu0 %v3925
    %4123 = vmatprep.subr.mxu0 %v3918
    %4124 = vmatpush1.msra.mxu0 %v3917
    %4125 = vmatprep.subr.mxu0 %v3910
    %4126 = vmatpush1.msra.mxu0 %v3909
    %4127 = vmatprep.subr.mxu0 %v3902
    %4128 = vmatpush1.msra.mxu0 %v3901
    %4129 = vmatprep.subr.mxu0 %v3894
    %4130 = vmatpush1.msra.mxu0 %v3893
    %4131 = vmatprep.subr.mxu0 %v3886
    %4132 = vmatpush1.msra.mxu0 %v3885
    %4133 = vmatprep.subr.mxu0 %v3878
    %4134 = vmatpush1.msra.mxu0 %v3877
    %4135 = vmatprep.subr.mxu0 %v3870
    %4136 = vmatpush1.msra.mxu0 %v3869
    %4137 = vmatprep.subr.mxu0 0.0
    %4138 = vmatpush2.msra.mxu0 0.0
    %4139 = vmatprep.subr.mxu0 0.0
    %4140 = vmatpush2.msra.mxu0 0.0
    %4141 = vmatprep.subr.mxu0 0.0
    %4142 = vmatpush2.msra.mxu0 0.0
    %4143 = vmatprep.subr.mxu0 0.0
    %4144 = vmatpush2.msra.mxu0 0.0
    %4145 = vmatprep.subr.mxu0 0.0
    %4146 = vmatpush2.msra.mxu0 0.0
    %4147 = vmatprep.subr.mxu0 0.0
    %4148 = vmatpush2.msra.mxu0 0.0
    %4149 = vmatprep.subr.mxu0 0.0
    %4150 = vmatpush2.msra.mxu0 0.0
    %4151 = vmatprep.subr.mxu0 0.0
    %4152 = vmatpush2.msra.mxu0 0.0
    %4153 = vmatprep.subr.mxu0 0.0
    %4154 = vmatpush2.msra.mxu0 0.0
    %4155 = vmatprep.subr.mxu0 0.0
    %4156 = vmatpush2.msra.mxu0 0.0
    %4157 = vmatprep.subr.mxu0 0.0
    %4158 = vmatpush2.msra.mxu0 0.0
    %4159 = vmatprep.subr.mxu0 0.0
    %4160 = vmatpush2.msra.mxu0 0.0
    %4161 = vmatprep.subr.mxu0 0.0
    %4162 = vmatpush2.msra.mxu0 0.0
    %4163 = vmatprep.subr.mxu0 0.0
    %4164 = vmatpush2.msra.mxu0 0.0
    %4165 = vmatprep.subr.mxu0 0.0
    %4166 = vmatpush2.msra.mxu0 0.0
    %4167 = vmatprep.subr.mxu0 0.0
    %4168 = vmatpush2.msra.mxu0 0.0
    %4169 = vmatprep.mubr.f32.mxu0 0.0
    %4170 = vmatmul.mubr.f32.gmra.mxu0 %v3946
    %v4171 = vpop.f32.mrf.mxu0
    %v4172 = vadd.f32 %v3938, %v4171
    %v4173 = vpop.f32.mrf.mxu0
    %v4174 = vadd.f32 %v3938, %v4173
    %4175 = vmatprep.mubr.f32.mxu0 0.0
    %4176 = vmatmul.mubr.f32.gmra.mxu0 %v3949
    %v4177 = vpop.f32.mrf.mxu0
    %v4178 = vadd.f32 %v3943, %v4177
    %v4179 = vpop.f32.mrf.mxu0
    %v4180 = vadd.f32 %v3943, %v4179
    %4181 = vdwg.mxu0
    %4182 = vmatprep.subr.mxu0 0.0
    %4183 = vmatpush1.msra.mxu0 0.0
    %4184 = vmatprep.subr.mxu0 0.0
    %4185 = vmatpush1.msra.mxu0 0.0
    %4186 = vmatprep.subr.mxu0 0.0
    %4187 = vmatpush1.msra.mxu0 0.0
    %4188 = vmatprep.subr.mxu0 0.0
    %4189 = vmatpush1.msra.mxu0 0.0
    %4190 = vmatprep.subr.mxu0 0.0
    %4191 = vmatpush1.msra.mxu0 0.0
    %4192 = vmatprep.subr.mxu0 0.0
    %4193 = vmatpush1.msra.mxu0 0.0
    %4194 = vmatprep.subr.mxu0 0.0
    %4195 = vmatpush1.msra.mxu0 0.0
    %4196 = vmatprep.subr.mxu0 0.0
    %4197 = vmatpush1.msra.mxu0 0.0
    %4198 = vmatprep.subr.mxu0 %v3928
    %4199 = vmatpush1.msra.mxu0 %v3927
    %4200 = vmatprep.subr.mxu0 %v3920
    %4201 = vmatpush1.msra.mxu0 %v3919
    %4202 = vmatprep.subr.mxu0 %v3912
    %4203 = vmatpush1.msra.mxu0 %v3911
    %4204 = vmatprep.subr.mxu0 %v3904
    %4205 = vmatpush1.msra.mxu0 %v3903
    %4206 = vmatprep.subr.mxu0 %v3896
    %4207 = vmatpush1.msra.mxu0 %v3895
    %4208 = vmatprep.subr.mxu0 %v3888
    %4209 = vmatpush1.msra.mxu0 %v3887
    %4210 = vmatprep.subr.mxu0 %v3880
    %4211 = vmatpush1.msra.mxu0 %v3879
    %4212 = vmatprep.subr.mxu0 %v3872
    %4213 = vmatpush1.msra.mxu0 %v3871
    %4214 = vmatprep.subr.mxu0 0.0
    %4215 = vmatpush2.msra.mxu0 0.0
    %4216 = vmatprep.subr.mxu0 0.0
    %4217 = vmatpush2.msra.mxu0 0.0
    %4218 = vmatprep.subr.mxu0 0.0
    %4219 = vmatpush2.msra.mxu0 0.0
    %4220 = vmatprep.subr.mxu0 0.0
    %4221 = vmatpush2.msra.mxu0 0.0
    %4222 = vmatprep.subr.mxu0 0.0
    %4223 = vmatpush2.msra.mxu0 0.0
    %4224 = vmatprep.subr.mxu0 0.0
    %4225 = vmatpush2.msra.mxu0 0.0
    %4226 = vmatprep.subr.mxu0 0.0
    %4227 = vmatpush2.msra.mxu0 0.0
    %4228 = vmatprep.subr.mxu0 0.0
    %4229 = vmatpush2.msra.mxu0 0.0
    %4230 = vmatprep.subr.mxu0 0.0
    %4231 = vmatpush2.msra.mxu0 0.0
    %4232 = vmatprep.subr.mxu0 0.0
    %4233 = vmatpush2.msra.mxu0 0.0
    %4234 = vmatprep.subr.mxu0 0.0
    %4235 = vmatpush2.msra.mxu0 0.0
    %4236 = vmatprep.subr.mxu0 0.0
    %4237 = vmatpush2.msra.mxu0 0.0
    %4238 = vmatprep.subr.mxu0 0.0
    %4239 = vmatpush2.msra.mxu0 0.0
    %4240 = vmatprep.subr.mxu0 0.0
    %4241 = vmatpush2.msra.mxu0 0.0
    %4242 = vmatprep.subr.mxu0 0.0
    %4243 = vmatpush2.msra.mxu0 0.0
    %4244 = vmatprep.subr.mxu0 0.0
    %4245 = vmatpush2.msra.mxu0 0.0
    %4246 = vmatprep.mubr.f32.mxu0 0.0
    %4247 = vmatmul.mubr.f32.gmra.mxu0 %v3946
    %v4248 = vpop.f32.mrf.mxu0
    %v4249 = vadd.f32 %v3938, %v4248
    %v4250 = vpop.f32.mrf.mxu0
    %v4251 = vadd.f32 %v3938, %v4250
    %4252 = vmatprep.mubr.f32.mxu0 0.0
    %4253 = vmatmul.mubr.f32.gmra.mxu0 %v3949
    %v4254 = vpop.f32.mrf.mxu0
    %v4255 = vadd.f32 %v3943, %v4254
    %v4256 = vpop.f32.mrf.mxu0
    %v4257 = vadd.f32 %v3943, %v4256
    %4258 = vdwg.mxu0
    %v4259 = vsub.f32 %v2339, %v4018
    %v4260 = vsub.f32 %v2340, %v4020
    %v4261 = vsub.f32 %v2341, %v4095
    %v4262 = vsub.f32 %v2342, %v4097
    %v4263 = vsub.f32 %v2343, %v4172
    %v4264 = vsub.f32 %v2344, %v4174
    %v4265 = vsub.f32 %v2345, %v4249
    %v4266 = vsub.f32 %v2346, %v4251
    %v4267 = vsub.f32 0.0, %v4024
    %v4268 = vsub.f32 0.0, %v4026
    %v4269 = vsub.f32 0.0, %v4101
    %v4270 = vsub.f32 0.0, %v4103
    %v4271 = vsub.f32 0.0, %v4178
    %v4272 = vsub.f32 0.0, %v4180
    %v4273 = vsub.f32 0.0, %v4255
    %v4274 = vsub.f32 0.0, %v4257
    %v4275 = vmul.f32 %v4267, 1.442695
    %v4276 = vpow.pop %v4275
    %v4277 = vmul.f32 %v4268, 1.442695
    %v4278 = vpow.pop %v4277
    %v4279 = vmul.f32 %v4269, 1.442695
    %v4280 = vpow.pop %v4279
    %v4281 = vmul.f32 %v4270, 1.442695
    %v4282 = vpow.pop %v4281
    %v4283 = vmul.f32 %v4271, 1.442695
    %v4284 = vpow.pop %v4283
    %v4285 = vmul.f32 %v4272, 1.442695
    %v4286 = vpow.pop %v4285
    %v4287 = vmul.f32 %v4273, 1.442695
    %v4288 = vpow.pop %v4287
    %v4289 = vmul.f32 %v4274, 1.442695
    %v4290 = vpow.pop %v4289
    %v4291 = vmul.f32 %v4259, %v4276
    %v4292 = vmul.f32 %v4260, %v4278
    %v4293 = vmul.f32 %v4261, %v4280
    %v4294 = vmul.f32 %v4262, %v4282
    %v4295 = vmul.f32 %v4263, %v4284
    %v4296 = vmul.f32 %v4264, %v4286
    %v4297 = vmul.f32 %v4265, %v4288
    %v4298 = vmul.f32 %v4266, %v4290
    %v4299 = vadd.f32 %v3323, %v4024
    %v4300 = vadd.f32 %v3324, %v4026
    %v4301 = vadd.f32 %v3325, %v4101
    %v4302 = vadd.f32 %v3326, %v4103
    %v4303 = vadd.f32 %v3327, %v4178
    %v4304 = vadd.f32 %v3328, %v4180
    %v4305 = vadd.f32 %v3329, %v4255
    %v4306 = vadd.f32 %v3330, %v4257
    %v4307 = vmul.f32 %v4291, %v4291
    %v4308 = vmul.f32 %v4292, %v4292
    %v4309 = vmul.f32 %v4293, %v4293
    %v4310 = vmul.f32 %v4294, %v4294
    %v4311 = vmul.f32 %v4295, %v4295
    %v4312 = vmul.f32 %v4296, %v4296
    %v4313 = vmul.f32 %v4297, %v4297
    %v4314 = vmul.f32 %v4298, %v4298
    %v4315 = vmul.f32 %v3315, %v3315
    %v4316 = vmul.f32 %v3316, %v3316
    %v4317 = vmul.f32 %v3317, %v3317
    %v4318 = vmul.f32 %v3318, %v3318
    %v4319 = vmul.f32 %v3319, %v3319
    %v4320 = vmul.f32 %v3320, %v3320
    %v4321 = vmul.f32 %v3321, %v3321
    %v4322 = vmul.f32 %v3322, %v3322
    %v4323 = vadd.f32 %v4307, %v4315
    %v4324 = vadd.f32 %v4308, %v4316
    %v4325 = vadd.f32 %v4309, %v4317
    %v4326 = vadd.f32 %v4310, %v4318
    %v4327 = vadd.f32 %v4311, %v4319
    %v4328 = vadd.f32 %v4312, %v4320
    %v4329 = vadd.f32 %v4313, %v4321
    %v4330 = vadd.f32 %v4314, %v4322
    %v4331 = vmul.f32 %v4323, 0.5
    %v4332 = vmul.f32 %v4324, 0.5
    %v4333 = vmul.f32 %v4325, 0.5
    %v4334 = vmul.f32 %v4326, 0.5
    %v4335 = vmul.f32 %v4327, 0.5
    %v4336 = vmul.f32 %v4328, 0.5
    %v4337 = vmul.f32 %v4329, 0.5
    %v4338 = vmul.f32 %v4330, 0.5
    %v4339 = vadd.f32 %v4331, %v4299
    %v4340 = vadd.f32 %v4332, %v4300
    %v4341 = vadd.f32 %v4333, %v4301
    %v4342 = vadd.f32 %v4334, %v4302
    %v4343 = vadd.f32 %v4335, %v4303
    %v4344 = vadd.f32 %v4336, %v4304
    %v4345 = vadd.f32 %v4337, %v4305
    %v4346 = vadd.f32 %v4338, %v4306
    %v4347 = vrot.slane %v4339, 4
    %v4348 = vadd.f32 %v4339, %v4347
    %v4349 = vrot.slane %v4348, 2
    %v4350 = vadd.f32 %v4348, %v4349
    %v4351 = vrot.slane %v4350, 1
    %v4352 = vadd.f32 %v4350, %v4351
    %v4353 = vrot.slane %v4340, 4
    %v4354 = vadd.f32 %v4340, %v4353
    %v4355 = vrot.slane %v4354, 2
    %v4356 = vadd.f32 %v4354, %v4355
    %v4357 = vrot.slane %v4356, 1
    %v4358 = vadd.f32 %v4356, %v4357
    %v4359 = vrot.slane %v4341, 4
    %v4360 = vadd.f32 %v4341, %v4359
    %v4361 = vrot.slane %v4360, 2
    %v4362 = vadd.f32 %v4360, %v4361
    %v4363 = vrot.slane %v4362, 1
    %v4364 = vadd.f32 %v4362, %v4363
    %v4365 = vrot.slane %v4342, 4
    %v4366 = vadd.f32 %v4342, %v4365
    %v4367 = vrot.slane %v4366, 2
    %v4368 = vadd.f32 %v4366, %v4367
    %v4369 = vrot.slane %v4368, 1
    %v4370 = vadd.f32 %v4368, %v4369
    %v4371 = vrot.slane %v4343, 4
    %v4372 = vadd.f32 %v4343, %v4371
    %v4373 = vrot.slane %v4372, 2
    %v4374 = vadd.f32 %v4372, %v4373
    %v4375 = vrot.slane %v4374, 1
    %v4376 = vadd.f32 %v4374, %v4375
    %v4377 = vrot.slane %v4344, 4
    %v4378 = vadd.f32 %v4344, %v4377
    %v4379 = vrot.slane %v4378, 2
    %v4380 = vadd.f32 %v4378, %v4379
    %v4381 = vrot.slane %v4380, 1
    %v4382 = vadd.f32 %v4380, %v4381
    %v4383 = vrot.slane %v4345, 4
    %v4384 = vadd.f32 %v4345, %v4383
    %v4385 = vrot.slane %v4384, 2
    %v4386 = vadd.f32 %v4384, %v4385
    %v4387 = vrot.slane %v4386, 1
    %v4388 = vadd.f32 %v4386, %v4387
    %v4389 = vrot.slane %v4346, 4
    %v4390 = vadd.f32 %v4346, %v4389
    %v4391 = vrot.slane %v4390, 2
    %v4392 = vadd.f32 %v4390, %v4391
    %v4393 = vrot.slane %v4392, 1
    %v4394 = vadd.f32 %v4392, %v4393
    %v4395 = vadd.f32 %v4352, 14.703016
    %v4396 = vadd.f32 %v4358, 14.703016
    %v4397 = vadd.f32 %v4364, 14.703016
    %v4398 = vadd.f32 %v4370, 14.703016
    %v4399 = vadd.f32 %v4376, 14.703016
    %v4400 = vadd.f32 %v4382, 14.703016
    %v4401 = vadd.f32 %v4388, 14.703016
    %v4402 = vadd.f32 %v4394, 14.703016
    %v4411 = vcombine.low %v4395, %v4396
    %v4412 = vcombine.low %v4397, %v4398
    %v4413 = vcombine.low %v4399, %v4400
    %v4414 = vcombine.low %v4401, %v4402
    %v4416 = vunpack.c.l.s4 1966171168
    %v4417 = vunpack.c.0.s8 %v4416
    %v4418 = vlaneseq
    %v4419 = vshrl.u32 %v4418, 7
    %v4420 = vsub.s32 %v4417, %v4419
    %v4421 = vrot.slane %v4411, %v4420
    %v4423 = vunpack.c.l.s4 1966171168
    %v4424 = vunpack.c.0.s8 %v4423
    %v4425 = vlaneseq
    %v4426 = vshrl.u32 %v4425, 7
    %v4427 = vsub.s32 %v4424, %v4426
    %v4428 = vrot.slane %v4412, %v4427
    %v4430 = vunpack.c.l.s4 1966171168
    %v4431 = vunpack.c.0.s8 %v4430
    %v4432 = vlaneseq
    %v4433 = vshrl.u32 %v4432, 7
    %v4434 = vsub.s32 %v4431, %v4433
    %v4435 = vrot.slane %v4413, %v4434
    %v4437 = vunpack.c.l.s4 1966171168
    %v4438 = vunpack.c.0.s8 %v4437
    %v4439 = vlaneseq
    %v4440 = vshrl.u32 %v4439, 7
    %v4441 = vsub.s32 %v4438, %v4440
    %v4442 = vrot.slane %v4414, %v4441
    %v4443 = vcombine.low %v4421, %v4428
    %v4444 = vcombine.low %v4435, %v4442
    %v4446 = vunpack.c.l.s4 1966171168
    %v4447 = vunpack.c.0.s8 %v4446
    %v4448 = vlaneseq
    %v4449 = vshrl.u32 %v4448, 7
    %v4450 = vsub.s32 %v4447, %v4449
    %v4451 = vrot.slane %v4443, %v4450
    %v4453 = vunpack.c.l.s4 1966171168
    %v4454 = vunpack.c.0.s8 %v4453
    %v4455 = vlaneseq
    %v4456 = vshrl.u32 %v4455, 7
    %v4457 = vsub.s32 %v4454, %v4456
    %v4458 = vrot.slane %v4444, %v4457
    %v4459 = vcombine.low %v4451, %v4458
    %4461 = vst [vmem:[#allocation2] sm:$0xff] %v4459
    // Predicated region
    $region22: #{tpu_custom_call.1} parent=1 // pred_check
      _
    $region23: #{tpu_custom_call.1} parent=1 // pred_check_branch
      %4463 = sbr.rel (0) target = $region25
    $region24: #{tpu_custom_call.1} parent=1 // pred_region
      %s4465 = ssub.s32 128, 128
      %4466 = vsyncadd [#allocation3], %s4465
      %s4468 = sshll.u32 [#allocation2], 4
      %s4469 = int_to_ptr.vmem [resolvable:$true] %s4468
      %4471 = dma.vmem_to_hbm [thread:$0]  %s4469, 128, %s5, [#allocation3]
    $region25: #{tpu_custom_call.1} parent=1 // pred_fallthru
      _
    // Predicated region
    $region26: #{tpu_custom_call.1} parent=1 // pred_check
      _
    $region27: #{tpu_custom_call.1} parent=1 // pred_check_branch
      %4473 = sbr.rel (0) target = $region29
    $region28: #{tpu_custom_call.1} parent=1 // pred_region
      %4474 = dma.done [#allocation3], 128
    $region29: #{tpu_custom_call.1} parent=1 // pred_fallthru
      _
    %4475 = vsyncpa [#allocation3], 1

</llo_original>
